<compile_context>
chip_gen: v7x
topology: tpu7x:2x2x1
jax: 0.10.0
libtpu: 0.0.40
codegen_flags: <defaults>
</compile_context>

<pallas_src>
import numpy as np

import jax
import jax.numpy as jnp
from jax.experimental import pallas as pl
from jax.experimental.pallas import tpu as pltpu

BN_EPS = 1e-5
_OFF = 8  # sublane offset where activations are staged ('same'-padding halo)


# --------------------------------------------------------------------------
# Fused Pallas kernel (whole forward pass for a block of examples)
# --------------------------------------------------------------------------
def _fused_forward_kernel(x_ref,
                          w1_ref, sc1_ref, sh1_ref,
                          w2_ref, sc2_ref, sh2_ref,
                          w3_ref, sc3_ref, sh3_ref,
                          w4_ref, sc4_ref, sh4_ref,
                          fw1_ref, fb1_ref, fw2_ref, fb2_ref,
                          o_ref,
                          buf2_ref, pool_ref, buf3_ref, buf4_ref):
    """Whole SeqCNNRegressor forward; all activations stay in VMEM."""

    def bn_relu(acc, sc_ref, sh_ref):
        # fused conv-bias + BatchNorm(eval) affine + ReLU, all in f32.
        return jnp.maximum(acc * sc_ref[...] + sh_ref[...], 0.0)

    def conv_stage(buf_ref, h, k, w_ref, sc_ref, sh_ref):
        # 'same' conv as ONE MXU dot with contraction depth k*C_in:
        #   1) zero only the halo rows actually read as padding (two aligned
        #      8-row blocks; activation rows are fully overwritten each step),
        #   2) stage the activation at sublane offset _OFF,
        #   3) build the tap-stacked operand once (concat of k shifted slices),
        #   4) single bf16 dot with f32 accumulation.
        n = h.shape[0]
        zeros8 = jnp.zeros((_OFF, buf_ref.shape[1]), buf_ref.dtype)
        buf_ref[0:_OFF, :] = zeros8
        buf_ref[n + _OFF:n + 2 * _OFF, :] = zeros8
        buf_ref[_OFF:_OFF + n, :] = h.astype(buf_ref.dtype)
        base = _OFF - k // 2
        lhs = jnp.concatenate(
            [buf_ref[base + t:base + t + n, :] for t in range(k)], axis=-1)
        acc = jnp.dot(lhs.astype(w_ref.dtype), w_ref[...],
                      preferred_element_type=jnp.float32)
        return bn_relu(acc, sc_ref, sh_ref)

    block_b = x_ref.shape[0]
    for b in range(block_b):                       # static unroll over the batch block
        # ---- stage 1: 4 parallel branches fused + tap-stacked in the wrapper
        #      -> one (L, K1*C_in) @ (K1*C_in, T) dot ----
        x1 = x_ref[b]                                            # (L, K1*C_in) bf16
        h = bn_relu(jnp.dot(x1, w1_ref[...],
                            preferred_element_type=jnp.float32),
                    sc1_ref, sh1_ref)                            # (L, T) f32

        # ---- conv2 (k=3, 'same') + BN + ReLU : one dot, K = 3*T ----
        h = conv_stage(buf2_ref, h, 3, w2_ref, sc2_ref, sh2_ref)  # (L, 2T)

        # ---- MaxPool1d(kernel=2, stride=2): exact max of even/odd rows ----
        L = h.shape[0]
        Lh = L // 2
        pool_ref[...] = h
        h = jnp.maximum(pool_ref[pl.ds(0, Lh, stride=2), :],
                        pool_ref[pl.ds(1, Lh, stride=2), :])      # (Lh, 2T)

        # ---- conv3 (k=7) and conv4 (k=3), one tap-stacked dot each ----
        h = conv_stage(buf3_ref, h, 7, w3_ref, sc3_ref, sh3_ref)  # (Lh, 4T)
        h = conv_stage(buf4_ref, h, 3, w4_ref, sc4_ref, sh4_ref)  # (Lh, 4T)

        # ---- head: global mean -> fc1 -> ReLU -> fc2 (VPU) -> sigmoid ----
        # TODO(synk): nn.Dropout is the identity at inference; no RNG needed.
        m = jnp.mean(h, axis=0, keepdims=True)                    # (1, 4T) f32
        z = jnp.dot(m.astype(fw1_ref.dtype), fw1_ref[...],
                    preferred_element_type=jnp.float32) + fb1_ref[...]
        z = jnp.maximum(z, 0.0)                                   # (1, U)
        y = jnp.sum(z * fw2_ref[...], axis=-1, keepdims=True) + fb2_ref[...]
        o_ref[b] = (1.0 / (1.0 + jnp.exp(-y))).astype(o_ref.dtype)


# --------------------------------------------------------------------------
# Wrapper: parameter folding + single pallas_call
# --------------------------------------------------------------------------
def _pick_block_b(batch, max_block=8):
    """Largest divisor of `batch` (<= max_block) that keeps the grid >= 2."""
    best = None
    for cand in range(1, min(max_block, batch) + 1):
        if batch % cand == 0 and batch // cand >= 2:
            best = cand
    return best if best is not None else batch


def forward_pallas(x_ncl, params, kernel_sizes, *, mm_dtype=jnp.bfloat16):
    assert all(k % 2 == 1 for k in kernel_sizes), "odd kernels ('same' padding)"
    B, C_in, L = x_ncl.shape
    assert L % 2 == 0, "MaxPool1d(2) kernel path assumes an even sequence length"
    NF = params['branches'][0]['w'].shape[0]
    T = NF * len(kernel_sizes)
    K1 = max(kernel_sizes)
    P = K1 // 2
    Lh = L // 2

    # ---- input: NCL -> NLC, single shared pad, taps stacked along lanes in
    #      the wrapper so stage 1 is one dense K = K1*C_in matmul ----
    x = jnp.transpose(x_ncl, (0, 2, 1))                       # (B, L, C_in)
    x_pad = jnp.pad(x, ((0, 0), (P, P), (0, 0)))
    x1 = jnp.concatenate([x_pad[:, t:t + L, :] for t in range(K1)],
                         axis=-1).astype(mm_dtype)            # (B, L, K1*C_in)

    def affine(conv_b, bn):
        s = bn['gamma'] / jnp.sqrt(bn['var'] + BN_EPS)
        return s, (conv_b - bn['mean']) * s + bn['beta']

    # ---- fuse the 4 branches: taps zero-padded & centred, output channels
    #      stacked; reshape to a dense (K1*C_in, T) bf16 slab ----
    w1 = jnp.zeros((K1, C_in, T), jnp.float32)
    sc1, sh1 = [], []
    for i, k in enumerate(kernel_sizes):
        wk = jnp.transpose(params['branches'][i]['w'], (2, 1, 0))   # (k, C_in, NF)
        off = P - k // 2
        w1 = w1.at[off:off + k, :, i * NF:(i + 1) * NF].set(wk)
        s, t = affine(params['branches'][i]['b'], params['branch_bns'][i])
        sc1.append(s)
        sh1.append(t)
    w1 = w1.reshape(K1 * C_in, T).astype(mm_dtype)
    sc1 = jnp.concatenate(sc1)[None, :]
    sh1 = jnp.concatenate(sh1)[None, :]

    def conv_wst(conv, bn):
        cout, cin, k = conv['w'].shape
        w = jnp.transpose(conv['w'], (2, 1, 0)).reshape(k * cin, cout)
        s, t = affine(conv['b'], bn)
        return w.astype(mm_dtype), s[None, :], t[None, :]

    w2, sc2, sh2 = conv_wst(params['conv2'], params['bn2'])     # (96, 64)
    w3, sc3, sh3 = conv_wst(params['conv3'], params['bn3'])     # (448, 128)
    w4, sc4, sh4 = conv_wst(params['conv4'], params['bn4'])     # (384, 128)

    fw1 = params['fc1']['w'].T.astype(mm_dtype)                 # (4T, U)
    fb1 = params['fc1']['b'][None, :].astype(jnp.float32)       # (1, U)
    fw2 = params['fc2']['w'].astype(jnp.float32)                # (1, U)  (VPU row)
    fb2 = params['fc2']['b'][None, :].astype(jnp.float32)       # (1, 1)
    U = fw1.shape[1]
    KC = K1 * C_in

    block_b = _pick_block_b(B)
    grid = (B // block_b,)

    def rep(shape):
        return pl.BlockSpec(shape, lambda i, _n=len(shape): (0,) * _n)

    out = pl.pallas_call(
        _fused_forward_kernel,
        out_shape=jax.ShapeDtypeStruct((B, 1, 1), jnp.float32),
        grid=grid,
        in_specs=[
            pl.BlockSpec((block_b, L, KC), lambda i: (i, 0, 0)),
            rep((KC, T)), rep((1, T)), rep((1, T)),
            rep((3 * T, 2 * T)), rep((1, 2 * T)), rep((1, 2 * T)),
            rep((7 * 2 * T, 4 * T)), rep((1, 4 * T)), rep((1, 4 * T)),
            rep((3 * 4 * T, 4 * T)), rep((1, 4 * T)), rep((1, 4 * T)),
            rep((4 * T, U)), rep((1, U)), rep((1, U)), rep((1, 1)),
        ],
        out_specs=pl.BlockSpec((block_b, 1, 1), lambda i: (i, 0, 0)),
        scratch_shapes=[
            pltpu.VMEM((L + 2 * _OFF, T), jnp.float32),         # conv2 'same' staging
            pltpu.VMEM((L, 2 * T), jnp.float32),                # conv2 out (maxpool)
            pltpu.VMEM((Lh + 2 * _OFF, 2 * T), jnp.float32),    # conv3 staging
            pltpu.VMEM((Lh + 2 * _OFF, 4 * T), jnp.float32),    # conv4 staging
        ],
        compiler_params=pltpu.CompilerParams(
            dimension_semantics=("parallel",)),
    )(x1, w1, sc1, sh1, w2, sc2, sh2, w3, sc3, sh3, w4, sc4, sh4,
      fw1, fb1, fw2, fb2)
    return out.reshape(B, 1)


# --------------------------------------------------------------------------
# Parameters + pure-JAX (f32) reference forward
# --------------------------------------------------------------------------
def make_params(key, c_in, num_filters, kernel_sizes, fc_units):
    keys = iter(jax.random.split(key, 64))

    def xavier(shape, fan_in, fan_out):
        limit = float((6.0 / (fan_in + fan_out)) ** 0.5)
        return jax.random.uniform(next(keys), shape, jnp.float32, -limit, limit)

    def conv_p(ci, co, k):
        return dict(w=xavier((co, ci, k), ci * k, co * k),
                    b=0.05 * jax.random.normal(next(keys), (co,), jnp.float32))

    def bn_p(c):
        return dict(
            gamma=jax.random.uniform(next(keys), (c,), jnp.float32, 0.5, 1.5),
            beta=0.1 * jax.random.normal(next(keys), (c,), jnp.float32),
            mean=0.1 * jax.random.normal(next(keys), (c,), jnp.float32),
            var=jax.random.uniform(next(keys), (c,), jnp.float32, 0.5, 1.5))

    T = num_filters * len(kernel_sizes)
    return dict(
        branches=[conv_p(c_in, num_filters, k) for k in kernel_sizes],
        branch_bns=[bn_p(num_filters) for _ in kernel_sizes],
        conv2=conv_p(T, 2 * T, 3), bn2=bn_p(2 * T),
        conv3=conv_p(2 * T, 4 * T, 7), bn3=bn_p(4 * T),
        conv4=conv_p(4 * T, 4 * T, 3), bn4=bn_p(4 * T),
        fc1=dict(w=xavier((fc_units, 4 * T), 4 * T, fc_units),
                 b=0.05 * jax.random.normal(next(keys), (fc_units,), jnp.float32)),
        fc2=dict(w=xavier((1, fc_units), fc_units, 1),
                 b=0.05 * jax.random.normal(next(keys), (1,), jnp.float32)),
    )


def forward_ref(x_ncl, params, kernel_sizes):
    hp = jax.lax.Precision.HIGHEST

    def conv_bn_relu(x, conv, bn, k):
        pad = k // 2
        y = jax.lax.conv_general_dilated(
            x, conv['w'], window_strides=(1,), padding=[(pad, pad)],
            dimension_numbers=('NCH', 'OIH', 'NCH'), precision=hp)
        y = y + conv['b'][None, :, None]
        y = (y - bn['mean'][None, :, None]) / jnp.sqrt(bn['var'][None, :, None] + BN_EPS)
        y = y * bn['gamma'][None, :, None] + bn['beta'][None, :, None]
        return jnp.maximum(y, 0.0)

    outs = [conv_bn_relu(x_ncl, params['branches'][i], params['branch_bns'][i], k)
            for i, k in enumerate(kernel_sizes)]
    y = jnp.concatenate(outs, axis=1)
    y = conv_bn_relu(y, params['conv2'], params['bn2'], 3)
    B, C, L = y.shape
    y = y[:, :, :(L // 2) * 2].reshape(B, C, L // 2, 2).max(axis=3)
    y = conv_bn_relu(y, params['conv3'], params['bn3'], 7)
    y = conv_bn_relu(y, params['conv4'], params['bn4'], 3)
    y = y.mean(axis=2)
    h = jnp.maximum(jnp.dot(y, params['fc1']['w'].T, precision=hp) + params['fc1']['b'], 0.0)
    z = jnp.dot(h, params['fc2']['w'].T, precision=hp) + params['fc2']['b']
    return jax.nn.sigmoid(z)


# --------------------------------------------------------------------------
if __name__ == "__main__":
    B, C_IN, L = 2, 8, 128          # NCL input: (batch, input_channels, seq_len)
    NUM_FILTERS = 8
    KERNEL_SIZES = [3, 9, 25, 51]
    FC_UNITS = 32

    key = jax.random.PRNGKey(0)
    pkey, xkey = jax.random.split(key)
    params = make_params(pkey, C_IN, NUM_FILTERS, KERNEL_SIZES, FC_UNITS)
    x = jax.random.normal(xkey, (B, C_IN, L), jnp.float32)

    out = jax.jit(lambda xi: forward_pallas(xi, params, KERNEL_SIZES))(x)
    out = jax.block_until_ready(out)
    assert out.shape == (B, 1), out.shape

    # Tolerance accounts for bf16 matmul operands (f32 accumulation) vs the
    # pure-f32 XLA reference.
    ref = forward_ref(x, params, KERNEL_SIZES)
    np.testing.assert_allclose(np.asarray(out), np.asarray(ref),
                               rtol=2e-2, atol=2e-2)
    print("KERNEL_OK")
</pallas_src>

<mosaic_0001>
module attributes {stable_mosaic.version = 11 : i64} {
  func.func @_fused_forward_kernel(%arg0: i32, %arg1: memref<1x128x408xbf16, #tpu.memory_space<vmem>>, %arg2: memref<408x32xbf16, #tpu.memory_space<vmem>>, %arg3: memref<1x32xf32, #tpu.memory_space<vmem>>, %arg4: memref<1x32xf32, #tpu.memory_space<vmem>>, %arg5: memref<96x64xbf16, #tpu.memory_space<vmem>>, %arg6: memref<1x64xf32, #tpu.memory_space<vmem>>, %arg7: memref<1x64xf32, #tpu.memory_space<vmem>>, %arg8: memref<448x128xbf16, #tpu.memory_space<vmem>>, %arg9: memref<1x128xf32, #tpu.memory_space<vmem>>, %arg10: memref<1x128xf32, #tpu.memory_space<vmem>>, %arg11: memref<384x128xbf16, #tpu.memory_space<vmem>>, %arg12: memref<1x128xf32, #tpu.memory_space<vmem>>, %arg13: memref<1x128xf32, #tpu.memory_space<vmem>>, %arg14: memref<128x32xbf16, #tpu.memory_space<vmem>>, %arg15: memref<1x32xf32, #tpu.memory_space<vmem>>, %arg16: memref<1x32xf32, #tpu.memory_space<vmem>>, %arg17: memref<1x1xf32, #tpu.memory_space<vmem>>, %arg18: memref<1x1x1xf32, #tpu.memory_space<vmem>>, %arg19: memref<144x32xf32, #tpu.memory_space<vmem>>, %arg20: memref<128x64xf32, #tpu.memory_space<vmem>>, %arg21: memref<80x64xf32, #tpu.memory_space<vmem>>, %arg22: memref<80x128xf32, #tpu.memory_space<vmem>>) attributes {dimension_semantics = [#tpu.dimension_semantics<parallel>], iteration_bounds = array<i64: 2>, scalar_prefetch = 0 : i64, scratch_operands = 4 : i64, tpu.core_type = #tpu.core_type<tc>, window_params = [{transform_indices = @transform_0, window_bounds = array<i64: 1, 128, 408>}, {pipeline_mode = #tpu.pipeline_mode<synchronous>, transform_indices = @transform_1, window_bounds = array<i64: 408, 32>}, {pipeline_mode = #tpu.pipeline_mode<synchronous>, transform_indices = @transform_2, window_bounds = array<i64: 1, 32>}, {pipeline_mode = #tpu.pipeline_mode<synchronous>, transform_indices = @transform_3, window_bounds = array<i64: 1, 32>}, {pipeline_mode = #tpu.pipeline_mode<synchronous>, transform_indices = @transform_4, window_bounds = array<i64: 96, 64>}, {pipeline_mode = #tpu.pipeline_mode<synchronous>, transform_indices = @transform_5, window_bounds = array<i64: 1, 64>}, {pipeline_mode = #tpu.pipeline_mode<synchronous>, transform_indices = @transform_6, window_bounds = array<i64: 1, 64>}, {pipeline_mode = #tpu.pipeline_mode<synchronous>, transform_indices = @transform_7, window_bounds = array<i64: 448, 128>}, {pipeline_mode = #tpu.pipeline_mode<synchronous>, transform_indices = @transform_8, window_bounds = array<i64: 1, 128>}, {pipeline_mode = #tpu.pipeline_mode<synchronous>, transform_indices = @transform_9, window_bounds = array<i64: 1, 128>}, {pipeline_mode = #tpu.pipeline_mode<synchronous>, transform_indices = @transform_10, window_bounds = array<i64: 384, 128>}, {pipeline_mode = #tpu.pipeline_mode<synchronous>, transform_indices = @transform_11, window_bounds = array<i64: 1, 128>}, {pipeline_mode = #tpu.pipeline_mode<synchronous>, transform_indices = @transform_12, window_bounds = array<i64: 1, 128>}, {pipeline_mode = #tpu.pipeline_mode<synchronous>, transform_indices = @transform_13, window_bounds = array<i64: 128, 32>}, {pipeline_mode = #tpu.pipeline_mode<synchronous>, transform_indices = @transform_14, window_bounds = array<i64: 1, 32>}, {pipeline_mode = #tpu.pipeline_mode<synchronous>, transform_indices = @transform_15, window_bounds = array<i64: 1, 32>}, {pipeline_mode = #tpu.pipeline_mode<synchronous>, transform_indices = @transform_16, window_bounds = array<i64: 1, 1>}, {transform_indices = @transform_17, window_bounds = array<i64: 1, 1, 1>}]} {
    %c0 = arith.constant 0 : index
    %c0_0 = arith.constant 0 : index
    %c0_1 = arith.constant 0 : index
    %0 = vector.load %arg1[%c0, %c0_0, %c0_1] : memref<1x128x408xbf16, #tpu.memory_space<vmem>>, vector<1x128x408xbf16>
    %1 = vector.shape_cast %0 : vector<1x128x408xbf16> to vector<128x408xbf16>
    %c0_2 = arith.constant 0 : index
    %c0_3 = arith.constant 0 : index
    %2 = vector.load %arg2[%c0_2, %c0_3] : memref<408x32xbf16, #tpu.memory_space<vmem>>, vector<408x32xbf16>
    %cst = arith.constant dense<0.000000e+00> : vector<128x32xf32>
    %3 = tpu.matmul %1, %2, %cst {dimension_numbers = #tpu.dot_dimension_numbers<[1], [0], [0], [1], [0, 0, 1, 1], [], []>} : vector<128x408xbf16>, vector<408x32xbf16>, vector<128x32xf32> -> vector<128x32xf32>
    %c0_4 = arith.constant 0 : index
    %c0_5 = arith.constant 0 : index
    %4 = vector.load %arg3[%c0_4, %c0_5] : memref<1x32xf32, #tpu.memory_space<vmem>>, vector<1x32xf32>
    %5 = vector.broadcast %4 : vector<1x32xf32> to vector<128x32xf32>
    %6 = arith.mulf %3, %5 : vector<128x32xf32>
    %c0_6 = arith.constant 0 : index
    %c0_7 = arith.constant 0 : index
    %7 = vector.load %arg4[%c0_6, %c0_7] : memref<1x32xf32, #tpu.memory_space<vmem>>, vector<1x32xf32>
    %8 = vector.broadcast %7 : vector<1x32xf32> to vector<128x32xf32>
    %9 = arith.addf %6, %8 : vector<128x32xf32>
    %cst_8 = arith.constant 0.000000e+00 : f32
    %10 = vector.broadcast %cst_8 : f32 to vector<128x32xf32>
    %11 = arith.maximumf %9, %10 : vector<128x32xf32>
    %cst_9 = arith.constant 0.000000e+00 : f32
    %12 = vector.broadcast %cst_9 : f32 to vector<8x32xf32>
    %c0_10 = arith.constant 0 : index
    %c0_11 = arith.constant 0 : index
    %13 = vector.load %arg19[%c0_10, %c0_11] : memref<144x32xf32, #tpu.memory_space<vmem>>, vector<8x32xf32>
    tpu.vector_store %arg19[%c0_10, %c0_11], %12 {strides = array<i32>} : memref<144x32xf32, #tpu.memory_space<vmem>>, vector<8x32xf32>,
    %c136 = arith.constant 136 : index
    %c0_12 = arith.constant 0 : index
    %14 = vector.load %arg19[%c136, %c0_12] : memref<144x32xf32, #tpu.memory_space<vmem>>, vector<8x32xf32>
    tpu.vector_store %arg19[%c136, %c0_12], %12 {strides = array<i32>} : memref<144x32xf32, #tpu.memory_space<vmem>>, vector<8x32xf32>,
    %c8 = arith.constant 8 : index
    %c0_13 = arith.constant 0 : index
    %15 = vector.load %arg19[%c8, %c0_13] : memref<144x32xf32, #tpu.memory_space<vmem>>, vector<128x32xf32>
    tpu.vector_store %arg19[%c8, %c0_13], %11 {strides = array<i32>} : memref<144x32xf32, #tpu.memory_space<vmem>>, vector<128x32xf32>,
    %c7 = arith.constant 7 : index
    %c0_14 = arith.constant 0 : index
    %16 = vector.load %arg19[%c7, %c0_14] : memref<144x32xf32, #tpu.memory_space<vmem>>, vector<128x32xf32>
    %c8_15 = arith.constant 8 : index
    %c0_16 = arith.constant 0 : index
    %17 = vector.load %arg19[%c8_15, %c0_16] : memref<144x32xf32, #tpu.memory_space<vmem>>, vector<128x32xf32>
    %c9 = arith.constant 9 : index
    %c0_17 = arith.constant 0 : index
    %18 = vector.load %arg19[%c9, %c0_17] : memref<144x32xf32, #tpu.memory_space<vmem>>, vector<128x32xf32>
    %19 = tpu.concatenate %16, %17, %18 in 1 : vector<128x32xf32>, vector<128x32xf32>, vector<128x32xf32> -> vector<128x96xf32>
    %20 = arith.truncf %19 : vector<128x96xf32> to vector<128x96xbf16>
    %c0_18 = arith.constant 0 : index
    %c0_19 = arith.constant 0 : index
    %21 = vector.load %arg5[%c0_18, %c0_19] : memref<96x64xbf16, #tpu.memory_space<vmem>>, vector<96x64xbf16>
    %cst_20 = arith.constant dense<0.000000e+00> : vector<128x64xf32>
    %22 = tpu.matmul %20, %21, %cst_20 {dimension_numbers = #tpu.dot_dimension_numbers<[1], [0], [0], [1], [0, 0, 1, 1], [], []>} : vector<128x96xbf16>, vector<96x64xbf16>, vector<128x64xf32> -> vector<128x64xf32>
    %c0_21 = arith.constant 0 : index
    %c0_22 = arith.constant 0 : index
    %23 = vector.load %arg6[%c0_21, %c0_22] : memref<1x64xf32, #tpu.memory_space<vmem>>, vector<1x64xf32>
    %24 = vector.broadcast %23 : vector<1x64xf32> to vector<128x64xf32>
    %25 = arith.mulf %22, %24 : vector<128x64xf32>
    %c0_23 = arith.constant 0 : index
    %c0_24 = arith.constant 0 : index
    %26 = vector.load %arg7[%c0_23, %c0_24] : memref<1x64xf32, #tpu.memory_space<vmem>>, vector<1x64xf32>
    %27 = vector.broadcast %26 : vector<1x64xf32> to vector<128x64xf32>
    %28 = arith.addf %25, %27 : vector<128x64xf32>
    %cst_25 = arith.constant 0.000000e+00 : f32
    %29 = vector.broadcast %cst_25 : f32 to vector<128x64xf32>
    %30 = arith.maximumf %28, %29 : vector<128x64xf32>
    %c0_26 = arith.constant 0 : index
    %c0_27 = arith.constant 0 : index
    %31 = vector.load %arg20[%c0_26, %c0_27] : memref<128x64xf32, #tpu.memory_space<vmem>>, vector<128x64xf32>
    tpu.vector_store %arg20[%c0_26, %c0_27], %30 {strides = array<i32>} : memref<128x64xf32, #tpu.memory_space<vmem>>, vector<128x64xf32>,
    %c0_28 = arith.constant 0 : index
    %c0_29 = arith.constant 0 : index
    %32 = tpu.strided_load %arg20[%c0_28, %c0_29] {strides = array<i32: 2, 1>} : memref<128x64xf32, #tpu.memory_space<vmem>>, vector<64x64xf32>
    %c1 = arith.constant 1 : index
    %c0_30 = arith.constant 0 : index
    %33 = tpu.strided_load %arg20[%c1, %c0_30] {strides = array<i32: 2, 1>} : memref<128x64xf32, #tpu.memory_space<vmem>>, vector<64x64xf32>
    %34 = arith.maximumf %32, %33 : vector<64x64xf32>
    %cst_31 = arith.constant 0.000000e+00 : f32
    %35 = vector.broadcast %cst_31 : f32 to vector<8x64xf32>
    %c0_32 = arith.constant 0 : index
    %c0_33 = arith.constant 0 : index
    %36 = vector.load %arg21[%c0_32, %c0_33] : memref<80x64xf32, #tpu.memory_space<vmem>>, vector<8x64xf32>
    tpu.vector_store %arg21[%c0_32, %c0_33], %35 {strides = array<i32>} : memref<80x64xf32, #tpu.memory_space<vmem>>, vector<8x64xf32>,
    %c72 = arith.constant 72 : index
    %c0_34 = arith.constant 0 : index
    %37 = vector.load %arg21[%c72, %c0_34] : memref<80x64xf32, #tpu.memory_space<vmem>>, vector<8x64xf32>
    tpu.vector_store %arg21[%c72, %c0_34], %35 {strides = array<i32>} : memref<80x64xf32, #tpu.memory_space<vmem>>, vector<8x64xf32>,
    %c8_35 = arith.constant 8 : index
    %c0_36 = arith.constant 0 : index
    %38 = vector.load %arg21[%c8_35, %c0_36] : memref<80x64xf32, #tpu.memory_space<vmem>>, vector<64x64xf32>
    tpu.vector_store %arg21[%c8_35, %c0_36], %34 {strides = array<i32>} : memref<80x64xf32, #tpu.memory_space<vmem>>, vector<64x64xf32>,
    %c5 = arith.constant 5 : index
    %c0_37 = arith.constant 0 : index
    %39 = vector.load %arg21[%c5, %c0_37] : memref<80x64xf32, #tpu.memory_space<vmem>>, vector<64x64xf32>
    %c6 = arith.constant 6 : index
    %c0_38 = arith.constant 0 : index
    %40 = vector.load %arg21[%c6, %c0_38] : memref<80x64xf32, #tpu.memory_space<vmem>>, vector<64x64xf32>
    %c7_39 = arith.constant 7 : index
    %c0_40 = arith.constant 0 : index
    %41 = vector.load %arg21[%c7_39, %c0_40] : memref<80x64xf32, #tpu.memory_space<vmem>>, vector<64x64xf32>
    %c8_41 = arith.constant 8 : index
    %c0_42 = arith.constant 0 : index
    %42 = vector.load %arg21[%c8_41, %c0_42] : memref<80x64xf32, #tpu.memory_space<vmem>>, vector<64x64xf32>
    %c9_43 = arith.constant 9 : index
    %c0_44 = arith.constant 0 : index
    %43 = vector.load %arg21[%c9_43, %c0_44] : memref<80x64xf32, #tpu.memory_space<vmem>>, vector<64x64xf32>
    %c10 = arith.constant 10 : index
    %c0_45 = arith.constant 0 : index
    %44 = vector.load %arg21[%c10, %c0_45] : memref<80x64xf32, #tpu.memory_space<vmem>>, vector<64x64xf32>
    %c11 = arith.constant 11 : index
    %c0_46 = arith.constant 0 : index
    %45 = vector.load %arg21[%c11, %c0_46] : memref<80x64xf32, #tpu.memory_space<vmem>>, vector<64x64xf32>
    %46 = tpu.concatenate %39, %40, %41, %42, %43, %44, %45 in 1 : vector<64x64xf32>, vector<64x64xf32>, vector<64x64xf32>, vector<64x64xf32>, vector<64x64xf32>, vector<64x64xf32>, vector<64x64xf32> -> vector<64x448xf32>
    %47 = arith.truncf %46 : vector<64x448xf32> to vector<64x448xbf16>
    %c0_47 = arith.constant 0 : index
    %c0_48 = arith.constant 0 : index
    %48 = vector.load %arg8[%c0_47, %c0_48] : memref<448x128xbf16, #tpu.memory_space<vmem>>, vector<448x128xbf16>
    %cst_49 = arith.constant dense<0.000000e+00> : vector<64x128xf32>
    %49 = tpu.matmul %47, %48, %cst_49 {dimension_numbers = #tpu.dot_dimension_numbers<[1], [0], [0], [1], [0, 0, 1, 1], [], []>} : vector<64x448xbf16>, vector<448x128xbf16>, vector<64x128xf32> -> vector<64x128xf32>
    %c0_50 = arith.constant 0 : index
    %c0_51 = arith.constant 0 : index
    %50 = vector.load %arg9[%c0_50, %c0_51] : memref<1x128xf32, #tpu.memory_space<vmem>>, vector<1x128xf32>
    %51 = vector.broadcast %50 : vector<1x128xf32> to vector<64x128xf32>
    %52 = arith.mulf %49, %51 : vector<64x128xf32>
    %c0_52 = arith.constant 0 : index
    %c0_53 = arith.constant 0 : index
    %53 = vector.load %arg10[%c0_52, %c0_53] : memref<1x128xf32, #tpu.memory_space<vmem>>, vector<1x128xf32>
    %54 = vector.broadcast %53 : vector<1x128xf32> to vector<64x128xf32>
    %55 = arith.addf %52, %54 : vector<64x128xf32>
    %cst_54 = arith.constant 0.000000e+00 : f32
    %56 = vector.broadcast %cst_54 : f32 to vector<64x128xf32>
    %57 = arith.maximumf %55, %56 : vector<64x128xf32>
    %cst_55 = arith.constant 0.000000e+00 : f32
    %58 = vector.broadcast %cst_55 : f32 to vector<8x128xf32>
    %c0_56 = arith.constant 0 : index
    %c0_57 = arith.constant 0 : index
    %59 = vector.load %arg22[%c0_56, %c0_57] : memref<80x128xf32, #tpu.memory_space<vmem>>, vector<8x128xf32>
    tpu.vector_store %arg22[%c0_56, %c0_57], %58 {strides = array<i32>} : memref<80x128xf32, #tpu.memory_space<vmem>>, vector<8x128xf32>,
    %c72_58 = arith.constant 72 : index
    %c0_59 = arith.constant 0 : index
    %60 = vector.load %arg22[%c72_58, %c0_59] : memref<80x128xf32, #tpu.memory_space<vmem>>, vector<8x128xf32>
    tpu.vector_store %arg22[%c72_58, %c0_59], %58 {strides = array<i32>} : memref<80x128xf32, #tpu.memory_space<vmem>>, vector<8x128xf32>,
    %c8_60 = arith.constant 8 : index
    %c0_61 = arith.constant 0 : index
    %61 = vector.load %arg22[%c8_60, %c0_61] : memref<80x128xf32, #tpu.memory_space<vmem>>, vector<64x128xf32>
    tpu.vector_store %arg22[%c8_60, %c0_61], %57 {strides = array<i32>} : memref<80x128xf32, #tpu.memory_space<vmem>>, vector<64x128xf32>,
    %c7_62 = arith.constant 7 : index
    %c0_63 = arith.constant 0 : index
    %62 = vector.load %arg22[%c7_62, %c0_63] : memref<80x128xf32, #tpu.memory_space<vmem>>, vector<64x128xf32>
    %c8_64 = arith.constant 8 : index
    %c0_65 = arith.constant 0 : index
    %63 = vector.load %arg22[%c8_64, %c0_65] : memref<80x128xf32, #tpu.memory_space<vmem>>, vector<64x128xf32>
    %c9_66 = arith.constant 9 : index
    %c0_67 = arith.constant 0 : index
    %64 = vector.load %arg22[%c9_66, %c0_67] : memref<80x128xf32, #tpu.memory_space<vmem>>, vector<64x128xf32>
    %65 = tpu.concatenate %62, %63, %64 in 1 : vector<64x128xf32>, vector<64x128xf32>, vector<64x128xf32> -> vector<64x384xf32>
    %66 = arith.truncf %65 : vector<64x384xf32> to vector<64x384xbf16>
    %c0_68 = arith.constant 0 : index
    %c0_69 = arith.constant 0 : index
    %67 = vector.load %arg11[%c0_68, %c0_69] : memref<384x128xbf16, #tpu.memory_space<vmem>>, vector<384x128xbf16>
    %cst_70 = arith.constant dense<0.000000e+00> : vector<64x128xf32>
    %68 = tpu.matmul %66, %67, %cst_70 {dimension_numbers = #tpu.dot_dimension_numbers<[1], [0], [0], [1], [0, 0, 1, 1], [], []>} : vector<64x384xbf16>, vector<384x128xbf16>, vector<64x128xf32> -> vector<64x128xf32>
    %c0_71 = arith.constant 0 : index
    %c0_72 = arith.constant 0 : index
    %69 = vector.load %arg12[%c0_71, %c0_72] : memref<1x128xf32, #tpu.memory_space<vmem>>, vector<1x128xf32>
    %70 = vector.broadcast %69 : vector<1x128xf32> to vector<64x128xf32>
    %71 = arith.mulf %68, %70 : vector<64x128xf32>
    %c0_73 = arith.constant 0 : index
    %c0_74 = arith.constant 0 : index
    %72 = vector.load %arg13[%c0_73, %c0_74] : memref<1x128xf32, #tpu.memory_space<vmem>>, vector<1x128xf32>
    %73 = vector.broadcast %72 : vector<1x128xf32> to vector<64x128xf32>
    %74 = arith.addf %71, %73 : vector<64x128xf32>
    %cst_75 = arith.constant 0.000000e+00 : f32
    %75 = vector.broadcast %cst_75 : f32 to vector<64x128xf32>
    %76 = arith.maximumf %74, %75 : vector<64x128xf32>
    %cst_76 = arith.constant dense<0.000000e+00> : vector<128xf32>
    %77 = vector.multi_reduction <add>, %76, %cst_76 [0] : vector<64x128xf32> to vector<128xf32>
    %78 = vector.shape_cast %77 : vector<128xf32> to vector<1x128xf32>
    %cst_77 = arith.constant 6.400000e+01 : f32
    %79 = vector.broadcast %cst_77 : f32 to vector<1x128xf32>
    %80 = arith.divf %78, %79 : vector<1x128xf32>
    %81 = arith.truncf %80 : vector<1x128xf32> to vector<1x128xbf16>
    %c0_78 = arith.constant 0 : index
    %c0_79 = arith.constant 0 : index
    %82 = vector.load %arg14[%c0_78, %c0_79] : memref<128x32xbf16, #tpu.memory_space<vmem>>, vector<128x32xbf16>
    %cst_80 = arith.constant dense<0.000000e+00> : vector<1x32xf32>
    %83 = tpu.matmul %81, %82, %cst_80 {dimension_numbers = #tpu.dot_dimension_numbers<[1], [0], [0], [1], [0, 0, 1, 1], [], []>} : vector<1x128xbf16>, vector<128x32xbf16>, vector<1x32xf32> -> vector<1x32xf32>
    %c0_81 = arith.constant 0 : index
    %c0_82 = arith.constant 0 : index
    %84 = vector.load %arg15[%c0_81, %c0_82] : memref<1x32xf32, #tpu.memory_space<vmem>>, vector<1x32xf32>
    %85 = arith.addf %83, %84 : vector<1x32xf32>
    %cst_83 = arith.constant 0.000000e+00 : f32
    %86 = vector.broadcast %cst_83 : f32 to vector<1x32xf32>
    %87 = arith.maximumf %85, %86 : vector<1x32xf32>
    %c0_84 = arith.constant 0 : index
    %c0_85 = arith.constant 0 : index
    %88 = vector.load %arg16[%c0_84, %c0_85] : memref<1x32xf32, #tpu.memory_space<vmem>>, vector<1x32xf32>
    %89 = arith.mulf %87, %88 : vector<1x32xf32>
    %cst_86 = arith.constant dense<0.000000e+00> : vector<1xf32>
    %90 = vector.multi_reduction <add>, %89, %cst_86 [1] : vector<1x32xf32> to vector<1xf32>
    %91 = vector.shape_cast %90 : vector<1xf32> to vector<1x1xf32>
    %c0_87 = arith.constant 0 : index
    %c0_88 = arith.constant 0 : index
    %92 = vector.load %arg17[%c0_87, %c0_88] : memref<1x1xf32, #tpu.memory_space<vmem>>, vector<1x1xf32>
    %93 = arith.addf %91, %92 : vector<1x1xf32>
    %cst_89 = arith.constant 0.000000e+00 : f32
    %94 = vector.broadcast %cst_89 : f32 to vector<1x1xf32>
    %95 = arith.subf %94, %93 : vector<1x1xf32>
    %96 = math.exp %95 : vector<1x1xf32>
    %cst_90 = arith.constant 1.000000e+00 : f32
    %97 = vector.broadcast %cst_90 : f32 to vector<1x1xf32>
    %98 = arith.addf %97, %96 : vector<1x1xf32>
    %cst_91 = arith.constant 1.000000e+00 : f32
    %99 = vector.broadcast %cst_91 : f32 to vector<1x1xf32>
    %100 = arith.divf %99, %98 : vector<1x1xf32>
    %c0_92 = arith.constant 0 : index
    %c0_93 = arith.constant 0 : index
    %c0_94 = arith.constant 0 : index
    %101 = vector.load %arg18[%c0_92, %c0_93, %c0_94] : memref<1x1x1xf32, #tpu.memory_space<vmem>>, vector<1x1x1xf32>
    %102 = vector.shape_cast %101 : vector<1x1x1xf32> to vector<1x1xf32>
    %103 = vector.shape_cast %100 : vector<1x1xf32> to vector<1x1x1xf32>
    tpu.vector_store %arg18[%c0_92, %c0_93, %c0_94], %103 {strides = array<i32>} : memref<1x1x1xf32, #tpu.memory_space<vmem>>, vector<1x1x1xf32>,
    return
  }
  func.func @transform_0(%arg0: i32) -> (i32, i32, i32) {
    %c0_i32 = arith.constant 0 : i32
    %c0_i32_0 = arith.constant 0 : i32
    %c0_i32_1 = arith.constant 0 : i32
    return %arg0, %c0_i32, %c0_i32_0 : i32, i32, i32
  }
  func.func @transform_1(%arg0: i32) -> (i32, i32) {
    %c0_i32 = arith.constant 0 : i32
    %c0_i32_0 = arith.constant 0 : i32
    %c0_i32_1 = arith.constant 0 : i32
    return %c0_i32, %c0_i32_0 : i32, i32
  }
  func.func @transform_2(%arg0: i32) -> (i32, i32) {
    %c0_i32 = arith.constant 0 : i32
    %c0_i32_0 = arith.constant 0 : i32
    %c0_i32_1 = arith.constant 0 : i32
    return %c0_i32, %c0_i32_0 : i32, i32
  }
  func.func @transform_3(%arg0: i32) -> (i32, i32) {
    %c0_i32 = arith.constant 0 : i32
    %c0_i32_0 = arith.constant 0 : i32
    %c0_i32_1 = arith.constant 0 : i32
    return %c0_i32, %c0_i32_0 : i32, i32
  }
  func.func @transform_4(%arg0: i32) -> (i32, i32) {
    %c0_i32 = arith.constant 0 : i32
    %c0_i32_0 = arith.constant 0 : i32
    %c0_i32_1 = arith.constant 0 : i32
    return %c0_i32, %c0_i32_0 : i32, i32
  }
  func.func @transform_5(%arg0: i32) -> (i32, i32) {
    %c0_i32 = arith.constant 0 : i32
    %c0_i32_0 = arith.constant 0 : i32
    %c0_i32_1 = arith.constant 0 : i32
    return %c0_i32, %c0_i32_0 : i32, i32
  }
  func.func @transform_6(%arg0: i32) -> (i32, i32) {
    %c0_i32 = arith.constant 0 : i32
    %c0_i32_0 = arith.constant 0 : i32
    %c0_i32_1 = arith.constant 0 : i32
    return %c0_i32, %c0_i32_0 : i32, i32
  }
  func.func @transform_7(%arg0: i32) -> (i32, i32) {
    %c0_i32 = arith.constant 0 : i32
    %c0_i32_0 = arith.constant 0 : i32
    %c0_i32_1 = arith.constant 0 : i32
    return %c0_i32, %c0_i32_0 : i32, i32
  }
  func.func @transform_8(%arg0: i32) -> (i32, i32) {
    %c0_i32 = arith.constant 0 : i32
    %c0_i32_0 = arith.constant 0 : i32
    %c0_i32_1 = arith.constant 0 : i32
    return %c0_i32, %c0_i32_0 : i32, i32
  }
  func.func @transform_9(%arg0: i32) -> (i32, i32) {
    %c0_i32 = arith.constant 0 : i32
    %c0_i32_0 = arith.constant 0 : i32
    %c0_i32_1 = arith.constant 0 : i32
    return %c0_i32, %c0_i32_0 : i32, i32
  }
  func.func @transform_10(%arg0: i32) -> (i32, i32) {
    %c0_i32 = arith.constant 0 : i32
    %c0_i32_0 = arith.constant 0 : i32
    %c0_i32_1 = arith.constant 0 : i32
    return %c0_i32, %c0_i32_0 : i32, i32
  }
  func.func @transform_11(%arg0: i32) -> (i32, i32) {
    %c0_i32 = arith.constant 0 : i32
    %c0_i32_0 = arith.constant 0 : i32
    %c0_i32_1 = arith.constant 0 : i32
    return %c0_i32, %c0_i32_0 : i32, i32
  }
  func.func @transform_12(%arg0: i32) -> (i32, i32) {
    %c0_i32 = arith.constant 0 : i32
    %c0_i32_0 = arith.constant 0 : i32
    %c0_i32_1 = arith.constant 0 : i32
    return %c0_i32, %c0_i32_0 : i32, i32
  }
  func.func @transform_13(%arg0: i32) -> (i32, i32) {
    %c0_i32 = arith.constant 0 : i32
    %c0_i32_0 = arith.constant 0 : i32
    %c0_i32_1 = arith.constant 0 : i32
    return %c0_i32, %c0_i32_0 : i32, i32
  }
  func.func @transform_14(%arg0: i32) -> (i32, i32) {
    %c0_i32 = arith.constant 0 : i32
    %c0_i32_0 = arith.constant 0 : i32
    %c0_i32_1 = arith.constant 0 : i32
    return %c0_i32, %c0_i32_0 : i32, i32
  }
  func.func @transform_15(%arg0: i32) -> (i32, i32) {
    %c0_i32 = arith.constant 0 : i32
    %c0_i32_0 = arith.constant 0 : i32
    %c0_i32_1 = arith.constant 0 : i32
    return %c0_i32, %c0_i32_0 : i32, i32
  }
  func.func @transform_16(%arg0: i32) -> (i32, i32) {
    %c0_i32 = arith.constant 0 : i32
    %c0_i32_0 = arith.constant 0 : i32
    %c0_i32_1 = arith.constant 0 : i32
    return %c0_i32, %c0_i32_0 : i32, i32
  }
  func.func @transform_17(%arg0: i32) -> (i32, i32, i32) {
    %c0_i32 = arith.constant 0 : i32
    %c0_i32_0 = arith.constant 0 : i32
    %c0_i32_1 = arith.constant 0 : i32
    return %arg0, %c0_i32, %c0_i32_0 : i32, i32, i32
  }
}

</mosaic_0001>

<llo_original>
// kernel: _lambda_.1
$region0: #{_lambda_.1}
  #allocation0 [shape = 'u32[]', space=smem, size = 0x4, offset = 0x4, fixed_abs, tag = 'smem constant byte address 0x4 - core index']
  #allocation1 [shape = 'u32[144,128]{1,0:T(1,128)}', space=vmem, size = 0x12000, scoped, tag = 'internal scratch']
  #allocation2 [shape = 'f32[144,32]{1,0:T(8,128)}', space=vmem, size = 0x12000, scoped, tag = 'scratch operand']
  #allocation3 [shape = 'f32[128,64]{1,0:T(8,128)}', space=vmem, size = 0x10000, scoped, tag = 'scratch operand']
  #allocation4 [shape = 'f32[80,64]{1,0:T(8,128)}', space=vmem, size = 0xa000, scoped, tag = 'scratch operand']
  #allocation5 [shape = 'f32[80,128]{1,0:T(8,128)}', space=vmem, size = 0xa000, scoped, tag = 'scratch operand']
  #allocation6 [shape = 'f32[1,1]{1,0:T(1,128)S(1)}', space=vmem, size = 0x200, scoped, tag = 'scoped memory for _lambda_.1']
  %s0 = inlined_call_operand.vmem [shape: bf16[2,128,408], index: 0, kind: input, shape index: {}]
  %s1 = inlined_call_operand.vmem [shape: bf16[408,32], index: 1, kind: input, shape index: {}]
  %s2 = inlined_call_operand.vmem [shape: f32[1,32], index: 2, kind: input, shape index: {}]
  %s3 = inlined_call_operand.vmem [shape: f32[1,32], index: 3, kind: input, shape index: {}]
  %s4 = inlined_call_operand.vmem [shape: bf16[96,64], index: 4, kind: input, shape index: {}]
  %s5 = inlined_call_operand.vmem [shape: f32[1,64], index: 5, kind: input, shape index: {}]
  %s6 = inlined_call_operand.vmem [shape: f32[1,64], index: 6, kind: input, shape index: {}]
  %s7 = inlined_call_operand.vmem [shape: bf16[448,128], index: 7, kind: input, shape index: {}]
  %s8 = inlined_call_operand.vmem [shape: f32[1,128], index: 8, kind: input, shape index: {}]
  %s9 = inlined_call_operand.vmem [shape: f32[1,128], index: 9, kind: input, shape index: {}]
  %s10 = inlined_call_operand.vmem [shape: bf16[384,128], index: 10, kind: input, shape index: {}]
  %s11 = inlined_call_operand.vmem [shape: f32[1,128], index: 11, kind: input, shape index: {}]
  %s12 = inlined_call_operand.vmem [shape: f32[1,128], index: 12, kind: input, shape index: {}]
  %s13 = inlined_call_operand.vmem [shape: bf16[128,32], index: 13, kind: input, shape index: {}]
  %s14 = inlined_call_operand.vmem [shape: f32[1,32], index: 14, kind: input, shape index: {}]
  %s15 = inlined_call_operand.vmem [shape: f32[1,32], index: 15, kind: input, shape index: {}]
  %s16 = inlined_call_operand.<no memory space> [shape: f32[1,1], index: 16, kind: input, shape index: {}]
  %s17 = inlined_call_operand.vmem [shape: f32[2,1,1], index: 17, kind: output, shape index: {}]
  %s18 = sld [smem:[#allocation0]]
  $region101: #{_lambda_.1} parent=0
    _
  %s20 = ssub.s32 1, %s18
  %s21 = scalar_select 0, %s20, %s18
  %v22 = vstv %s16
  %23 = vst [vmem:[#allocation6] sm:$0x1] %v22
  loop: start=0, step=1, limit=4
  $region2: #{_lambda_.1} parent=0 // loop_pre_header
    _
  $region3: #{_lambda_.1} parent=0 // loop_header
    %s25 = sphi 0, %s29
    %p26 = scmp.ge.s32.totalorder %s25, 4
    %s35 = sphi 0, %s37
    %s38 = sphi 0, %s35
    %s39 = sphi 0, %s38
    %s55 = sphi 0, %s39
    %s59 = sphi 0, %s59
    %s61 = sphi 0, %s59
    %s62 = sphi 0, %s61
    %s76 = sphi 0, %s62
    %s80 = sphi 0, %s80
    %s82 = sphi 0, %s80
    %s83 = sphi 0, %s82
    %s97 = sphi 0, %s83
    %s101 = sphi 0, %s101
    %s103 = sphi 0, %s101
    %s104 = sphi 0, %s103
    %s118 = sphi 0, %s104
    %s122 = sphi 0, %s122
    %s124 = sphi 0, %s122
    %s125 = sphi 0, %s124
    %s139 = sphi 0, %s125
    %s143 = sphi 0, %s143
    %s145 = sphi 0, %s143
    %s146 = sphi 0, %s145
    %s160 = sphi 0, %s146
    %s164 = sphi 0, %s164
    %s166 = sphi 0, %s164
    %s167 = sphi 0, %s166
    %s181 = sphi 0, %s167
    %s185 = sphi 0, %s185
    %s187 = sphi 0, %s185
    %s188 = sphi 0, %s187
    %s202 = sphi 0, %s188
    %s206 = sphi 0, %s206
    %s208 = sphi 0, %s206
    %s209 = sphi 0, %s208
    %s223 = sphi 0, %s209
    %s227 = sphi 0, %s227
    %s229 = sphi 0, %s227
    %s230 = sphi 0, %s229
    %s244 = sphi 0, %s230
    %s248 = sphi 0, %s248
    %s250 = sphi 0, %s248
    %s251 = sphi 0, %s250
    %s265 = sphi 0, %s251
    %s269 = sphi 0, %s269
    %s271 = sphi 0, %s269
    %s272 = sphi 0, %s271
    %s286 = sphi 0, %s272
    %s290 = sphi 0, %s290
    %s292 = sphi 0, %s290
    %s293 = sphi 0, %s292
    %s307 = sphi 0, %s293
    %s311 = sphi 0, %s311
    %s313 = sphi 0, %s311
    %s314 = sphi 0, %s313
    %s328 = sphi 0, %s314
    %s332 = sphi 0, %s332
    %s334 = sphi 0, %s332
    %s335 = sphi 0, %s334
    %s349 = sphi 0, %s335
    %s353 = sphi 0, %s353
    %s355 = sphi 0, %s353
    %s356 = sphi 0, %s355
    %s370 = sphi 0, %s356
    %s374 = sphi 0, %s374
    %s376 = sphi 0, %s374
    %s377 = sphi 0, %s376
    %s391 = sphi 0, %s377
    %s397 = sphi 0, %s399
    %s400 = sphi 0, %s397
    %s401 = sphi 0, %s400
    %s417 = sphi 0, %s401
  $region4: #{_lambda_.1} parent=0 // loop_header_branch
    %28 = sbr.rel (%p26) target = $region8
  $region5: #{_lambda_.1} parent=0 // loop_body
    %s30 = ssub.s32 %s25, 1
    %s31 = ssub.s32 %s25, 2
    %s32 = sadd.s32 %s25, 1
    %s33 = ssub.s32 %s25, %s32
    %p34 = scmp.eq.s32.totalorder %s33, 0
    %s36 = sadd.s32 %s35, 1
    %s37 = scalar_select %p34, %s35, %s36
    %p40 = pneg %p34
    %p41 = scmp.eq.s32.totalorder %s25, 1
    %p42 = por %p40, %p41
    %p43 = scmp.ne.s32.totalorder %s35, %s38
    %p44 = scmp.eq.s32.totalorder %s25, 0
    %p45 = por %p43, %p44
    %p46 = scmp.ne.s32.totalorder %s35, %s38
    %p47 = scmp.eq.s32.totalorder %s30, 1
    %p48 = por %p46, %p47
    %p49 = scmp.ne.s32.totalorder %s38, %s39
    %p50 = scmp.eq.s32.totalorder %s30, 0
    %p51 = por %p49, %p50
    %p52 = scmp.ne.s32.totalorder %s38, %s39
    %p53 = scmp.eq.s32.totalorder %s31, 1
    %p54 = por %p52, %p53
    %p56 = scmp.ne.s32.totalorder %s39, %s55
    %p57 = scmp.eq.s32.totalorder %s31, 0
    %p58 = por %p56, %p57
    %s60 = sadd.s32 %s59, 1
    %p63 = scmp.eq.s32.totalorder %s25, 1
    %p64 = scmp.ne.s32.totalorder %s59, %s61
    %p65 = scmp.eq.s32.totalorder %s25, 0
    %p66 = por %p64, %p65
    %p67 = scmp.ne.s32.totalorder %s59, %s61
    %p68 = scmp.eq.s32.totalorder %s30, 1
    %p69 = por %p67, %p68
    %p70 = scmp.ne.s32.totalorder %s61, %s62
    %p71 = scmp.eq.s32.totalorder %s30, 0
    %p72 = por %p70, %p71
    %p73 = scmp.ne.s32.totalorder %s61, %s62
    %p74 = scmp.eq.s32.totalorder %s31, 1
    %p75 = por %p73, %p74
    %p77 = scmp.ne.s32.totalorder %s62, %s76
    %p78 = scmp.eq.s32.totalorder %s31, 0
    %p79 = por %p77, %p78
    %s81 = sadd.s32 %s80, 1
    %p84 = scmp.eq.s32.totalorder %s25, 1
    %p85 = scmp.ne.s32.totalorder %s80, %s82
    %p86 = scmp.eq.s32.totalorder %s25, 0
    %p87 = por %p85, %p86
    %p88 = scmp.ne.s32.totalorder %s80, %s82
    %p89 = scmp.eq.s32.totalorder %s30, 1
    %p90 = por %p88, %p89
    %p91 = scmp.ne.s32.totalorder %s82, %s83
    %p92 = scmp.eq.s32.totalorder %s30, 0
    %p93 = por %p91, %p92
    %p94 = scmp.ne.s32.totalorder %s82, %s83
    %p95 = scmp.eq.s32.totalorder %s31, 1
    %p96 = por %p94, %p95
    %p98 = scmp.ne.s32.totalorder %s83, %s97
    %p99 = scmp.eq.s32.totalorder %s31, 0
    %p100 = por %p98, %p99
    %s102 = sadd.s32 %s101, 1
    %p105 = scmp.eq.s32.totalorder %s25, 1
    %p106 = scmp.ne.s32.totalorder %s101, %s103
    %p107 = scmp.eq.s32.totalorder %s25, 0
    %p108 = por %p106, %p107
    %p109 = scmp.ne.s32.totalorder %s101, %s103
    %p110 = scmp.eq.s32.totalorder %s30, 1
    %p111 = por %p109, %p110
    %p112 = scmp.ne.s32.totalorder %s103, %s104
    %p113 = scmp.eq.s32.totalorder %s30, 0
    %p114 = por %p112, %p113
    %p115 = scmp.ne.s32.totalorder %s103, %s104
    %p116 = scmp.eq.s32.totalorder %s31, 1
    %p117 = por %p115, %p116
    %p119 = scmp.ne.s32.totalorder %s104, %s118
    %p120 = scmp.eq.s32.totalorder %s31, 0
    %p121 = por %p119, %p120
    %s123 = sadd.s32 %s122, 1
    %p126 = scmp.eq.s32.totalorder %s25, 1
    %p127 = scmp.ne.s32.totalorder %s122, %s124
    %p128 = scmp.eq.s32.totalorder %s25, 0
    %p129 = por %p127, %p128
    %p130 = scmp.ne.s32.totalorder %s122, %s124
    %p131 = scmp.eq.s32.totalorder %s30, 1
    %p132 = por %p130, %p131
    %p133 = scmp.ne.s32.totalorder %s124, %s125
    %p134 = scmp.eq.s32.totalorder %s30, 0
    %p135 = por %p133, %p134
    %p136 = scmp.ne.s32.totalorder %s124, %s125
    %p137 = scmp.eq.s32.totalorder %s31, 1
    %p138 = por %p136, %p137
    %p140 = scmp.ne.s32.totalorder %s125, %s139
    %p141 = scmp.eq.s32.totalorder %s31, 0
    %p142 = por %p140, %p141
    %s144 = sadd.s32 %s143, 1
    %p147 = scmp.eq.s32.totalorder %s25, 1
    %p148 = scmp.ne.s32.totalorder %s143, %s145
    %p149 = scmp.eq.s32.totalorder %s25, 0
    %p150 = por %p148, %p149
    %p151 = scmp.ne.s32.totalorder %s143, %s145
    %p152 = scmp.eq.s32.totalorder %s30, 1
    %p153 = por %p151, %p152
    %p154 = scmp.ne.s32.totalorder %s145, %s146
    %p155 = scmp.eq.s32.totalorder %s30, 0
    %p156 = por %p154, %p155
    %p157 = scmp.ne.s32.totalorder %s145, %s146
    %p158 = scmp.eq.s32.totalorder %s31, 1
    %p159 = por %p157, %p158
    %p161 = scmp.ne.s32.totalorder %s146, %s160
    %p162 = scmp.eq.s32.totalorder %s31, 0
    %p163 = por %p161, %p162
    %s165 = sadd.s32 %s164, 1
    %p168 = scmp.eq.s32.totalorder %s25, 1
    %p169 = scmp.ne.s32.totalorder %s164, %s166
    %p170 = scmp.eq.s32.totalorder %s25, 0
    %p171 = por %p169, %p170
    %p172 = scmp.ne.s32.totalorder %s164, %s166
    %p173 = scmp.eq.s32.totalorder %s30, 1
    %p174 = por %p172, %p173
    %p175 = scmp.ne.s32.totalorder %s166, %s167
    %p176 = scmp.eq.s32.totalorder %s30, 0
    %p177 = por %p175, %p176
    %p178 = scmp.ne.s32.totalorder %s166, %s167
    %p179 = scmp.eq.s32.totalorder %s31, 1
    %p180 = por %p178, %p179
    %p182 = scmp.ne.s32.totalorder %s167, %s181
    %p183 = scmp.eq.s32.totalorder %s31, 0
    %p184 = por %p182, %p183
    %s186 = sadd.s32 %s185, 1
    %p189 = scmp.eq.s32.totalorder %s25, 1
    %p190 = scmp.ne.s32.totalorder %s185, %s187
    %p191 = scmp.eq.s32.totalorder %s25, 0
    %p192 = por %p190, %p191
    %p193 = scmp.ne.s32.totalorder %s185, %s187
    %p194 = scmp.eq.s32.totalorder %s30, 1
    %p195 = por %p193, %p194
    %p196 = scmp.ne.s32.totalorder %s187, %s188
    %p197 = scmp.eq.s32.totalorder %s30, 0
    %p198 = por %p196, %p197
    %p199 = scmp.ne.s32.totalorder %s187, %s188
    %p200 = scmp.eq.s32.totalorder %s31, 1
    %p201 = por %p199, %p200
    %p203 = scmp.ne.s32.totalorder %s188, %s202
    %p204 = scmp.eq.s32.totalorder %s31, 0
    %p205 = por %p203, %p204
    %s207 = sadd.s32 %s206, 1
    %p210 = scmp.eq.s32.totalorder %s25, 1
    %p211 = scmp.ne.s32.totalorder %s206, %s208
    %p212 = scmp.eq.s32.totalorder %s25, 0
    %p213 = por %p211, %p212
    %p214 = scmp.ne.s32.totalorder %s206, %s208
    %p215 = scmp.eq.s32.totalorder %s30, 1
    %p216 = por %p214, %p215
    %p217 = scmp.ne.s32.totalorder %s208, %s209
    %p218 = scmp.eq.s32.totalorder %s30, 0
    %p219 = por %p217, %p218
    %p220 = scmp.ne.s32.totalorder %s208, %s209
    %p221 = scmp.eq.s32.totalorder %s31, 1
    %p222 = por %p220, %p221
    %p224 = scmp.ne.s32.totalorder %s209, %s223
    %p225 = scmp.eq.s32.totalorder %s31, 0
    %p226 = por %p224, %p225
    %s228 = sadd.s32 %s227, 1
    %p231 = scmp.eq.s32.totalorder %s25, 1
    %p232 = scmp.ne.s32.totalorder %s227, %s229
    %p233 = scmp.eq.s32.totalorder %s25, 0
    %p234 = por %p232, %p233
    %p235 = scmp.ne.s32.totalorder %s227, %s229
    %p236 = scmp.eq.s32.totalorder %s30, 1
    %p237 = por %p235, %p236
    %p238 = scmp.ne.s32.totalorder %s229, %s230
    %p239 = scmp.eq.s32.totalorder %s30, 0
    %p240 = por %p238, %p239
    %p241 = scmp.ne.s32.totalorder %s229, %s230
    %p242 = scmp.eq.s32.totalorder %s31, 1
    %p243 = por %p241, %p242
    %p245 = scmp.ne.s32.totalorder %s230, %s244
    %p246 = scmp.eq.s32.totalorder %s31, 0
    %p247 = por %p245, %p246
    %s249 = sadd.s32 %s248, 1
    %p252 = scmp.eq.s32.totalorder %s25, 1
    %p253 = scmp.ne.s32.totalorder %s248, %s250
    %p254 = scmp.eq.s32.totalorder %s25, 0
    %p255 = por %p253, %p254
    %p256 = scmp.ne.s32.totalorder %s248, %s250
    %p257 = scmp.eq.s32.totalorder %s30, 1
    %p258 = por %p256, %p257
    %p259 = scmp.ne.s32.totalorder %s250, %s251
    %p260 = scmp.eq.s32.totalorder %s30, 0
    %p261 = por %p259, %p260
    %p262 = scmp.ne.s32.totalorder %s250, %s251
    %p263 = scmp.eq.s32.totalorder %s31, 1
    %p264 = por %p262, %p263
    %p266 = scmp.ne.s32.totalorder %s251, %s265
    %p267 = scmp.eq.s32.totalorder %s31, 0
    %p268 = por %p266, %p267
    %s270 = sadd.s32 %s269, 1
    %p273 = scmp.eq.s32.totalorder %s25, 1
    %p274 = scmp.ne.s32.totalorder %s269, %s271
    %p275 = scmp.eq.s32.totalorder %s25, 0
    %p276 = por %p274, %p275
    %p277 = scmp.ne.s32.totalorder %s269, %s271
    %p278 = scmp.eq.s32.totalorder %s30, 1
    %p279 = por %p277, %p278
    %p280 = scmp.ne.s32.totalorder %s271, %s272
    %p281 = scmp.eq.s32.totalorder %s30, 0
    %p282 = por %p280, %p281
    %p283 = scmp.ne.s32.totalorder %s271, %s272
    %p284 = scmp.eq.s32.totalorder %s31, 1
    %p285 = por %p283, %p284
    %p287 = scmp.ne.s32.totalorder %s272, %s286
    %p288 = scmp.eq.s32.totalorder %s31, 0
    %p289 = por %p287, %p288
    %s291 = sadd.s32 %s290, 1
    %p294 = scmp.eq.s32.totalorder %s25, 1
    %p295 = scmp.ne.s32.totalorder %s290, %s292
    %p296 = scmp.eq.s32.totalorder %s25, 0
    %p297 = por %p295, %p296
    %p298 = scmp.ne.s32.totalorder %s290, %s292
    %p299 = scmp.eq.s32.totalorder %s30, 1
    %p300 = por %p298, %p299
    %p301 = scmp.ne.s32.totalorder %s292, %s293
    %p302 = scmp.eq.s32.totalorder %s30, 0
    %p303 = por %p301, %p302
    %p304 = scmp.ne.s32.totalorder %s292, %s293
    %p305 = scmp.eq.s32.totalorder %s31, 1
    %p306 = por %p304, %p305
    %p308 = scmp.ne.s32.totalorder %s293, %s307
    %p309 = scmp.eq.s32.totalorder %s31, 0
    %p310 = por %p308, %p309
    %s312 = sadd.s32 %s311, 1
    %p315 = scmp.eq.s32.totalorder %s25, 1
    %p316 = scmp.ne.s32.totalorder %s311, %s313
    %p317 = scmp.eq.s32.totalorder %s25, 0
    %p318 = por %p316, %p317
    %p319 = scmp.ne.s32.totalorder %s311, %s313
    %p320 = scmp.eq.s32.totalorder %s30, 1
    %p321 = por %p319, %p320
    %p322 = scmp.ne.s32.totalorder %s313, %s314
    %p323 = scmp.eq.s32.totalorder %s30, 0
    %p324 = por %p322, %p323
    %p325 = scmp.ne.s32.totalorder %s313, %s314
    %p326 = scmp.eq.s32.totalorder %s31, 1
    %p327 = por %p325, %p326
    %p329 = scmp.ne.s32.totalorder %s314, %s328
    %p330 = scmp.eq.s32.totalorder %s31, 0
    %p331 = por %p329, %p330
    %s333 = sadd.s32 %s332, 1
    %p336 = scmp.eq.s32.totalorder %s25, 1
    %p337 = scmp.ne.s32.totalorder %s332, %s334
    %p338 = scmp.eq.s32.totalorder %s25, 0
    %p339 = por %p337, %p338
    %p340 = scmp.ne.s32.totalorder %s332, %s334
    %p341 = scmp.eq.s32.totalorder %s30, 1
    %p342 = por %p340, %p341
    %p343 = scmp.ne.s32.totalorder %s334, %s335
    %p344 = scmp.eq.s32.totalorder %s30, 0
    %p345 = por %p343, %p344
    %p346 = scmp.ne.s32.totalorder %s334, %s335
    %p347 = scmp.eq.s32.totalorder %s31, 1
    %p348 = por %p346, %p347
    %p350 = scmp.ne.s32.totalorder %s335, %s349
    %p351 = scmp.eq.s32.totalorder %s31, 0
    %p352 = por %p350, %p351
    %s354 = sadd.s32 %s353, 1
    %p357 = scmp.eq.s32.totalorder %s25, 1
    %p358 = scmp.ne.s32.totalorder %s353, %s355
    %p359 = scmp.eq.s32.totalorder %s25, 0
    %p360 = por %p358, %p359
    %p361 = scmp.ne.s32.totalorder %s353, %s355
    %p362 = scmp.eq.s32.totalorder %s30, 1
    %p363 = por %p361, %p362
    %p364 = scmp.ne.s32.totalorder %s355, %s356
    %p365 = scmp.eq.s32.totalorder %s30, 0
    %p366 = por %p364, %p365
    %p367 = scmp.ne.s32.totalorder %s355, %s356
    %p368 = scmp.eq.s32.totalorder %s31, 1
    %p369 = por %p367, %p368
    %p371 = scmp.ne.s32.totalorder %s356, %s370
    %p372 = scmp.eq.s32.totalorder %s31, 0
    %p373 = por %p371, %p372
    %s375 = sadd.s32 %s374, 1
    %p378 = scmp.eq.s32.totalorder %s25, 1
    %p379 = scmp.ne.s32.totalorder %s374, %s376
    %p380 = scmp.eq.s32.totalorder %s25, 0
    %p381 = por %p379, %p380
    %p382 = scmp.ne.s32.totalorder %s374, %s376
    %p383 = scmp.eq.s32.totalorder %s30, 1
    %p384 = por %p382, %p383
    %p385 = scmp.ne.s32.totalorder %s376, %s377
    %p386 = scmp.eq.s32.totalorder %s30, 0
    %p387 = por %p385, %p386
    %p388 = scmp.ne.s32.totalorder %s376, %s377
    %p389 = scmp.eq.s32.totalorder %s31, 1
    %p390 = por %p388, %p389
    %p392 = scmp.ne.s32.totalorder %s377, %s391
    %p393 = scmp.eq.s32.totalorder %s31, 0
    %p394 = por %p392, %p393
    %s395 = ssub.s32 %s25, %s32
    %p396 = scmp.eq.s32.totalorder %s395, 0
    %s398 = sadd.s32 %s397, 1
    %s399 = scalar_select %p396, %s397, %s398
    %p402 = pneg %p396
    %p403 = scmp.eq.s32.totalorder %s25, 1
    %p404 = por %p402, %p403
    %p405 = scmp.ne.s32.totalorder %s397, %s400
    %p406 = scmp.eq.s32.totalorder %s25, 0
    %p407 = por %p405, %p406
    %p408 = scmp.ne.s32.totalorder %s397, %s400
    %p409 = scmp.eq.s32.totalorder %s30, 1
    %p410 = por %p408, %p409
    %p411 = scmp.ne.s32.totalorder %s400, %s401
    %p412 = scmp.eq.s32.totalorder %s30, 0
    %p413 = por %p411, %p412
    %p414 = scmp.ne.s32.totalorder %s400, %s401
    %p415 = scmp.eq.s32.totalorder %s31, 1
    %p416 = por %p414, %p415
    %p418 = scmp.ne.s32.totalorder %s401, %s417
    %p419 = scmp.eq.s32.totalorder %s31, 0
    %p420 = por %p418, %p419
    %p421 = scmp.le.s32.totalorder 1, %s25
    %p422 = scmp.lt.s32.totalorder %s25, 3
    %p423 = pnand %p421, %p422
    %p424 = pneg %p423
    // Predicated region
    $region9: #{_lambda_.1} parent=5 // pred_check
      _
    $region10: #{_lambda_.1} parent=5 // pred_check_branch
      %426 = sbr.rel (%p423) target = $region12
    $region11: #{_lambda_.1} parent=5 // pred_region
      %s427 = ssub.s32 %s25, 1
      // Predicated region
      $region13: #{_lambda_.1} parent=11 // pred_check
        %p428 = pneg %p72
      $region14: #{_lambda_.1} parent=11 // pred_check_branch
        %430 = sbr.rel (%p428) target = $region16
      $region15: #{_lambda_.1} parent=11 // pred_region
        _
      $region16: #{_lambda_.1} parent=11 // pred_fallthru
        _
      // Predicated region
      $region17: #{_lambda_.1} parent=11 // pred_check
        %p431 = pneg %p93
      $region18: #{_lambda_.1} parent=11 // pred_check_branch
        %433 = sbr.rel (%p431) target = $region20
      $region19: #{_lambda_.1} parent=11 // pred_region
        _
      $region20: #{_lambda_.1} parent=11 // pred_fallthru
        _
      // Predicated region
      $region21: #{_lambda_.1} parent=11 // pred_check
        %p434 = pneg %p114
      $region22: #{_lambda_.1} parent=11 // pred_check_branch
        %436 = sbr.rel (%p434) target = $region24
      $region23: #{_lambda_.1} parent=11 // pred_region
        _
      $region24: #{_lambda_.1} parent=11 // pred_fallthru
        _
      // Predicated region
      $region25: #{_lambda_.1} parent=11 // pred_check
        %p437 = pneg %p135
      $region26: #{_lambda_.1} parent=11 // pred_check_branch
        %439 = sbr.rel (%p437) target = $region28
      $region27: #{_lambda_.1} parent=11 // pred_region
        _
      $region28: #{_lambda_.1} parent=11 // pred_fallthru
        _
      // Predicated region
      $region29: #{_lambda_.1} parent=11 // pred_check
        %p440 = pneg %p156
      $region30: #{_lambda_.1} parent=11 // pred_check_branch
        %442 = sbr.rel (%p440) target = $region32
      $region31: #{_lambda_.1} parent=11 // pred_region
        _
      $region32: #{_lambda_.1} parent=11 // pred_fallthru
        _
      // Predicated region
      $region33: #{_lambda_.1} parent=11 // pred_check
        %p443 = pneg %p177
      $region34: #{_lambda_.1} parent=11 // pred_check_branch
        %445 = sbr.rel (%p443) target = $region36
      $region35: #{_lambda_.1} parent=11 // pred_region
        _
      $region36: #{_lambda_.1} parent=11 // pred_fallthru
        _
      // Predicated region
      $region37: #{_lambda_.1} parent=11 // pred_check
        %p446 = pneg %p198
      $region38: #{_lambda_.1} parent=11 // pred_check_branch
        %448 = sbr.rel (%p446) target = $region40
      $region39: #{_lambda_.1} parent=11 // pred_region
        _
      $region40: #{_lambda_.1} parent=11 // pred_fallthru
        _
      // Predicated region
      $region41: #{_lambda_.1} parent=11 // pred_check
        %p449 = pneg %p219
      $region42: #{_lambda_.1} parent=11 // pred_check_branch
        %451 = sbr.rel (%p449) target = $region44
      $region43: #{_lambda_.1} parent=11 // pred_region
        _
      $region44: #{_lambda_.1} parent=11 // pred_fallthru
        _
      // Predicated region
      $region45: #{_lambda_.1} parent=11 // pred_check
        %p452 = pneg %p240
      $region46: #{_lambda_.1} parent=11 // pred_check_branch
        %454 = sbr.rel (%p452) target = $region48
      $region47: #{_lambda_.1} parent=11 // pred_region
        _
      $region48: #{_lambda_.1} parent=11 // pred_fallthru
        _
      // Predicated region
      $region49: #{_lambda_.1} parent=11 // pred_check
        %p455 = pneg %p261
      $region50: #{_lambda_.1} parent=11 // pred_check_branch
        %457 = sbr.rel (%p455) target = $region52
      $region51: #{_lambda_.1} parent=11 // pred_region
        _
      $region52: #{_lambda_.1} parent=11 // pred_fallthru
        _
      // Predicated region
      $region53: #{_lambda_.1} parent=11 // pred_check
        %p458 = pneg %p282
      $region54: #{_lambda_.1} parent=11 // pred_check_branch
        %460 = sbr.rel (%p458) target = $region56
      $region55: #{_lambda_.1} parent=11 // pred_region
        _
      $region56: #{_lambda_.1} parent=11 // pred_fallthru
        _
      // Predicated region
      $region57: #{_lambda_.1} parent=11 // pred_check
        %p461 = pneg %p303
      $region58: #{_lambda_.1} parent=11 // pred_check_branch
        %463 = sbr.rel (%p461) target = $region60
      $region59: #{_lambda_.1} parent=11 // pred_region
        _
      $region60: #{_lambda_.1} parent=11 // pred_fallthru
        _
      // Predicated region
      $region61: #{_lambda_.1} parent=11 // pred_check
        %p464 = pneg %p324
      $region62: #{_lambda_.1} parent=11 // pred_check_branch
        %466 = sbr.rel (%p464) target = $region64
      $region63: #{_lambda_.1} parent=11 // pred_region
        _
      $region64: #{_lambda_.1} parent=11 // pred_fallthru
        _
      // Predicated region
      $region65: #{_lambda_.1} parent=11 // pred_check
        %p467 = pneg %p345
      $region66: #{_lambda_.1} parent=11 // pred_check_branch
        %469 = sbr.rel (%p467) target = $region68
      $region67: #{_lambda_.1} parent=11 // pred_region
        _
      $region68: #{_lambda_.1} parent=11 // pred_fallthru
        _
      // Predicated region
      $region69: #{_lambda_.1} parent=11 // pred_check
        %p470 = pneg %p366
      $region70: #{_lambda_.1} parent=11 // pred_check_branch
        %472 = sbr.rel (%p470) target = $region72
      $region71: #{_lambda_.1} parent=11 // pred_region
        _
      $region72: #{_lambda_.1} parent=11 // pred_fallthru
        _
      // Predicated region
      $region73: #{_lambda_.1} parent=11 // pred_check
        %p473 = pneg %p387
      $region74: #{_lambda_.1} parent=11 // pred_check_branch
        %475 = sbr.rel (%p473) target = $region76
      $region75: #{_lambda_.1} parent=11 // pred_region
        _
      $region76: #{_lambda_.1} parent=11 // pred_fallthru
        _
    $region12: #{_lambda_.1} parent=5 // pred_fallthru
      _
    %p476 = scmp.lt.s32.totalorder %s25, 2
    // Predicated region
    $region77: #{_lambda_.1} parent=5 // pred_check
      %p477 = pneg %p476
    $region78: #{_lambda_.1} parent=5 // pred_check_branch
      %479 = sbr.rel (%p477) target = $region80
    $region79: #{_lambda_.1} parent=5 // pred_region
      // Predicated region
      $region81: #{_lambda_.1} parent=79 // pred_check
        %p480 = pneg %p45
      $region82: #{_lambda_.1} parent=79 // pred_check_branch
        %482 = sbr.rel (%p480) target = $region84
      $region83: #{_lambda_.1} parent=79 // pred_region
        %p483 = scmp.lt.s32.totalorder %s25, 1
        %s484 = scalar_select %p483, %s25, 1
        %s485 = smul.addr %s484, 64
        %s486 = smul.addr %s485, 4
        %s487 = scalar_lea.vmem %s0, %s486
      $region84: #{_lambda_.1} parent=79 // pred_fallthru
        _
    $region80: #{_lambda_.1} parent=5 // pred_fallthru
      _
    %p488 = scmp.le.s32.totalorder 1, %s25
    %p489 = scmp.lt.s32.totalorder %s25, 3
    %p490 = pnand %p488, %p489
    %p491 = pneg %p490
    // Predicated region
    $region85: #{_lambda_.1} parent=5 // pred_check
      _
    $region86: #{_lambda_.1} parent=5 // pred_check_branch
      %493 = sbr.rel (%p490) target = $region88
    $region87: #{_lambda_.1} parent=5 // pred_region
      %s494 = ssub.s32 %s25, 1
      %p495 = scmp.lt.s32.totalorder %s30, 1
      %s496 = scalar_select %p495, %s30, 1
      %s497 = smul.addr %s496, 64
      %s498 = smul.addr %s497, 4
      %s499 = scalar_lea.vmem %s0, %s498
      %p500 = pneg %p51
      %p501 = pneg %p48
      %p502 = pneg %p72
      %p503 = pneg %p69
      %p504 = pneg %p93
      %p505 = pneg %p90
      %p506 = pneg %p114
      %p507 = pneg %p111
      %p508 = pneg %p135
      %p509 = pneg %p132
      %p510 = pneg %p156
      %p511 = pneg %p153
      %p512 = pneg %p177
      %p513 = pneg %p174
      %p514 = pneg %p198
      %p515 = pneg %p195
      %p516 = pneg %p219
      %p517 = pneg %p216
      %p518 = pneg %p240
      %p519 = pneg %p237
      %p520 = pneg %p261
      %p521 = pneg %p258
      %p522 = pneg %p282
      %p523 = pneg %p279
      %p524 = pneg %p303
      %p525 = pneg %p300
      %p526 = pneg %p324
      %p527 = pneg %p321
      %p528 = pneg %p345
      %p529 = pneg %p342
      %p530 = pneg %p366
      %p531 = pneg %p363
      %p532 = pneg %p387
      %p533 = pneg %p384
      %p534 = pneg %p413
      %p535 = pneg %p410
      %p536 = scmp.lt.s32.totalorder %s30, 1
      %s537 = scalar_select %p536, %s30, 1
      %s538 = scalar_lea.vmem %s17, %s537
      %p539 = scmp.lt.s32.totalorder %s30, 1
      %s540 = scalar_select %p539, %s30, 1
      %s541 = smul.addr %s540, 64
      %s542 = smul.addr %s541, 4
      %s543 = scalar_lea.vmem %s0, %s542
      %p544 = scmp.lt.s32.totalorder %s30, 1
      %s545 = scalar_select %p544, %s30, 1
      %s546 = scalar_lea.vmem %s17, %s545
      %v548 = vld [vmem:[%s543] sm:$0xff]
      %v549 = vld [vmem:[%s543 + $0x8] sm:$0xff]
      %v550 = vld [vmem:[%s543 + $0x10] sm:$0xff]
      %v551 = vld [vmem:[%s543 + $0x18] sm:$0xff]
      %v552 = vld [vmem:[%s543 + $0x20] sm:$0xff]
      %v553 = vld [vmem:[%s543 + $0x28] sm:$0xff]
      %v554 = vld [vmem:[%s543 + $0x30] sm:$0xff]
      %v555 = vld [vmem:[%s543 + $0x38] sm:$0xff]
      %v556 = vld [vmem:[%s543 + $0x40] sm:$0xff]
      %v557 = vld [vmem:[%s543 + $0x48] sm:$0xff]
      %v558 = vld [vmem:[%s543 + $0x50] sm:$0xff]
      %v559 = vld [vmem:[%s543 + $0x58] sm:$0xff]
      %v560 = vld [vmem:[%s543 + $0x60] sm:$0xff]
      %v561 = vld [vmem:[%s543 + $0x68] sm:$0xff]
      %v562 = vld [vmem:[%s543 + $0x70] sm:$0xff]
      %v563 = vld [vmem:[%s543 + $0x78] sm:$0xff]
      %v564 = vld [vmem:[%s543 + $0x80] sm:$0xff]
      %v565 = vld [vmem:[%s543 + $0x88] sm:$0xff]
      %v566 = vld [vmem:[%s543 + $0x90] sm:$0xff]
      %v567 = vld [vmem:[%s543 + $0x98] sm:$0xff]
      %v568 = vld [vmem:[%s543 + $0xa0] sm:$0xff]
      %v569 = vld [vmem:[%s543 + $0xa8] sm:$0xff]
      %v570 = vld [vmem:[%s543 + $0xb0] sm:$0xff]
      %v571 = vld [vmem:[%s543 + $0xb8] sm:$0xff]
      %v572 = vld [vmem:[%s543 + $0xc0] sm:$0xff]
      %v573 = vld [vmem:[%s543 + $0xc8] sm:$0xff]
      %v574 = vld [vmem:[%s543 + $0xd0] sm:$0xff]
      %v575 = vld [vmem:[%s543 + $0xd8] sm:$0xff]
      %v576 = vld [vmem:[%s543 + $0xe0] sm:$0xff]
      %v577 = vld [vmem:[%s543 + $0xe8] sm:$0xff]
      %v578 = vld [vmem:[%s543 + $0xf0] sm:$0xff]
      %v579 = vld [vmem:[%s543 + $0xf8] sm:$0xff]
      %v580 = vld [vmem:[%s1] sm:$0xf]
      %v581 = vld [vmem:[%s1 + $0x4] sm:$0xf]
      %v582 = vld [vmem:[%s1 + $0x8] sm:$0xf]
      %v583 = vld [vmem:[%s1 + $0xc] sm:$0xf]
      %v584 = vld [vmem:[%s1 + $0x10] sm:$0xf]
      %v585 = vld [vmem:[%s1 + $0x14] sm:$0xf]
      %v586 = vld [vmem:[%s1 + $0x18] sm:$0xf]
      %v587 = vld [vmem:[%s1 + $0x1c] sm:$0xf]
      %v588 = vld [vmem:[%s1 + $0x20] sm:$0xf]
      %v589 = vld [vmem:[%s1 + $0x24] sm:$0xf]
      %v590 = vld [vmem:[%s1 + $0x28] sm:$0xf]
      %v591 = vld [vmem:[%s1 + $0x2c] sm:$0xf]
      %v592 = vld [vmem:[%s1 + $0x30] sm:$0xf]
      %v593 = vld [vmem:[%s1 + $0x34] sm:$0xf]
      %v594 = vld [vmem:[%s1 + $0x38] sm:$0xf]
      %v595 = vld [vmem:[%s1 + $0x3c] sm:$0xf]
      %v596 = vld [vmem:[%s1 + $0x40] sm:$0xf]
      %v597 = vld [vmem:[%s1 + $0x44] sm:$0xf]
      %v598 = vld [vmem:[%s1 + $0x48] sm:$0xf]
      %v599 = vld [vmem:[%s1 + $0x4c] sm:$0xf]
      %v600 = vld [vmem:[%s1 + $0x50] sm:$0xf]
      %v601 = vld [vmem:[%s1 + $0x54] sm:$0xf]
      %v602 = vld [vmem:[%s1 + $0x58] sm:$0xf]
      %v603 = vld [vmem:[%s1 + $0x5c] sm:$0xf]
      %v604 = vld [vmem:[%s1 + $0x60] sm:$0xf]
      %v605 = vld [vmem:[%s1 + $0x64] sm:$0xf]
      %v606 = vld [vmem:[%s1 + $0x68] sm:$0xf]
      %v607 = vld [vmem:[%s1 + $0x6c] sm:$0xf]
      %v608 = vld [vmem:[%s1 + $0x70] sm:$0xf]
      %v609 = vld [vmem:[%s1 + $0x74] sm:$0xf]
      %v610 = vld [vmem:[%s1 + $0x78] sm:$0xf]
      %v611 = vld [vmem:[%s1 + $0x7c] sm:$0xf]
      %v612 = vld [vmem:[%s1 + $0x80] sm:$0xf]
      %v613 = vld [vmem:[%s1 + $0x84] sm:$0xf]
      %v614 = vld [vmem:[%s1 + $0x88] sm:$0xf]
      %v615 = vld [vmem:[%s1 + $0x8c] sm:$0xf]
      %v616 = vld [vmem:[%s1 + $0x90] sm:$0xf]
      %v617 = vld [vmem:[%s1 + $0x94] sm:$0xf]
      %v618 = vld [vmem:[%s1 + $0x98] sm:$0xf]
      %v619 = vld [vmem:[%s1 + $0x9c] sm:$0xf]
      %v620 = vld [vmem:[%s1 + $0xa0] sm:$0xf]
      %v621 = vld [vmem:[%s1 + $0xa4] sm:$0xf]
      %v622 = vld [vmem:[%s1 + $0xa8] sm:$0xf]
      %v623 = vld [vmem:[%s1 + $0xac] sm:$0xf]
      %v624 = vld [vmem:[%s1 + $0xb0] sm:$0xf]
      %v625 = vld [vmem:[%s1 + $0xb4] sm:$0xf]
      %v626 = vld [vmem:[%s1 + $0xb8] sm:$0xf]
      %v627 = vld [vmem:[%s1 + $0xbc] sm:$0xf]
      %v628 = vld [vmem:[%s1 + $0xc0] sm:$0xf]
      %v629 = vld [vmem:[%s1 + $0xc4] sm:$0xf]
      %v630 = vld [vmem:[%s1 + $0xc8] sm:$0xf]
      %v663 = vunpack.c.l.b16 %v548
      %v664 = vunpack.c.h.b16 %v548
      %v665 = vunpack.c.l.b16 %v549
      %v666 = vunpack.c.h.b16 %v549
      %v667 = vunpack.c.l.b16 %v550
      %v668 = vunpack.c.h.b16 %v550
      %v669 = vunpack.c.l.b16 %v551
      %v670 = vunpack.c.h.b16 %v551
      %v671 = vunpack.c.l.b16 %v552
      %v672 = vunpack.c.h.b16 %v552
      %v673 = vunpack.c.l.b16 %v553
      %v674 = vunpack.c.h.b16 %v553
      %v675 = vunpack.c.l.b16 %v554
      %v676 = vunpack.c.h.b16 %v554
      %v677 = vunpack.c.l.b16 %v555
      %v678 = vunpack.c.h.b16 %v555
      %v679 = vunpack.c.l.b16 %v556
      %v680 = vunpack.c.h.b16 %v556
      %v681 = vunpack.c.l.b16 %v557
      %v682 = vunpack.c.h.b16 %v557
      %v683 = vunpack.c.l.b16 %v558
      %v684 = vunpack.c.h.b16 %v558
      %v685 = vunpack.c.l.b16 %v559
      %v686 = vunpack.c.h.b16 %v559
      %v687 = vunpack.c.l.b16 %v560
      %v688 = vunpack.c.h.b16 %v560
      %v689 = vunpack.c.l.b16 %v561
      %v690 = vunpack.c.h.b16 %v561
      %v691 = vunpack.c.l.b16 %v562
      %v692 = vunpack.c.h.b16 %v562
      %v693 = vunpack.c.l.b16 %v563
      %v694 = vunpack.c.h.b16 %v563
      %v695 = vunpack.c.l.b16 %v564
      %v696 = vunpack.c.h.b16 %v564
      %v697 = vunpack.c.l.b16 %v565
      %v698 = vunpack.c.h.b16 %v565
      %v699 = vunpack.c.l.b16 %v566
      %v700 = vunpack.c.h.b16 %v566
      %v701 = vunpack.c.l.b16 %v567
      %v702 = vunpack.c.h.b16 %v567
      %v703 = vunpack.c.l.b16 %v568
      %v704 = vunpack.c.h.b16 %v568
      %v705 = vunpack.c.l.b16 %v569
      %v706 = vunpack.c.h.b16 %v569
      %v707 = vunpack.c.l.b16 %v570
      %v708 = vunpack.c.h.b16 %v570
      %v709 = vunpack.c.l.b16 %v571
      %v710 = vunpack.c.h.b16 %v571
      %v711 = vunpack.c.l.b16 %v572
      %v712 = vunpack.c.h.b16 %v572
      %v713 = vunpack.c.l.b16 %v573
      %v714 = vunpack.c.h.b16 %v573
      %v715 = vunpack.c.l.b16 %v574
      %v716 = vunpack.c.h.b16 %v574
      %v717 = vunpack.c.l.b16 %v575
      %v718 = vunpack.c.h.b16 %v575
      %v719 = vunpack.c.l.b16 %v576
      %v720 = vunpack.c.h.b16 %v576
      %v721 = vunpack.c.l.b16 %v577
      %v722 = vunpack.c.h.b16 %v577
      %v723 = vunpack.c.l.b16 %v578
      %v724 = vunpack.c.h.b16 %v578
      %v725 = vunpack.c.l.b16 %v579
      %v726 = vunpack.c.h.b16 %v579
      %v727 = vpack.c.b16 %v667, %v663
      %v728 = vpack.c.b16 %v668, %v664
      %v729 = vpack.c.b16 %v669, %v665
      %v730 = vpack.c.b16 %v670, %v666
      %v731 = vpack.c.b16 %v675, %v671
      %v732 = vpack.c.b16 %v676, %v672
      %v733 = vpack.c.b16 %v677, %v673
      %v734 = vpack.c.b16 %v678, %v674
      %v735 = vpack.c.b16 %v683, %v679
      %v736 = vpack.c.b16 %v684, %v680
      %v737 = vpack.c.b16 %v685, %v681
      %v738 = vpack.c.b16 %v686, %v682
      %v739 = vpack.c.b16 %v691, %v687
      %v740 = vpack.c.b16 %v692, %v688
      %v741 = vpack.c.b16 %v693, %v689
      %v742 = vpack.c.b16 %v694, %v690
      %v743 = vpack.c.b16 %v699, %v695
      %v744 = vpack.c.b16 %v700, %v696
      %v745 = vpack.c.b16 %v701, %v697
      %v746 = vpack.c.b16 %v702, %v698
      %v747 = vpack.c.b16 %v707, %v703
      %v748 = vpack.c.b16 %v708, %v704
      %v749 = vpack.c.b16 %v709, %v705
      %v750 = vpack.c.b16 %v710, %v706
      %v751 = vpack.c.b16 %v715, %v711
      %v752 = vpack.c.b16 %v716, %v712
      %v753 = vpack.c.b16 %v717, %v713
      %v754 = vpack.c.b16 %v718, %v714
      %v755 = vpack.c.b16 %v723, %v719
      %v756 = vpack.c.b16 %v724, %v720
      %v757 = vpack.c.b16 %v725, %v721
      %v758 = vpack.c.b16 %v726, %v722
      %v834 = vunpack.c.l.b16 %v580
      %v835 = vunpack.c.l.b16 %v581
      %v836 = vunpack.c.l.b16 %v582
      %v837 = vunpack.c.l.b16 %v583
      %v838 = vunpack.c.l.b16 %v584
      %v839 = vunpack.c.l.b16 %v585
      %v840 = vunpack.c.l.b16 %v586
      %v841 = vunpack.c.l.b16 %v587
      %v842 = vunpack.c.l.b16 %v588
      %v843 = vunpack.c.l.b16 %v589
      %v844 = vunpack.c.l.b16 %v590
      %v845 = vunpack.c.l.b16 %v591
      %v846 = vunpack.c.l.b16 %v592
      %v847 = vunpack.c.l.b16 %v593
      %v848 = vunpack.c.l.b16 %v594
      %v849 = vunpack.c.l.b16 %v595
      %v850 = vunpack.c.l.b16 %v596
      %v851 = vunpack.c.l.b16 %v597
      %v852 = vunpack.c.l.b16 %v598
      %v853 = vunpack.c.l.b16 %v599
      %v854 = vunpack.c.l.b16 %v600
      %v855 = vunpack.c.l.b16 %v601
      %v856 = vunpack.c.l.b16 %v602
      %v857 = vunpack.c.l.b16 %v603
      %v858 = vunpack.c.l.b16 %v604
      %v859 = vunpack.c.l.b16 %v605
      %v860 = vunpack.c.l.b16 %v606
      %v861 = vunpack.c.l.b16 %v607
      %v862 = vunpack.c.l.b16 %v608
      %v863 = vunpack.c.l.b16 %v609
      %v864 = vunpack.c.l.b16 %v610
      %v865 = vunpack.c.l.b16 %v611
      %v866 = vunpack.c.l.b16 %v612
      %v867 = vunpack.c.l.b16 %v613
      %v868 = vunpack.c.l.b16 %v614
      %v869 = vunpack.c.l.b16 %v615
      %v870 = vunpack.c.l.b16 %v616
      %v871 = vunpack.c.l.b16 %v617
      %v872 = vunpack.c.l.b16 %v618
      %v873 = vunpack.c.l.b16 %v619
      %v874 = vunpack.c.l.b16 %v620
      %v875 = vunpack.c.l.b16 %v621
      %v876 = vunpack.c.l.b16 %v622
      %v877 = vunpack.c.l.b16 %v623
      %v878 = vunpack.c.l.b16 %v624
      %v879 = vunpack.c.l.b16 %v625
      %v880 = vunpack.c.l.b16 %v626
      %v881 = vunpack.c.l.b16 %v627
      %v882 = vunpack.c.l.b16 %v628
      %v883 = vunpack.c.l.b16 %v629
      %v884 = vunpack.c.l.b16 %v630
      %v885 = vpack.c.b16 %v835, %v834
      %v886 = vpack.c.b16 %v837, %v836
      %v887 = vpack.c.b16 %v839, %v838
      %v888 = vpack.c.b16 %v841, %v840
      %v889 = vpack.c.b16 %v843, %v842
      %v890 = vpack.c.b16 %v845, %v844
      %v891 = vpack.c.b16 %v847, %v846
      %v892 = vpack.c.b16 %v849, %v848
      %v893 = vpack.c.b16 %v851, %v850
      %v894 = vpack.c.b16 %v853, %v852
      %v895 = vpack.c.b16 %v855, %v854
      %v896 = vpack.c.b16 %v857, %v856
      %v897 = vpack.c.b16 %v859, %v858
      %v898 = vpack.c.b16 %v861, %v860
      %v899 = vpack.c.b16 %v863, %v862
      %v900 = vpack.c.b16 %v865, %v864
      %v901 = vpack.c.b16 %v867, %v866
      %v902 = vpack.c.b16 %v869, %v868
      %v903 = vpack.c.b16 %v871, %v870
      %v904 = vpack.c.b16 %v873, %v872
      %v905 = vpack.c.b16 %v875, %v874
      %v906 = vpack.c.b16 %v877, %v876
      %v907 = vpack.c.b16 %v879, %v878
      %v908 = vpack.c.b16 %v881, %v880
      %v909 = vpack.c.b16 %v883, %v882
      %v910 = vpack.c.b16 %v884, %v884
      %vm936 = vcmask 195584
      %v938 = vsel %vm936, %v730, 0
      %v941 = vsel %vm936, %v734, 0
      %v944 = vsel %vm936, %v738, 0
      %v947 = vsel %vm936, %v742, 0
      %v950 = vsel %vm936, %v746, 0
      %v953 = vsel %vm936, %v750, 0
      %v956 = vsel %vm936, %v754, 0
      %v959 = vsel %vm936, %v758, 0
      %vm961 = vcmask 1043456
      %v963 = vsel %vm961, %v910, 0
      %965 = vmatprep.subr.bf16.mxu0 0
      %966 = vmatpush1.bf16.msra.mxu0 %v885
      %967 = vmatprep.subr.bf16.mxu0 0
      %968 = vmatpush1.bf16.msra.mxu0 %v886
      %969 = vmatprep.subr.bf16.mxu0 0
      %970 = vmatpush1.bf16.msra.mxu0 %v887
      %971 = vmatprep.subr.bf16.mxu0 0
      %972 = vmatpush1.bf16.msra.mxu0 %v888
      %973 = vmatprep.subr.bf16.mxu0 0
      %974 = vmatpush1.bf16.msra.mxu0 %v889
      %975 = vmatprep.subr.bf16.mxu0 0
      %976 = vmatpush1.bf16.msra.mxu0 %v890
      %977 = vmatprep.subr.bf16.mxu0 0
      %978 = vmatpush1.bf16.msra.mxu0 %v891
      %979 = vmatprep.subr.bf16.mxu0 0
      %980 = vmatpush1.bf16.msra.mxu0 %v892
      %981 = vmatprep.subr.bf16.mxu0 0
      %982 = vmatpush1.bf16.msra.mxu0 %v893
      %983 = vmatprep.subr.bf16.mxu0 0
      %984 = vmatpush1.bf16.msra.mxu0 %v894
      %985 = vmatprep.subr.bf16.mxu0 0
      %986 = vmatpush1.bf16.msra.mxu0 %v895
      %987 = vmatprep.subr.bf16.mxu0 0
      %988 = vmatpush1.bf16.msra.mxu0 %v896
      %989 = vmatprep.subr.bf16.mxu0 0
      %990 = vmatpush1.bf16.msra.mxu0 %v897
      %991 = vmatprep.subr.bf16.mxu0 0
      %992 = vmatpush1.bf16.msra.mxu0 %v898
      %993 = vmatprep.subr.bf16.mxu0 0
      %994 = vmatpush1.bf16.msra.mxu0 %v899
      %995 = vmatprep.subr.bf16.mxu0 0
      %996 = vmatpush1.bf16.msra.mxu0 %v900
      %997 = vmatprep.mubr.bf16.mxu0 %v728
      %998 = vmatmul.mubr.bf16.gmra.mrb[0].mxu0 %v727
      %v999 = vpop.f32.mrb[0].mxu0
      %v1000 = vadd.f32 0.0, %v999
      %v1001 = vpop.f32.mrb[0].mxu0
      %v1002 = vpop.f32.mrb[0].mxu0
      %v1003 = vadd.f32 0.0, %v1002
      %v1004 = vpop.f32.mrb[0].mxu0
      %1005 = vmatprep.mubr.bf16.mxu0 %v732
      %1006 = vmatmul.mubr.bf16.gmra.mrb[0].mxu0 %v731
      %v1007 = vpop.f32.mrb[0].mxu0
      %v1008 = vadd.f32 0.0, %v1007
      %v1009 = vpop.f32.mrb[0].mxu0
      %v1010 = vpop.f32.mrb[0].mxu0
      %v1011 = vadd.f32 0.0, %v1010
      %v1012 = vpop.f32.mrb[0].mxu0
      %1013 = vmatprep.mubr.bf16.mxu0 %v736
      %1014 = vmatmul.mubr.bf16.gmra.mrb[0].mxu0 %v735
      %v1015 = vpop.f32.mrb[0].mxu0
      %v1016 = vadd.f32 0.0, %v1015
      %v1017 = vpop.f32.mrb[0].mxu0
      %v1018 = vpop.f32.mrb[0].mxu0
      %v1019 = vadd.f32 0.0, %v1018
      %v1020 = vpop.f32.mrb[0].mxu0
      %1021 = vmatprep.mubr.bf16.mxu0 %v740
      %1022 = vmatmul.mubr.bf16.gmra.mrb[0].mxu0 %v739
      %v1023 = vpop.f32.mrb[0].mxu0
      %v1024 = vadd.f32 0.0, %v1023
      %v1025 = vpop.f32.mrb[0].mxu0
      %v1026 = vpop.f32.mrb[0].mxu0
      %v1027 = vadd.f32 0.0, %v1026
      %v1028 = vpop.f32.mrb[0].mxu0
      %1029 = vmatprep.mubr.bf16.mxu0 %v744
      %1030 = vmatmul.mubr.bf16.gmra.mrb[0].mxu0 %v743
      %v1031 = vpop.f32.mrb[0].mxu0
      %v1032 = vadd.f32 0.0, %v1031
      %v1033 = vpop.f32.mrb[0].mxu0
      %v1034 = vpop.f32.mrb[0].mxu0
      %v1035 = vadd.f32 0.0, %v1034
      %v1036 = vpop.f32.mrb[0].mxu0
      %1037 = vmatprep.mubr.bf16.mxu0 %v748
      %1038 = vmatmul.mubr.bf16.gmra.mrb[0].mxu0 %v747
      %v1039 = vpop.f32.mrb[0].mxu0
      %v1040 = vadd.f32 0.0, %v1039
      %v1041 = vpop.f32.mrb[0].mxu0
      %v1042 = vpop.f32.mrb[0].mxu0
      %v1043 = vadd.f32 0.0, %v1042
      %v1044 = vpop.f32.mrb[0].mxu0
      %1045 = vmatprep.mubr.bf16.mxu0 %v752
      %1046 = vmatmul.mubr.bf16.gmra.mrb[0].mxu0 %v751
      %v1047 = vpop.f32.mrb[0].mxu0
      %v1048 = vadd.f32 0.0, %v1047
      %v1049 = vpop.f32.mrb[0].mxu0
      %v1050 = vpop.f32.mrb[0].mxu0
      %v1051 = vadd.f32 0.0, %v1050
      %v1052 = vpop.f32.mrb[0].mxu0
      %1053 = vmatprep.mubr.bf16.mxu0 %v756
      %1054 = vmatmul.mubr.bf16.gmra.mrb[0].mxu0 %v755
      %v1055 = vpop.f32.mrb[0].mxu0
      %v1056 = vadd.f32 0.0, %v1055
      %v1057 = vpop.f32.mrb[0].mxu0
      %v1058 = vpop.f32.mrb[0].mxu0
      %v1059 = vadd.f32 0.0, %v1058
      %v1060 = vpop.f32.mrb[0].mxu0
      %1061 = vdwg.mxu0
      %1062 = vmatprep.subr.bf16.mxu0 0
      %1063 = vmatpush1.bf16.msra.mxu0 %v901
      %1064 = vmatprep.subr.bf16.mxu0 0
      %1065 = vmatpush1.bf16.msra.mxu0 %v902
      %1066 = vmatprep.subr.bf16.mxu0 0
      %1067 = vmatpush1.bf16.msra.mxu0 %v903
      %1068 = vmatprep.subr.bf16.mxu0 0
      %1069 = vmatpush1.bf16.msra.mxu0 %v904
      %1070 = vmatprep.subr.bf16.mxu0 0
      %1071 = vmatpush1.bf16.msra.mxu0 %v905
      %1072 = vmatprep.subr.bf16.mxu0 0
      %1073 = vmatpush1.bf16.msra.mxu0 %v906
      %1074 = vmatprep.subr.bf16.mxu0 0
      %1075 = vmatpush1.bf16.msra.mxu0 %v907
      %1076 = vmatprep.subr.bf16.mxu0 0
      %1077 = vmatpush1.bf16.msra.mxu0 %v908
      %1078 = vmatprep.subr.bf16.mxu0 0
      %1079 = vmatpush1.bf16.msra.mxu0 %v909
      %1080 = vmatprep.subr.bf16.mxu0 0
      %1081 = vmatpush1.bf16.msra.mxu0 %v963
      %1082 = vmatprep.subr.bf16.mxu0 0
      %1083 = vmatpush1.bf16.msra.mxu0 0
      %1084 = vmatprep.subr.bf16.mxu0 0
      %1085 = vmatpush1.bf16.msra.mxu0 0
      %1086 = vmatprep.subr.bf16.mxu0 0
      %1087 = vmatpush1.bf16.msra.mxu0 0
      %1088 = vmatprep.subr.bf16.mxu0 0
      %1089 = vmatpush1.bf16.msra.mxu0 0
      %1090 = vmatprep.subr.bf16.mxu0 0
      %1091 = vmatpush1.bf16.msra.mxu0 0
      %1092 = vmatprep.subr.bf16.mxu0 0
      %1093 = vmatpush1.bf16.msra.mxu0 0
      %1094 = vmatprep.mubr.bf16.mxu0 %v938
      %1095 = vmatmul.mubr.bf16.gmra.mrb[0].mxu0 %v729
      %v1096 = vpop.f32.mrb[0].mxu0
      %v1097 = vadd.f32 %v1000, %v1096
      %v1098 = vpop.f32.mrb[0].mxu0
      %v1099 = vpop.f32.mrb[0].mxu0
      %v1100 = vadd.f32 %v1003, %v1099
      %v1101 = vpop.f32.mrb[0].mxu0
      %1102 = vmatprep.mubr.bf16.mxu0 %v941
      %1103 = vmatmul.mubr.bf16.gmra.mrb[0].mxu0 %v733
      %v1104 = vpop.f32.mrb[0].mxu0
      %v1105 = vadd.f32 %v1008, %v1104
      %v1106 = vpop.f32.mrb[0].mxu0
      %v1107 = vpop.f32.mrb[0].mxu0
      %v1108 = vadd.f32 %v1011, %v1107
      %v1109 = vpop.f32.mrb[0].mxu0
      %1110 = vmatprep.mubr.bf16.mxu0 %v944
      %1111 = vmatmul.mubr.bf16.gmra.mrb[0].mxu0 %v737
      %v1112 = vpop.f32.mrb[0].mxu0
      %v1113 = vadd.f32 %v1016, %v1112
      %v1114 = vpop.f32.mrb[0].mxu0
      %v1115 = vpop.f32.mrb[0].mxu0
      %v1116 = vadd.f32 %v1019, %v1115
      %v1117 = vpop.f32.mrb[0].mxu0
      %1118 = vmatprep.mubr.bf16.mxu0 %v947
      %1119 = vmatmul.mubr.bf16.gmra.mrb[0].mxu0 %v741
      %v1120 = vpop.f32.mrb[0].mxu0
      %v1121 = vadd.f32 %v1024, %v1120
      %v1122 = vpop.f32.mrb[0].mxu0
      %v1123 = vpop.f32.mrb[0].mxu0
      %v1124 = vadd.f32 %v1027, %v1123
      %v1125 = vpop.f32.mrb[0].mxu0
      %1126 = vmatprep.mubr.bf16.mxu0 %v950
      %1127 = vmatmul.mubr.bf16.gmra.mrb[0].mxu0 %v745
      %v1128 = vpop.f32.mrb[0].mxu0
      %v1129 = vadd.f32 %v1032, %v1128
      %v1130 = vpop.f32.mrb[0].mxu0
      %v1131 = vpop.f32.mrb[0].mxu0
      %v1132 = vadd.f32 %v1035, %v1131
      %v1133 = vpop.f32.mrb[0].mxu0
      %1134 = vmatprep.mubr.bf16.mxu0 %v953
      %1135 = vmatmul.mubr.bf16.gmra.mrb[0].mxu0 %v749
      %v1136 = vpop.f32.mrb[0].mxu0
      %v1137 = vadd.f32 %v1040, %v1136
      %v1138 = vpop.f32.mrb[0].mxu0
      %v1139 = vpop.f32.mrb[0].mxu0
      %v1140 = vadd.f32 %v1043, %v1139
      %v1141 = vpop.f32.mrb[0].mxu0
      %1142 = vmatprep.mubr.bf16.mxu0 %v956
      %1143 = vmatmul.mubr.bf16.gmra.mrb[0].mxu0 %v753
      %v1144 = vpop.f32.mrb[0].mxu0
      %v1145 = vadd.f32 %v1048, %v1144
      %v1146 = vpop.f32.mrb[0].mxu0
      %v1147 = vpop.f32.mrb[0].mxu0
      %v1148 = vadd.f32 %v1051, %v1147
      %v1149 = vpop.f32.mrb[0].mxu0
      %1150 = vmatprep.mubr.bf16.mxu0 %v959
      %1151 = vmatmul.mubr.bf16.gmra.mrb[0].mxu0 %v757
      %v1152 = vpop.f32.mrb[0].mxu0
      %v1153 = vadd.f32 %v1056, %v1152
      %v1154 = vpop.f32.mrb[0].mxu0
      %v1155 = vpop.f32.mrb[0].mxu0
      %v1156 = vadd.f32 %v1059, %v1155
      %v1157 = vpop.f32.mrb[0].mxu0
      %1158 = vdwg.mxu0
      %v1159 = vld [vmem:[%s2] sm:$0x1]
      %v1161 = vlaneseq
      %v1162 = vshrl.u32 %v1161, 7
      %v1163 = vsub.s32 0, %v1162
      %v1164 = vrot.slane %v1159, %v1163
      %v1166 = vmul.f32 %v1097, %v1164
      %v1167 = vmul.f32 %v1100, %v1164
      %v1168 = vmul.f32 %v1105, %v1164
      %v1169 = vmul.f32 %v1108, %v1164
      %v1170 = vmul.f32 %v1113, %v1164
      %v1171 = vmul.f32 %v1116, %v1164
      %v1172 = vmul.f32 %v1121, %v1164
      %v1173 = vmul.f32 %v1124, %v1164
      %v1174 = vmul.f32 %v1129, %v1164
      %v1175 = vmul.f32 %v1132, %v1164
      %v1176 = vmul.f32 %v1137, %v1164
      %v1177 = vmul.f32 %v1140, %v1164
      %v1178 = vmul.f32 %v1145, %v1164
      %v1179 = vmul.f32 %v1148, %v1164
      %v1180 = vmul.f32 %v1153, %v1164
      %v1181 = vmul.f32 %v1156, %v1164
      %v1182 = vld [vmem:[%s3] sm:$0x1]
      %v1184 = vlaneseq
      %v1185 = vshrl.u32 %v1184, 7
      %v1186 = vsub.s32 0, %v1185
      %v1187 = vrot.slane %v1182, %v1186
      %v1189 = vadd.f32 %v1166, %v1187
      %v1190 = vadd.f32 %v1167, %v1187
      %v1191 = vadd.f32 %v1168, %v1187
      %v1192 = vadd.f32 %v1169, %v1187
      %v1193 = vadd.f32 %v1170, %v1187
      %v1194 = vadd.f32 %v1171, %v1187
      %v1195 = vadd.f32 %v1172, %v1187
      %v1196 = vadd.f32 %v1173, %v1187
      %v1197 = vadd.f32 %v1174, %v1187
      %v1198 = vadd.f32 %v1175, %v1187
      %v1199 = vadd.f32 %v1176, %v1187
      %v1200 = vadd.f32 %v1177, %v1187
      %v1201 = vadd.f32 %v1178, %v1187
      %v1202 = vadd.f32 %v1179, %v1187
      %v1203 = vadd.f32 %v1180, %v1187
      %v1204 = vadd.f32 %v1181, %v1187
      %v1205 = vmax.f32 %v1189, 0.0
      %v1206 = vmax.f32 %v1190, 0.0
      %v1207 = vmax.f32 %v1191, 0.0
      %v1208 = vmax.f32 %v1192, 0.0
      %v1209 = vmax.f32 %v1193, 0.0
      %v1210 = vmax.f32 %v1194, 0.0
      %v1211 = vmax.f32 %v1195, 0.0
      %v1212 = vmax.f32 %v1196, 0.0
      %v1213 = vmax.f32 %v1197, 0.0
      %v1214 = vmax.f32 %v1198, 0.0
      %v1215 = vmax.f32 %v1199, 0.0
      %v1216 = vmax.f32 %v1200, 0.0
      %v1217 = vmax.f32 %v1201, 0.0
      %v1218 = vmax.f32 %v1202, 0.0
      %v1219 = vmax.f32 %v1203, 0.0
      %v1220 = vmax.f32 %v1204, 0.0
      %vm1221 = vcmask 261120
      %1222 = vst.msk [vmem:[#allocation2] sm:$0xff] %vm1221, 0.0
      %1223 = vst.msk [vmem:[#allocation2 + $0x88] sm:$0xff] %vm1221, 0.0
      %1224 = vst.msk [vmem:[#allocation2 + $0x8] sm:$0xff] %vm1221, %v1205
      %1225 = vst.msk [vmem:[#allocation2 + $0x10] sm:$0xff] %vm1221, %v1206
      %1226 = vst.msk [vmem:[#allocation2 + $0x18] sm:$0xff] %vm1221, %v1207
      %1227 = vst.msk [vmem:[#allocation2 + $0x20] sm:$0xff] %vm1221, %v1208
      %1228 = vst.msk [vmem:[#allocation2 + $0x28] sm:$0xff] %vm1221, %v1209
      %1229 = vst.msk [vmem:[#allocation2 + $0x30] sm:$0xff] %vm1221, %v1210
      %1230 = vst.msk [vmem:[#allocation2 + $0x38] sm:$0xff] %vm1221, %v1211
      %1231 = vst.msk [vmem:[#allocation2 + $0x40] sm:$0xff] %vm1221, %v1212
      %1232 = vst.msk [vmem:[#allocation2 + $0x48] sm:$0xff] %vm1221, %v1213
      %1233 = vst.msk [vmem:[#allocation2 + $0x50] sm:$0xff] %vm1221, %v1214
      %1234 = vst.msk [vmem:[#allocation2 + $0x58] sm:$0xff] %vm1221, %v1215
      %1235 = vst.msk [vmem:[#allocation2 + $0x60] sm:$0xff] %vm1221, %v1216
      %1236 = vst.msk [vmem:[#allocation2 + $0x68] sm:$0xff] %vm1221, %v1217
      %1237 = vst.msk [vmem:[#allocation2 + $0x70] sm:$0xff] %vm1221, %v1218
      %1238 = vst.msk [vmem:[#allocation2 + $0x78] sm:$0xff] %vm1221, %v1219
      %1239 = vst.msk [vmem:[#allocation2 + $0x80] sm:$0xff] %vm1221, %v1220
      %v1240 = vld [vmem:[#allocation2 + $0x7] sm:$0xff]
      %v1241 = vld [vmem:[#allocation2 + $0xf] sm:$0xff]
      %v1242 = vld [vmem:[#allocation2 + $0x17] sm:$0xff]
      %v1243 = vld [vmem:[#allocation2 + $0x1f] sm:$0xff]
      %v1244 = vld [vmem:[#allocation2 + $0x27] sm:$0xff]
      %v1245 = vld [vmem:[#allocation2 + $0x2f] sm:$0xff]
      %v1246 = vld [vmem:[#allocation2 + $0x37] sm:$0xff]
      %v1247 = vld [vmem:[#allocation2 + $0x3f] sm:$0xff]
      %v1248 = vld [vmem:[#allocation2 + $0x47] sm:$0xff]
      %v1249 = vld [vmem:[#allocation2 + $0x4f] sm:$0xff]
      %v1250 = vld [vmem:[#allocation2 + $0x57] sm:$0xff]
      %v1251 = vld [vmem:[#allocation2 + $0x5f] sm:$0xff]
      %v1252 = vld [vmem:[#allocation2 + $0x67] sm:$0xff]
      %v1253 = vld [vmem:[#allocation2 + $0x6f] sm:$0xff]
      %v1254 = vld [vmem:[#allocation2 + $0x77] sm:$0xff]
      %v1255 = vld [vmem:[#allocation2 + $0x7f] sm:$0xff]
      %v1256 = vld [vmem:[#allocation2 + $0x8] sm:$0xff]
      %v1257 = vld [vmem:[#allocation2 + $0x10] sm:$0xff]
      %v1258 = vld [vmem:[#allocation2 + $0x18] sm:$0xff]
      %v1259 = vld [vmem:[#allocation2 + $0x20] sm:$0xff]
      %v1260 = vld [vmem:[#allocation2 + $0x28] sm:$0xff]
      %v1261 = vld [vmem:[#allocation2 + $0x30] sm:$0xff]
      %v1262 = vld [vmem:[#allocation2 + $0x38] sm:$0xff]
      %v1263 = vld [vmem:[#allocation2 + $0x40] sm:$0xff]
      %v1264 = vld [vmem:[#allocation2 + $0x48] sm:$0xff]
      %v1265 = vld [vmem:[#allocation2 + $0x50] sm:$0xff]
      %v1266 = vld [vmem:[#allocation2 + $0x58] sm:$0xff]
      %v1267 = vld [vmem:[#allocation2 + $0x60] sm:$0xff]
      %v1268 = vld [vmem:[#allocation2 + $0x68] sm:$0xff]
      %v1269 = vld [vmem:[#allocation2 + $0x70] sm:$0xff]
      %v1270 = vld [vmem:[#allocation2 + $0x78] sm:$0xff]
      %v1271 = vld [vmem:[#allocation2 + $0x80] sm:$0xff]
      %v1272 = vld [vmem:[#allocation2 + $0x9] sm:$0xff]
      %v1273 = vld [vmem:[#allocation2 + $0x11] sm:$0xff]
      %v1274 = vld [vmem:[#allocation2 + $0x19] sm:$0xff]
      %v1275 = vld [vmem:[#allocation2 + $0x21] sm:$0xff]
      %v1276 = vld [vmem:[#allocation2 + $0x29] sm:$0xff]
      %v1277 = vld [vmem:[#allocation2 + $0x31] sm:$0xff]
      %v1278 = vld [vmem:[#allocation2 + $0x39] sm:$0xff]
      %v1279 = vld [vmem:[#allocation2 + $0x41] sm:$0xff]
      %v1280 = vld [vmem:[#allocation2 + $0x49] sm:$0xff]
      %v1281 = vld [vmem:[#allocation2 + $0x51] sm:$0xff]
      %v1282 = vld [vmem:[#allocation2 + $0x59] sm:$0xff]
      %v1283 = vld [vmem:[#allocation2 + $0x61] sm:$0xff]
      %v1284 = vld [vmem:[#allocation2 + $0x69] sm:$0xff]
      %v1285 = vld [vmem:[#allocation2 + $0x71] sm:$0xff]
      %v1286 = vld [vmem:[#allocation2 + $0x79] sm:$0xff]
      %v1287 = vld [vmem:[#allocation2 + $0x81] sm:$0xff]
      %1304 = vrot.lane.b32.xlu0 %v1256, 32
      %v1305 = vpop.permute.xlu0 %1304
      %1306 = vrot.lane.b32.xlu0 %v1257, 32
      %v1307 = vpop.permute.xlu0 %1306
      %1308 = vrot.lane.b32.xlu0 %v1258, 32
      %v1309 = vpop.permute.xlu0 %1308
      %1310 = vrot.lane.b32.xlu0 %v1259, 32
      %v1311 = vpop.permute.xlu0 %1310
      %1312 = vrot.lane.b32.xlu0 %v1260, 32
      %v1313 = vpop.permute.xlu0 %1312
      %1314 = vrot.lane.b32.xlu0 %v1261, 32
      %v1315 = vpop.permute.xlu0 %1314
      %1316 = vrot.lane.b32.xlu0 %v1262, 32
      %v1317 = vpop.permute.xlu0 %1316
      %1318 = vrot.lane.b32.xlu0 %v1263, 32
      %v1319 = vpop.permute.xlu0 %1318
      %1320 = vrot.lane.b32.xlu0 %v1264, 32
      %v1321 = vpop.permute.xlu0 %1320
      %1322 = vrot.lane.b32.xlu0 %v1265, 32
      %v1323 = vpop.permute.xlu0 %1322
      %1324 = vrot.lane.b32.xlu0 %v1266, 32
      %v1325 = vpop.permute.xlu0 %1324
      %1326 = vrot.lane.b32.xlu0 %v1267, 32
      %v1327 = vpop.permute.xlu0 %1326
      %1328 = vrot.lane.b32.xlu0 %v1268, 32
      %v1329 = vpop.permute.xlu0 %1328
      %1330 = vrot.lane.b32.xlu0 %v1269, 32
      %v1331 = vpop.permute.xlu0 %1330
      %1332 = vrot.lane.b32.xlu0 %v1270, 32
      %v1333 = vpop.permute.xlu0 %1332
      %1334 = vrot.lane.b32.xlu0 %v1271, 32
      %v1335 = vpop.permute.xlu0 %1334
      %1368 = vrot.lane.b32.xlu0 %v1272, 64
      %v1369 = vpop.permute.xlu0 %1368
      %1370 = vrot.lane.b32.xlu0 %v1273, 64
      %v1371 = vpop.permute.xlu0 %1370
      %1372 = vrot.lane.b32.xlu0 %v1274, 64
      %v1373 = vpop.permute.xlu0 %1372
      %1374 = vrot.lane.b32.xlu0 %v1275, 64
      %v1375 = vpop.permute.xlu0 %1374
      %1376 = vrot.lane.b32.xlu0 %v1276, 64
      %v1377 = vpop.permute.xlu0 %1376
      %1378 = vrot.lane.b32.xlu0 %v1277, 64
      %v1379 = vpop.permute.xlu0 %1378
      %1380 = vrot.lane.b32.xlu0 %v1278, 64
      %v1381 = vpop.permute.xlu0 %1380
      %1382 = vrot.lane.b32.xlu0 %v1279, 64
      %v1383 = vpop.permute.xlu0 %1382
      %1384 = vrot.lane.b32.xlu0 %v1280, 64
      %v1385 = vpop.permute.xlu0 %1384
      %1386 = vrot.lane.b32.xlu0 %v1281, 64
      %v1387 = vpop.permute.xlu0 %1386
      %1388 = vrot.lane.b32.xlu0 %v1282, 64
      %v1389 = vpop.permute.xlu0 %1388
      %1390 = vrot.lane.b32.xlu0 %v1283, 64
      %v1391 = vpop.permute.xlu0 %1390
      %1392 = vrot.lane.b32.xlu0 %v1284, 64
      %v1393 = vpop.permute.xlu0 %1392
      %1394 = vrot.lane.b32.xlu0 %v1285, 64
      %v1395 = vpop.permute.xlu0 %1394
      %1396 = vrot.lane.b32.xlu0 %v1286, 64
      %v1397 = vpop.permute.xlu0 %1396
      %1398 = vrot.lane.b32.xlu0 %v1287, 64
      %v1399 = vpop.permute.xlu0 %1398
      %v1416 = vsel %vm1221, %v1240, %v1305
      %v1417 = vsel %vm1221, %v1241, %v1307
      %v1418 = vsel %vm1221, %v1242, %v1309
      %v1419 = vsel %vm1221, %v1243, %v1311
      %v1420 = vsel %vm1221, %v1244, %v1313
      %v1421 = vsel %vm1221, %v1245, %v1315
      %v1422 = vsel %vm1221, %v1246, %v1317
      %v1423 = vsel %vm1221, %v1247, %v1319
      %v1424 = vsel %vm1221, %v1248, %v1321
      %v1425 = vsel %vm1221, %v1249, %v1323
      %v1426 = vsel %vm1221, %v1250, %v1325
      %v1427 = vsel %vm1221, %v1251, %v1327
      %v1428 = vsel %vm1221, %v1252, %v1329
      %v1429 = vsel %vm1221, %v1253, %v1331
      %v1430 = vsel %vm1221, %v1254, %v1333
      %v1431 = vsel %vm1221, %v1255, %v1335
      %vm1432 = vcmask 523264
      %v1433 = vsel %vm1432, %v1416, %v1369
      %v1434 = vsel %vm1432, %v1417, %v1371
      %v1435 = vsel %vm1432, %v1418, %v1373
      %v1436 = vsel %vm1432, %v1419, %v1375
      %v1437 = vsel %vm1432, %v1420, %v1377
      %v1438 = vsel %vm1432, %v1421, %v1379
      %v1439 = vsel %vm1432, %v1422, %v1381
      %v1440 = vsel %vm1432, %v1423, %v1383
      %v1441 = vsel %vm1432, %v1424, %v1385
      %v1442 = vsel %vm1432, %v1425, %v1387
      %v1443 = vsel %vm1432, %v1426, %v1389
      %v1444 = vsel %vm1432, %v1427, %v1391
      %v1445 = vsel %vm1432, %v1428, %v1393
      %v1446 = vsel %vm1432, %v1429, %v1395
      %v1447 = vsel %vm1432, %v1430, %v1397
      %v1448 = vsel %vm1432, %v1431, %v1399
      %v1449 = vpack.c.bf16 %v1434, %v1433
      %v1450 = vpack.c.bf16 %v1436, %v1435
      %v1451 = vpack.c.bf16 %v1438, %v1437
      %v1452 = vpack.c.bf16 %v1440, %v1439
      %v1453 = vpack.c.bf16 %v1442, %v1441
      %v1454 = vpack.c.bf16 %v1444, %v1443
      %v1455 = vpack.c.bf16 %v1446, %v1445
      %v1456 = vpack.c.bf16 %v1448, %v1447
      %v1457 = vld [vmem:[%s4] sm:$0xf]
      %v1458 = vld [vmem:[%s4 + $0x4] sm:$0xf]
      %v1459 = vld [vmem:[%s4 + $0x8] sm:$0xf]
      %v1460 = vld [vmem:[%s4 + $0xc] sm:$0xf]
      %v1461 = vld [vmem:[%s4 + $0x10] sm:$0xf]
      %v1462 = vld [vmem:[%s4 + $0x14] sm:$0xf]
      %v1463 = vld [vmem:[%s4 + $0x18] sm:$0xf]
      %v1464 = vld [vmem:[%s4 + $0x1c] sm:$0xf]
      %v1465 = vld [vmem:[%s4 + $0x20] sm:$0xf]
      %v1466 = vld [vmem:[%s4 + $0x24] sm:$0xf]
      %v1467 = vld [vmem:[%s4 + $0x28] sm:$0xf]
      %v1468 = vld [vmem:[%s4 + $0x2c] sm:$0xf]
      %v1481 = vunpack.c.l.b16 %v1457
      %v1482 = vunpack.c.l.b16 %v1458
      %v1483 = vunpack.c.l.b16 %v1459
      %v1484 = vunpack.c.l.b16 %v1460
      %v1485 = vunpack.c.l.b16 %v1461
      %v1486 = vunpack.c.l.b16 %v1462
      %v1487 = vunpack.c.l.b16 %v1463
      %v1488 = vunpack.c.l.b16 %v1464
      %v1489 = vunpack.c.l.b16 %v1465
      %v1490 = vunpack.c.l.b16 %v1466
      %v1491 = vunpack.c.l.b16 %v1467
      %v1492 = vunpack.c.l.b16 %v1468
      %v1493 = vpack.c.b16 %v1482, %v1481
      %v1494 = vpack.c.b16 %v1484, %v1483
      %v1495 = vpack.c.b16 %v1486, %v1485
      %v1496 = vpack.c.b16 %v1488, %v1487
      %v1497 = vpack.c.b16 %v1490, %v1489
      %v1498 = vpack.c.b16 %v1492, %v1491
      %vm1505 = vcmask 785408
      %v1507 = vsel %vm1505, %v1449, 0
      %v1510 = vsel %vm1505, %v1450, 0
      %v1513 = vsel %vm1505, %v1451, 0
      %v1516 = vsel %vm1505, %v1452, 0
      %v1519 = vsel %vm1505, %v1453, 0
      %v1522 = vsel %vm1505, %v1454, 0
      %v1525 = vsel %vm1505, %v1455, 0
      %v1528 = vsel %vm1505, %v1456, 0
      %1530 = vmatprep.subr.bf16.mxu0 0
      %1531 = vmatpush1.bf16.msra.mxu0 %v1493
      %1532 = vmatprep.subr.bf16.mxu0 0
      %1533 = vmatpush1.bf16.msra.mxu0 %v1494
      %1534 = vmatprep.subr.bf16.mxu0 0
      %1535 = vmatpush1.bf16.msra.mxu0 %v1495
      %1536 = vmatprep.subr.bf16.mxu0 0
      %1537 = vmatpush1.bf16.msra.mxu0 %v1496
      %1538 = vmatprep.subr.bf16.mxu0 0
      %1539 = vmatpush1.bf16.msra.mxu0 %v1497
      %1540 = vmatprep.subr.bf16.mxu0 0
      %1541 = vmatpush1.bf16.msra.mxu0 %v1498
      %1542 = vmatprep.subr.bf16.mxu0 0
      %1543 = vmatpush1.bf16.msra.mxu0 0
      %1544 = vmatprep.subr.bf16.mxu0 0
      %1545 = vmatpush1.bf16.msra.mxu0 0
      %1546 = vmatprep.subr.bf16.mxu0 0
      %1547 = vmatpush1.bf16.msra.mxu0 0
      %1548 = vmatprep.subr.bf16.mxu0 0
      %1549 = vmatpush1.bf16.msra.mxu0 0
      %1550 = vmatprep.subr.bf16.mxu0 0
      %1551 = vmatpush1.bf16.msra.mxu0 0
      %1552 = vmatprep.subr.bf16.mxu0 0
      %1553 = vmatpush1.bf16.msra.mxu0 0
      %1554 = vmatprep.subr.bf16.mxu0 0
      %1555 = vmatpush1.bf16.msra.mxu0 0
      %1556 = vmatprep.subr.bf16.mxu0 0
      %1557 = vmatpush1.bf16.msra.mxu0 0
      %1558 = vmatprep.subr.bf16.mxu0 0
      %1559 = vmatpush1.bf16.msra.mxu0 0
      %1560 = vmatprep.subr.bf16.mxu0 0
      %1561 = vmatpush1.bf16.msra.mxu0 0
      %1562 = vmatprep.mubr.bf16.mxu0 0
      %1563 = vmatmul.mubr.bf16.gmra.mrb[0].mxu0 %v1507
      %v1564 = vpop.f32.mrb[0].mxu0
      %v1565 = vadd.f32 0.0, %v1564
      %v1566 = vpop.f32.mrb[0].mxu0
      %v1567 = vpop.f32.mrb[0].mxu0
      %v1568 = vadd.f32 0.0, %v1567
      %v1569 = vpop.f32.mrb[0].mxu0
      %1570 = vmatprep.mubr.bf16.mxu0 0
      %1571 = vmatmul.mubr.bf16.gmra.mrb[0].mxu0 %v1510
      %v1572 = vpop.f32.mrb[0].mxu0
      %v1573 = vadd.f32 0.0, %v1572
      %v1574 = vpop.f32.mrb[0].mxu0
      %v1575 = vpop.f32.mrb[0].mxu0
      %v1576 = vadd.f32 0.0, %v1575
      %v1577 = vpop.f32.mrb[0].mxu0
      %1578 = vmatprep.mubr.bf16.mxu0 0
      %1579 = vmatmul.mubr.bf16.gmra.mrb[0].mxu0 %v1513
      %v1580 = vpop.f32.mrb[0].mxu0
      %v1581 = vadd.f32 0.0, %v1580
      %v1582 = vpop.f32.mrb[0].mxu0
      %v1583 = vpop.f32.mrb[0].mxu0
      %v1584 = vadd.f32 0.0, %v1583
      %v1585 = vpop.f32.mrb[0].mxu0
      %1586 = vmatprep.mubr.bf16.mxu0 0
      %1587 = vmatmul.mubr.bf16.gmra.mrb[0].mxu0 %v1516
      %v1588 = vpop.f32.mrb[0].mxu0
      %v1589 = vadd.f32 0.0, %v1588
      %v1590 = vpop.f32.mrb[0].mxu0
      %v1591 = vpop.f32.mrb[0].mxu0
      %v1592 = vadd.f32 0.0, %v1591
      %v1593 = vpop.f32.mrb[0].mxu0
      %1594 = vmatprep.mubr.bf16.mxu0 0
      %1595 = vmatmul.mubr.bf16.gmra.mrb[0].mxu0 %v1519
      %v1596 = vpop.f32.mrb[0].mxu0
      %v1597 = vadd.f32 0.0, %v1596
      %v1598 = vpop.f32.mrb[0].mxu0
      %v1599 = vpop.f32.mrb[0].mxu0
      %v1600 = vadd.f32 0.0, %v1599
      %v1601 = vpop.f32.mrb[0].mxu0
      %1602 = vmatprep.mubr.bf16.mxu0 0
      %1603 = vmatmul.mubr.bf16.gmra.mrb[0].mxu0 %v1522
      %v1604 = vpop.f32.mrb[0].mxu0
      %v1605 = vadd.f32 0.0, %v1604
      %v1606 = vpop.f32.mrb[0].mxu0
      %v1607 = vpop.f32.mrb[0].mxu0
      %v1608 = vadd.f32 0.0, %v1607
      %v1609 = vpop.f32.mrb[0].mxu0
      %1610 = vmatprep.mubr.bf16.mxu0 0
      %1611 = vmatmul.mubr.bf16.gmra.mrb[0].mxu0 %v1525
      %v1612 = vpop.f32.mrb[0].mxu0
      %v1613 = vadd.f32 0.0, %v1612
      %v1614 = vpop.f32.mrb[0].mxu0
      %v1615 = vpop.f32.mrb[0].mxu0
      %v1616 = vadd.f32 0.0, %v1615
      %v1617 = vpop.f32.mrb[0].mxu0
      %1618 = vmatprep.mubr.bf16.mxu0 0
      %1619 = vmatmul.mubr.bf16.gmra.mrb[0].mxu0 %v1528
      %v1620 = vpop.f32.mrb[0].mxu0
      %v1621 = vadd.f32 0.0, %v1620
      %v1622 = vpop.f32.mrb[0].mxu0
      %v1623 = vpop.f32.mrb[0].mxu0
      %v1624 = vadd.f32 0.0, %v1623
      %v1625 = vpop.f32.mrb[0].mxu0
      %1626 = vdwg.mxu0
      %v1627 = vld [vmem:[%s5] sm:$0x1]
      %v1629 = vlaneseq
      %v1630 = vshrl.u32 %v1629, 7
      %v1631 = vsub.s32 0, %v1630
      %v1632 = vrot.slane %v1627, %v1631
      %v1634 = vmul.f32 %v1565, %v1632
      %v1635 = vmul.f32 %v1568, %v1632
      %v1636 = vmul.f32 %v1573, %v1632
      %v1637 = vmul.f32 %v1576, %v1632
      %v1638 = vmul.f32 %v1581, %v1632
      %v1639 = vmul.f32 %v1584, %v1632
      %v1640 = vmul.f32 %v1589, %v1632
      %v1641 = vmul.f32 %v1592, %v1632
      %v1642 = vmul.f32 %v1597, %v1632
      %v1643 = vmul.f32 %v1600, %v1632
      %v1644 = vmul.f32 %v1605, %v1632
      %v1645 = vmul.f32 %v1608, %v1632
      %v1646 = vmul.f32 %v1613, %v1632
      %v1647 = vmul.f32 %v1616, %v1632
      %v1648 = vmul.f32 %v1621, %v1632
      %v1649 = vmul.f32 %v1624, %v1632
      %v1650 = vld [vmem:[%s6] sm:$0x1]
      %v1652 = vlaneseq
      %v1653 = vshrl.u32 %v1652, 7
      %v1654 = vsub.s32 0, %v1653
      %v1655 = vrot.slane %v1650, %v1654
      %v1657 = vadd.f32 %v1634, %v1655
      %v1658 = vadd.f32 %v1635, %v1655
      %v1659 = vadd.f32 %v1636, %v1655
      %v1660 = vadd.f32 %v1637, %v1655
      %v1661 = vadd.f32 %v1638, %v1655
      %v1662 = vadd.f32 %v1639, %v1655
      %v1663 = vadd.f32 %v1640, %v1655
      %v1664 = vadd.f32 %v1641, %v1655
      %v1665 = vadd.f32 %v1642, %v1655
      %v1666 = vadd.f32 %v1643, %v1655
      %v1667 = vadd.f32 %v1644, %v1655
      %v1668 = vadd.f32 %v1645, %v1655
      %v1669 = vadd.f32 %v1646, %v1655
      %v1670 = vadd.f32 %v1647, %v1655
      %v1671 = vadd.f32 %v1648, %v1655
      %v1672 = vadd.f32 %v1649, %v1655
      %v1673 = vmax.f32 %v1657, 0.0
      %v1674 = vmax.f32 %v1658, 0.0
      %v1675 = vmax.f32 %v1659, 0.0
      %v1676 = vmax.f32 %v1660, 0.0
      %v1677 = vmax.f32 %v1661, 0.0
      %v1678 = vmax.f32 %v1662, 0.0
      %v1679 = vmax.f32 %v1663, 0.0
      %v1680 = vmax.f32 %v1664, 0.0
      %v1681 = vmax.f32 %v1665, 0.0
      %v1682 = vmax.f32 %v1666, 0.0
      %v1683 = vmax.f32 %v1667, 0.0
      %v1684 = vmax.f32 %v1668, 0.0
      %v1685 = vmax.f32 %v1669, 0.0
      %v1686 = vmax.f32 %v1670, 0.0
      %v1687 = vmax.f32 %v1671, 0.0
      %v1688 = vmax.f32 %v1672, 0.0
      %1689 = vst.msk [vmem:[#allocation3] sm:$0xff] %vm1432, %v1673
      %1690 = vst.msk [vmem:[#allocation3 + $0x8] sm:$0xff] %vm1432, %v1674
      %1691 = vst.msk [vmem:[#allocation3 + $0x10] sm:$0xff] %vm1432, %v1675
      %1692 = vst.msk [vmem:[#allocation3 + $0x18] sm:$0xff] %vm1432, %v1676
      %1693 = vst.msk [vmem:[#allocation3 + $0x20] sm:$0xff] %vm1432, %v1677
      %1694 = vst.msk [vmem:[#allocation3 + $0x28] sm:$0xff] %vm1432, %v1678
      %1695 = vst.msk [vmem:[#allocation3 + $0x30] sm:$0xff] %vm1432, %v1679
      %1696 = vst.msk [vmem:[#allocation3 + $0x38] sm:$0xff] %vm1432, %v1680
      %1697 = vst.msk [vmem:[#allocation3 + $0x40] sm:$0xff] %vm1432, %v1681
      %1698 = vst.msk [vmem:[#allocation3 + $0x48] sm:$0xff] %vm1432, %v1682
      %1699 = vst.msk [vmem:[#allocation3 + $0x50] sm:$0xff] %vm1432, %v1683
      %1700 = vst.msk [vmem:[#allocation3 + $0x58] sm:$0xff] %vm1432, %v1684
      %1701 = vst.msk [vmem:[#allocation3 + $0x60] sm:$0xff] %vm1432, %v1685
      %1702 = vst.msk [vmem:[#allocation3 + $0x68] sm:$0xff] %vm1432, %v1686
      %1703 = vst.msk [vmem:[#allocation3 + $0x70] sm:$0xff] %vm1432, %v1687
      %1704 = vst.msk [vmem:[#allocation3 + $0x78] sm:$0xff] %vm1432, %v1688
      %v1705 = vld [vmem:[#allocation3] ss:$2 sm:$0xff]
      %s1706 = scalar_lea.vmem [#allocation3], 16
      %v1707 = vld [vmem:[%s1706] ss:$2 sm:$0xff]
      %s1708 = scalar_lea.vmem [#allocation3], 32
      %v1709 = vld [vmem:[%s1708] ss:$2 sm:$0xff]
      %s1710 = scalar_lea.vmem [#allocation3], 48
      %v1711 = vld [vmem:[%s1710] ss:$2 sm:$0xff]
      %s1712 = scalar_lea.vmem [#allocation3], 64
      %v1713 = vld [vmem:[%s1712] ss:$2 sm:$0xff]
      %s1714 = scalar_lea.vmem [#allocation3], 80
      %v1715 = vld [vmem:[%s1714] ss:$2 sm:$0xff]
      %s1716 = scalar_lea.vmem [#allocation3], 96
      %v1717 = vld [vmem:[%s1716] ss:$2 sm:$0xff]
      %s1718 = scalar_lea.vmem [#allocation3], 112
      %v1719 = vld [vmem:[%s1718] ss:$2 sm:$0xff]
      %s1720 = scalar_lea.vmem [#allocation3], 1
      %v1721 = vld [vmem:[%s1720] ss:$2 sm:$0xff]
      %s1722 = scalar_lea.vmem [#allocation3], 17
      %v1723 = vld [vmem:[%s1722] ss:$2 sm:$0xff]
      %s1724 = scalar_lea.vmem [#allocation3], 33
      %v1725 = vld [vmem:[%s1724] ss:$2 sm:$0xff]
      %s1726 = scalar_lea.vmem [#allocation3], 49
      %v1727 = vld [vmem:[%s1726] ss:$2 sm:$0xff]
      %s1728 = scalar_lea.vmem [#allocation3], 65
      %v1729 = vld [vmem:[%s1728] ss:$2 sm:$0xff]
      %s1730 = scalar_lea.vmem [#allocation3], 81
      %v1731 = vld [vmem:[%s1730] ss:$2 sm:$0xff]
      %s1732 = scalar_lea.vmem [#allocation3], 97
      %v1733 = vld [vmem:[%s1732] ss:$2 sm:$0xff]
      %s1734 = scalar_lea.vmem [#allocation3], 113
      %v1735 = vld [vmem:[%s1734] ss:$2 sm:$0xff]
      %v1736 = vmax.f32 %v1705, %v1721
      %v1737 = vmax.f32 %v1707, %v1723
      %v1738 = vmax.f32 %v1709, %v1725
      %v1739 = vmax.f32 %v1711, %v1727
      %v1740 = vmax.f32 %v1713, %v1729
      %v1741 = vmax.f32 %v1715, %v1731
      %v1742 = vmax.f32 %v1717, %v1733
      %v1743 = vmax.f32 %v1719, %v1735
      %1744 = vst.msk [vmem:[#allocation4] sm:$0xff] %vm1432, 0.0
      %1745 = vst.msk [vmem:[#allocation4 + $0x48] sm:$0xff] %vm1432, 0.0
      %1746 = vst.msk [vmem:[#allocation4 + $0x8] sm:$0xff] %vm1432, %v1736
      %1747 = vst.msk [vmem:[#allocation4 + $0x10] sm:$0xff] %vm1432, %v1737
      %1748 = vst.msk [vmem:[#allocation4 + $0x18] sm:$0xff] %vm1432, %v1738
      %1749 = vst.msk [vmem:[#allocation4 + $0x20] sm:$0xff] %vm1432, %v1739
      %1750 = vst.msk [vmem:[#allocation4 + $0x28] sm:$0xff] %vm1432, %v1740
      %1751 = vst.msk [vmem:[#allocation4 + $0x30] sm:$0xff] %vm1432, %v1741
      %1752 = vst.msk [vmem:[#allocation4 + $0x38] sm:$0xff] %vm1432, %v1742
      %1753 = vst.msk [vmem:[#allocation4 + $0x40] sm:$0xff] %vm1432, %v1743
      %v1754 = vld [vmem:[#allocation4 + $0x5] sm:$0xff]
      %v1755 = vld [vmem:[#allocation4 + $0xd] sm:$0xff]
      %v1756 = vld [vmem:[#allocation4 + $0x15] sm:$0xff]
      %v1757 = vld [vmem:[#allocation4 + $0x1d] sm:$0xff]
      %v1758 = vld [vmem:[#allocation4 + $0x25] sm:$0xff]
      %v1759 = vld [vmem:[#allocation4 + $0x2d] sm:$0xff]
      %v1760 = vld [vmem:[#allocation4 + $0x35] sm:$0xff]
      %v1761 = vld [vmem:[#allocation4 + $0x3d] sm:$0xff]
      %v1762 = vld [vmem:[#allocation4 + $0x6] sm:$0xff]
      %v1763 = vld [vmem:[#allocation4 + $0xe] sm:$0xff]
      %v1764 = vld [vmem:[#allocation4 + $0x16] sm:$0xff]
      %v1765 = vld [vmem:[#allocation4 + $0x1e] sm:$0xff]
      %v1766 = vld [vmem:[#allocation4 + $0x26] sm:$0xff]
      %v1767 = vld [vmem:[#allocation4 + $0x2e] sm:$0xff]
      %v1768 = vld [vmem:[#allocation4 + $0x36] sm:$0xff]
      %v1769 = vld [vmem:[#allocation4 + $0x3e] sm:$0xff]
      %v1770 = vld [vmem:[#allocation4 + $0x7] sm:$0xff]
      %v1771 = vld [vmem:[#allocation4 + $0xf] sm:$0xff]
      %v1772 = vld [vmem:[#allocation4 + $0x17] sm:$0xff]
      %v1773 = vld [vmem:[#allocation4 + $0x1f] sm:$0xff]
      %v1774 = vld [vmem:[#allocation4 + $0x27] sm:$0xff]
      %v1775 = vld [vmem:[#allocation4 + $0x2f] sm:$0xff]
      %v1776 = vld [vmem:[#allocation4 + $0x37] sm:$0xff]
      %v1777 = vld [vmem:[#allocation4 + $0x3f] sm:$0xff]
      %v1778 = vld [vmem:[#allocation4 + $0x8] sm:$0xff]
      %v1779 = vld [vmem:[#allocation4 + $0x10] sm:$0xff]
      %v1780 = vld [vmem:[#allocation4 + $0x18] sm:$0xff]
      %v1781 = vld [vmem:[#allocation4 + $0x20] sm:$0xff]
      %v1782 = vld [vmem:[#allocation4 + $0x28] sm:$0xff]
      %v1783 = vld [vmem:[#allocation4 + $0x30] sm:$0xff]
      %v1784 = vld [vmem:[#allocation4 + $0x38] sm:$0xff]
      %v1785 = vld [vmem:[#allocation4 + $0x40] sm:$0xff]
      %v1786 = vld [vmem:[#allocation4 + $0x9] sm:$0xff]
      %v1787 = vld [vmem:[#allocation4 + $0x11] sm:$0xff]
      %v1788 = vld [vmem:[#allocation4 + $0x19] sm:$0xff]
      %v1789 = vld [vmem:[#allocation4 + $0x21] sm:$0xff]
      %v1790 = vld [vmem:[#allocation4 + $0x29] sm:$0xff]
      %v1791 = vld [vmem:[#allocation4 + $0x31] sm:$0xff]
      %v1792 = vld [vmem:[#allocation4 + $0x39] sm:$0xff]
      %v1793 = vld [vmem:[#allocation4 + $0x41] sm:$0xff]
      %v1794 = vld [vmem:[#allocation4 + $0xa] sm:$0xff]
      %v1795 = vld [vmem:[#allocation4 + $0x12] sm:$0xff]
      %v1796 = vld [vmem:[#allocation4 + $0x1a] sm:$0xff]
      %v1797 = vld [vmem:[#allocation4 + $0x22] sm:$0xff]
      %v1798 = vld [vmem:[#allocation4 + $0x2a] sm:$0xff]
      %v1799 = vld [vmem:[#allocation4 + $0x32] sm:$0xff]
      %v1800 = vld [vmem:[#allocation4 + $0x3a] sm:$0xff]
      %v1801 = vld [vmem:[#allocation4 + $0x42] sm:$0xff]
      %v1802 = vld [vmem:[#allocation4 + $0xb] sm:$0xff]
      %v1803 = vld [vmem:[#allocation4 + $0x13] sm:$0xff]
      %v1804 = vld [vmem:[#allocation4 + $0x1b] sm:$0xff]
      %v1805 = vld [vmem:[#allocation4 + $0x23] sm:$0xff]
      %v1806 = vld [vmem:[#allocation4 + $0x2b] sm:$0xff]
      %v1807 = vld [vmem:[#allocation4 + $0x33] sm:$0xff]
      %v1808 = vld [vmem:[#allocation4 + $0x3b] sm:$0xff]
      %v1809 = vld [vmem:[#allocation4 + $0x43] sm:$0xff]
      %1818 = vrot.lane.b32.xlu0 %v1762, 64
      %v1819 = vpop.permute.xlu0 %1818
      %1820 = vrot.lane.b32.xlu0 %v1763, 64
      %v1821 = vpop.permute.xlu0 %1820
      %1822 = vrot.lane.b32.xlu0 %v1764, 64
      %v1823 = vpop.permute.xlu0 %1822
      %1824 = vrot.lane.b32.xlu0 %v1765, 64
      %v1825 = vpop.permute.xlu0 %1824
      %1826 = vrot.lane.b32.xlu0 %v1766, 64
      %v1827 = vpop.permute.xlu0 %1826
      %1828 = vrot.lane.b32.xlu0 %v1767, 64
      %v1829 = vpop.permute.xlu0 %1828
      %1830 = vrot.lane.b32.xlu0 %v1768, 64
      %v1831 = vpop.permute.xlu0 %1830
      %1832 = vrot.lane.b32.xlu0 %v1769, 64
      %v1833 = vpop.permute.xlu0 %1832
      %1850 = vrot.lane.b32.xlu0 %v1778, 64
      %v1851 = vpop.permute.xlu0 %1850
      %1852 = vrot.lane.b32.xlu0 %v1779, 64
      %v1853 = vpop.permute.xlu0 %1852
      %1854 = vrot.lane.b32.xlu0 %v1780, 64
      %v1855 = vpop.permute.xlu0 %1854
      %1856 = vrot.lane.b32.xlu0 %v1781, 64
      %v1857 = vpop.permute.xlu0 %1856
      %1858 = vrot.lane.b32.xlu0 %v1782, 64
      %v1859 = vpop.permute.xlu0 %1858
      %1860 = vrot.lane.b32.xlu0 %v1783, 64
      %v1861 = vpop.permute.xlu0 %1860
      %1862 = vrot.lane.b32.xlu0 %v1784, 64
      %v1863 = vpop.permute.xlu0 %1862
      %1864 = vrot.lane.b32.xlu0 %v1785, 64
      %v1865 = vpop.permute.xlu0 %1864
      %1882 = vrot.lane.b32.xlu0 %v1794, 64
      %v1883 = vpop.permute.xlu0 %1882
      %1884 = vrot.lane.b32.xlu0 %v1795, 64
      %v1885 = vpop.permute.xlu0 %1884
      %1886 = vrot.lane.b32.xlu0 %v1796, 64
      %v1887 = vpop.permute.xlu0 %1886
      %1888 = vrot.lane.b32.xlu0 %v1797, 64
      %v1889 = vpop.permute.xlu0 %1888
      %1890 = vrot.lane.b32.xlu0 %v1798, 64
      %v1891 = vpop.permute.xlu0 %1890
      %1892 = vrot.lane.b32.xlu0 %v1799, 64
      %v1893 = vpop.permute.xlu0 %1892
      %1894 = vrot.lane.b32.xlu0 %v1800, 64
      %v1895 = vpop.permute.xlu0 %1894
      %1896 = vrot.lane.b32.xlu0 %v1801, 64
      %v1897 = vpop.permute.xlu0 %1896
      %v1906 = vsel %vm1432, %v1754, %v1819
      %v1907 = vsel %vm1432, %v1755, %v1821
      %v1908 = vsel %vm1432, %v1756, %v1823
      %v1909 = vsel %vm1432, %v1757, %v1825
      %v1910 = vsel %vm1432, %v1758, %v1827
      %v1911 = vsel %vm1432, %v1759, %v1829
      %v1912 = vsel %vm1432, %v1760, %v1831
      %v1913 = vsel %vm1432, %v1761, %v1833
      %v1914 = vsel %vm1432, %v1770, %v1851
      %v1915 = vsel %vm1432, %v1771, %v1853
      %v1916 = vsel %vm1432, %v1772, %v1855
      %v1917 = vsel %vm1432, %v1773, %v1857
      %v1918 = vsel %vm1432, %v1774, %v1859
      %v1919 = vsel %vm1432, %v1775, %v1861
      %v1920 = vsel %vm1432, %v1776, %v1863
      %v1921 = vsel %vm1432, %v1777, %v1865
      %v1922 = vsel %vm1432, %v1786, %v1883
      %v1923 = vsel %vm1432, %v1787, %v1885
      %v1924 = vsel %vm1432, %v1788, %v1887
      %v1925 = vsel %vm1432, %v1789, %v1889
      %v1926 = vsel %vm1432, %v1790, %v1891
      %v1927 = vsel %vm1432, %v1791, %v1893
      %v1928 = vsel %vm1432, %v1792, %v1895
      %v1929 = vsel %vm1432, %v1793, %v1897
      %v1930 = vpack.c.bf16 %v1907, %v1906
      %v1931 = vpack.c.bf16 %v1915, %v1914
      %v1932 = vpack.c.bf16 %v1923, %v1922
      %v1933 = vpack.c.bf16 %v1803, %v1802
      %v1934 = vpack.c.bf16 %v1909, %v1908
      %v1935 = vpack.c.bf16 %v1917, %v1916
      %v1936 = vpack.c.bf16 %v1925, %v1924
      %v1937 = vpack.c.bf16 %v1805, %v1804
      %v1938 = vpack.c.bf16 %v1911, %v1910
      %v1939 = vpack.c.bf16 %v1919, %v1918
      %v1940 = vpack.c.bf16 %v1927, %v1926
      %v1941 = vpack.c.bf16 %v1807, %v1806
      %v1942 = vpack.c.bf16 %v1913, %v1912
      %v1943 = vpack.c.bf16 %v1921, %v1920
      %v1944 = vpack.c.bf16 %v1929, %v1928
      %v1945 = vpack.c.bf16 %v1809, %v1808
      %v1946 = vld [vmem:[%s7] sm:$0xf]
      %v1947 = vld [vmem:[%s7 + $0x4] sm:$0xf]
      %v1948 = vld [vmem:[%s7 + $0x8] sm:$0xf]
      %v1949 = vld [vmem:[%s7 + $0xc] sm:$0xf]
      %v1950 = vld [vmem:[%s7 + $0x10] sm:$0xf]
      %v1951 = vld [vmem:[%s7 + $0x14] sm:$0xf]
      %v1952 = vld [vmem:[%s7 + $0x18] sm:$0xf]
      %v1953 = vld [vmem:[%s7 + $0x1c] sm:$0xf]
      %v1954 = vld [vmem:[%s7 + $0x20] sm:$0xf]
      %v1955 = vld [vmem:[%s7 + $0x24] sm:$0xf]
      %v1956 = vld [vmem:[%s7 + $0x28] sm:$0xf]
      %v1957 = vld [vmem:[%s7 + $0x2c] sm:$0xf]
      %v1958 = vld [vmem:[%s7 + $0x30] sm:$0xf]
      %v1959 = vld [vmem:[%s7 + $0x34] sm:$0xf]
      %v1960 = vld [vmem:[%s7 + $0x38] sm:$0xf]
      %v1961 = vld [vmem:[%s7 + $0x3c] sm:$0xf]
      %v1962 = vld [vmem:[%s7 + $0x40] sm:$0xf]
      %v1963 = vld [vmem:[%s7 + $0x44] sm:$0xf]
      %v1964 = vld [vmem:[%s7 + $0x48] sm:$0xf]
      %v1965 = vld [vmem:[%s7 + $0x4c] sm:$0xf]
      %v1966 = vld [vmem:[%s7 + $0x50] sm:$0xf]
      %v1967 = vld [vmem:[%s7 + $0x54] sm:$0xf]
      %v1968 = vld [vmem:[%s7 + $0x58] sm:$0xf]
      %v1969 = vld [vmem:[%s7 + $0x5c] sm:$0xf]
      %v1970 = vld [vmem:[%s7 + $0x60] sm:$0xf]
      %v1971 = vld [vmem:[%s7 + $0x64] sm:$0xf]
      %v1972 = vld [vmem:[%s7 + $0x68] sm:$0xf]
      %v1973 = vld [vmem:[%s7 + $0x6c] sm:$0xf]
      %v1974 = vld [vmem:[%s7 + $0x70] sm:$0xf]
      %v1975 = vld [vmem:[%s7 + $0x74] sm:$0xf]
      %v1976 = vld [vmem:[%s7 + $0x78] sm:$0xf]
      %v1977 = vld [vmem:[%s7 + $0x7c] sm:$0xf]
      %v1978 = vld [vmem:[%s7 + $0x80] sm:$0xf]
      %v1979 = vld [vmem:[%s7 + $0x84] sm:$0xf]
      %v1980 = vld [vmem:[%s7 + $0x88] sm:$0xf]
      %v1981 = vld [vmem:[%s7 + $0x8c] sm:$0xf]
      %v1982 = vld [vmem:[%s7 + $0x90] sm:$0xf]
      %v1983 = vld [vmem:[%s7 + $0x94] sm:$0xf]
      %v1984 = vld [vmem:[%s7 + $0x98] sm:$0xf]
      %v1985 = vld [vmem:[%s7 + $0x9c] sm:$0xf]
      %v1986 = vld [vmem:[%s7 + $0xa0] sm:$0xf]
      %v1987 = vld [vmem:[%s7 + $0xa4] sm:$0xf]
      %v1988 = vld [vmem:[%s7 + $0xa8] sm:$0xf]
      %v1989 = vld [vmem:[%s7 + $0xac] sm:$0xf]
      %v1990 = vld [vmem:[%s7 + $0xb0] sm:$0xf]
      %v1991 = vld [vmem:[%s7 + $0xb4] sm:$0xf]
      %v1992 = vld [vmem:[%s7 + $0xb8] sm:$0xf]
      %v1993 = vld [vmem:[%s7 + $0xbc] sm:$0xf]
      %v1994 = vld [vmem:[%s7 + $0xc0] sm:$0xf]
      %v1995 = vld [vmem:[%s7 + $0xc4] sm:$0xf]
      %v1996 = vld [vmem:[%s7 + $0xc8] sm:$0xf]
      %v1997 = vld [vmem:[%s7 + $0xcc] sm:$0xf]
      %v1998 = vld [vmem:[%s7 + $0xd0] sm:$0xf]
      %v1999 = vld [vmem:[%s7 + $0xd4] sm:$0xf]
      %v2000 = vld [vmem:[%s7 + $0xd8] sm:$0xf]
      %v2001 = vld [vmem:[%s7 + $0xdc] sm:$0xf]
      %v2058 = vunpack.c.l.b16 %v1946
      %v2059 = vunpack.c.l.b16 %v1947
      %v2060 = vunpack.c.l.b16 %v1948
      %v2061 = vunpack.c.l.b16 %v1949
      %v2062 = vunpack.c.l.b16 %v1950
      %v2063 = vunpack.c.l.b16 %v1951
      %v2064 = vunpack.c.l.b16 %v1952
      %v2065 = vunpack.c.l.b16 %v1953
      %v2066 = vunpack.c.l.b16 %v1954
      %v2067 = vunpack.c.l.b16 %v1955
      %v2068 = vunpack.c.l.b16 %v1956
      %v2069 = vunpack.c.l.b16 %v1957
      %v2070 = vunpack.c.l.b16 %v1958
      %v2071 = vunpack.c.l.b16 %v1959
      %v2072 = vunpack.c.l.b16 %v1960
      %v2073 = vunpack.c.l.b16 %v1961
      %v2074 = vunpack.c.l.b16 %v1962
      %v2075 = vunpack.c.l.b16 %v1963
      %v2076 = vunpack.c.l.b16 %v1964
      %v2077 = vunpack.c.l.b16 %v1965
      %v2078 = vunpack.c.l.b16 %v1966
      %v2079 = vunpack.c.l.b16 %v1967
      %v2080 = vunpack.c.l.b16 %v1968
      %v2081 = vunpack.c.l.b16 %v1969
      %v2082 = vunpack.c.l.b16 %v1970
      %v2083 = vunpack.c.l.b16 %v1971
      %v2084 = vunpack.c.l.b16 %v1972
      %v2085 = vunpack.c.l.b16 %v1973
      %v2086 = vunpack.c.l.b16 %v1974
      %v2087 = vunpack.c.l.b16 %v1975
      %v2088 = vunpack.c.l.b16 %v1976
      %v2089 = vunpack.c.l.b16 %v1977
      %v2090 = vunpack.c.l.b16 %v1978
      %v2091 = vunpack.c.l.b16 %v1979
      %v2092 = vunpack.c.l.b16 %v1980
      %v2093 = vunpack.c.l.b16 %v1981
      %v2094 = vunpack.c.l.b16 %v1982
      %v2095 = vunpack.c.l.b16 %v1983
      %v2096 = vunpack.c.l.b16 %v1984
      %v2097 = vunpack.c.l.b16 %v1985
      %v2098 = vunpack.c.l.b16 %v1986
      %v2099 = vunpack.c.l.b16 %v1987
      %v2100 = vunpack.c.l.b16 %v1988
      %v2101 = vunpack.c.l.b16 %v1989
      %v2102 = vunpack.c.l.b16 %v1990
      %v2103 = vunpack.c.l.b16 %v1991
      %v2104 = vunpack.c.l.b16 %v1992
      %v2105 = vunpack.c.l.b16 %v1993
      %v2106 = vunpack.c.l.b16 %v1994
      %v2107 = vunpack.c.l.b16 %v1995
      %v2108 = vunpack.c.l.b16 %v1996
      %v2109 = vunpack.c.l.b16 %v1997
      %v2110 = vunpack.c.l.b16 %v1998
      %v2111 = vunpack.c.l.b16 %v1999
      %v2112 = vunpack.c.l.b16 %v2000
      %v2113 = vunpack.c.l.b16 %v2001
      %v2114 = vpack.c.b16 %v2059, %v2058
      %v2115 = vpack.c.b16 %v2061, %v2060
      %v2116 = vpack.c.b16 %v2063, %v2062
      %v2117 = vpack.c.b16 %v2065, %v2064
      %v2118 = vpack.c.b16 %v2067, %v2066
      %v2119 = vpack.c.b16 %v2069, %v2068
      %v2120 = vpack.c.b16 %v2071, %v2070
      %v2121 = vpack.c.b16 %v2073, %v2072
      %v2122 = vpack.c.b16 %v2075, %v2074
      %v2123 = vpack.c.b16 %v2077, %v2076
      %v2124 = vpack.c.b16 %v2079, %v2078
      %v2125 = vpack.c.b16 %v2081, %v2080
      %v2126 = vpack.c.b16 %v2083, %v2082
      %v2127 = vpack.c.b16 %v2085, %v2084
      %v2128 = vpack.c.b16 %v2087, %v2086
      %v2129 = vpack.c.b16 %v2089, %v2088
      %v2130 = vpack.c.b16 %v2091, %v2090
      %v2131 = vpack.c.b16 %v2093, %v2092
      %v2132 = vpack.c.b16 %v2095, %v2094
      %v2133 = vpack.c.b16 %v2097, %v2096
      %v2134 = vpack.c.b16 %v2099, %v2098
      %v2135 = vpack.c.b16 %v2101, %v2100
      %v2136 = vpack.c.b16 %v2103, %v2102
      %v2137 = vpack.c.b16 %v2105, %v2104
      %v2138 = vpack.c.b16 %v2107, %v2106
      %v2139 = vpack.c.b16 %v2109, %v2108
      %v2140 = vpack.c.b16 %v2111, %v2110
      %v2141 = vpack.c.b16 %v2113, %v2112
      %v2171 = vsel %vm1432, %v1933, 0
      %v2174 = vsel %vm1432, %v1937, 0
      %v2177 = vsel %vm1432, %v1941, 0
      %v2180 = vsel %vm1432, %v1945, 0
      %2182 = vmatprep.subr.bf16.mxu0 0
      %2183 = vmatpush1.bf16.msra.mxu0 %v2114
      %2184 = vmatprep.subr.bf16.mxu0 0
      %2185 = vmatpush1.bf16.msra.mxu0 %v2115
      %2186 = vmatprep.subr.bf16.mxu0 0
      %2187 = vmatpush1.bf16.msra.mxu0 %v2116
      %2188 = vmatprep.subr.bf16.mxu0 0
      %2189 = vmatpush1.bf16.msra.mxu0 %v2117
      %2190 = vmatprep.subr.bf16.mxu0 0
      %2191 = vmatpush1.bf16.msra.mxu0 %v2118
      %2192 = vmatprep.subr.bf16.mxu0 0
      %2193 = vmatpush1.bf16.msra.mxu0 %v2119
      %2194 = vmatprep.subr.bf16.mxu0 0
      %2195 = vmatpush1.bf16.msra.mxu0 %v2120
      %2196 = vmatprep.subr.bf16.mxu0 0
      %2197 = vmatpush1.bf16.msra.mxu0 %v2121
      %2198 = vmatprep.subr.bf16.mxu0 0
      %2199 = vmatpush1.bf16.msra.mxu0 %v2122
      %2200 = vmatprep.subr.bf16.mxu0 0
      %2201 = vmatpush1.bf16.msra.mxu0 %v2123
      %2202 = vmatprep.subr.bf16.mxu0 0
      %2203 = vmatpush1.bf16.msra.mxu0 %v2124
      %2204 = vmatprep.subr.bf16.mxu0 0
      %2205 = vmatpush1.bf16.msra.mxu0 %v2125
      %2206 = vmatprep.subr.bf16.mxu0 0
      %2207 = vmatpush1.bf16.msra.mxu0 %v2126
      %2208 = vmatprep.subr.bf16.mxu0 0
      %2209 = vmatpush1.bf16.msra.mxu0 %v2127
      %2210 = vmatprep.subr.bf16.mxu0 0
      %2211 = vmatpush1.bf16.msra.mxu0 %v2128
      %2212 = vmatprep.subr.bf16.mxu0 0
      %2213 = vmatpush1.bf16.msra.mxu0 %v2129
      %2214 = vmatprep.mubr.bf16.mxu0 %v1931
      %2215 = vmatmul.mubr.bf16.gmra.mrb[0].mxu0 %v1930
      %v2216 = vpop.f32.mrb[0].mxu0
      %v2217 = vadd.f32 0.0, %v2216
      %v2218 = vpop.f32.mrb[0].mxu0
      %v2219 = vpop.f32.mrb[0].mxu0
      %v2220 = vadd.f32 0.0, %v2219
      %v2221 = vpop.f32.mrb[0].mxu0
      %2222 = vmatprep.mubr.bf16.mxu0 %v1935
      %2223 = vmatmul.mubr.bf16.gmra.mrb[0].mxu0 %v1934
      %v2224 = vpop.f32.mrb[0].mxu0
      %v2225 = vadd.f32 0.0, %v2224
      %v2226 = vpop.f32.mrb[0].mxu0
      %v2227 = vpop.f32.mrb[0].mxu0
      %v2228 = vadd.f32 0.0, %v2227
      %v2229 = vpop.f32.mrb[0].mxu0
      %2230 = vmatprep.mubr.bf16.mxu0 %v1939
      %2231 = vmatmul.mubr.bf16.gmra.mrb[0].mxu0 %v1938
      %v2232 = vpop.f32.mrb[0].mxu0
      %v2233 = vadd.f32 0.0, %v2232
      %v2234 = vpop.f32.mrb[0].mxu0
      %v2235 = vpop.f32.mrb[0].mxu0
      %v2236 = vadd.f32 0.0, %v2235
      %v2237 = vpop.f32.mrb[0].mxu0
      %2238 = vmatprep.mubr.bf16.mxu0 %v1943
      %2239 = vmatmul.mubr.bf16.gmra.mrb[0].mxu0 %v1942
      %v2240 = vpop.f32.mrb[0].mxu0
      %v2241 = vadd.f32 0.0, %v2240
      %v2242 = vpop.f32.mrb[0].mxu0
      %v2243 = vpop.f32.mrb[0].mxu0
      %v2244 = vadd.f32 0.0, %v2243
      %v2245 = vpop.f32.mrb[0].mxu0
      %2246 = vdwg.mxu0
      %2247 = vmatprep.subr.bf16.mxu0 0
      %2248 = vmatpush1.bf16.msra.mxu0 %v2130
      %2249 = vmatprep.subr.bf16.mxu0 0
      %2250 = vmatpush1.bf16.msra.mxu0 %v2131
      %2251 = vmatprep.subr.bf16.mxu0 0
      %2252 = vmatpush1.bf16.msra.mxu0 %v2132
      %2253 = vmatprep.subr.bf16.mxu0 0
      %2254 = vmatpush1.bf16.msra.mxu0 %v2133
      %2255 = vmatprep.subr.bf16.mxu0 0
      %2256 = vmatpush1.bf16.msra.mxu0 %v2134
      %2257 = vmatprep.subr.bf16.mxu0 0
      %2258 = vmatpush1.bf16.msra.mxu0 %v2135
      %2259 = vmatprep.subr.bf16.mxu0 0
      %2260 = vmatpush1.bf16.msra.mxu0 %v2136
      %2261 = vmatprep.subr.bf16.mxu0 0
      %2262 = vmatpush1.bf16.msra.mxu0 %v2137
      %2263 = vmatprep.subr.bf16.mxu0 0
      %2264 = vmatpush1.bf16.msra.mxu0 %v2138
      %2265 = vmatprep.subr.bf16.mxu0 0
      %2266 = vmatpush1.bf16.msra.mxu0 %v2139
      %2267 = vmatprep.subr.bf16.mxu0 0
      %2268 = vmatpush1.bf16.msra.mxu0 %v2140
      %2269 = vmatprep.subr.bf16.mxu0 0
      %2270 = vmatpush1.bf16.msra.mxu0 %v2141
      %2271 = vmatprep.subr.bf16.mxu0 0
      %2272 = vmatpush1.bf16.msra.mxu0 0
      %2273 = vmatprep.subr.bf16.mxu0 0
      %2274 = vmatpush1.bf16.msra.mxu0 0
      %2275 = vmatprep.subr.bf16.mxu0 0
      %2276 = vmatpush1.bf16.msra.mxu0 0
      %2277 = vmatprep.subr.bf16.mxu0 0
      %2278 = vmatpush1.bf16.msra.mxu0 0
      %2279 = vmatprep.mubr.bf16.mxu0 %v2171
      %2280 = vmatmul.mubr.bf16.gmra.mrb[0].mxu0 %v1932
      %v2281 = vpop.f32.mrb[0].mxu0
      %v2282 = vadd.f32 %v2217, %v2281
      %v2283 = vpop.f32.mrb[0].mxu0
      %v2284 = vpop.f32.mrb[0].mxu0
      %v2285 = vadd.f32 %v2220, %v2284
      %v2286 = vpop.f32.mrb[0].mxu0
      %2287 = vmatprep.mubr.bf16.mxu0 %v2174
      %2288 = vmatmul.mubr.bf16.gmra.mrb[0].mxu0 %v1936
      %v2289 = vpop.f32.mrb[0].mxu0
      %v2290 = vadd.f32 %v2225, %v2289
      %v2291 = vpop.f32.mrb[0].mxu0
      %v2292 = vpop.f32.mrb[0].mxu0
      %v2293 = vadd.f32 %v2228, %v2292
      %v2294 = vpop.f32.mrb[0].mxu0
      %2295 = vmatprep.mubr.bf16.mxu0 %v2177
      %2296 = vmatmul.mubr.bf16.gmra.mrb[0].mxu0 %v1940
      %v2297 = vpop.f32.mrb[0].mxu0
      %v2298 = vadd.f32 %v2233, %v2297
      %v2299 = vpop.f32.mrb[0].mxu0
      %v2300 = vpop.f32.mrb[0].mxu0
      %v2301 = vadd.f32 %v2236, %v2300
      %v2302 = vpop.f32.mrb[0].mxu0
      %2303 = vmatprep.mubr.bf16.mxu0 %v2180
      %2304 = vmatmul.mubr.bf16.gmra.mrb[0].mxu0 %v1944
      %v2305 = vpop.f32.mrb[0].mxu0
      %v2306 = vadd.f32 %v2241, %v2305
      %v2307 = vpop.f32.mrb[0].mxu0
      %v2308 = vpop.f32.mrb[0].mxu0
      %v2309 = vadd.f32 %v2244, %v2308
      %v2310 = vpop.f32.mrb[0].mxu0
      %2311 = vdwg.mxu0
      %v2312 = vld [vmem:[%s8] sm:$0x1]
      %v2314 = vlaneseq
      %v2315 = vshrl.u32 %v2314, 7
      %v2316 = vsub.s32 0, %v2315
      %v2317 = vrot.slane %v2312, %v2316
      %v2319 = vmul.f32 %v2282, %v2317
      %v2320 = vmul.f32 %v2285, %v2317
      %v2321 = vmul.f32 %v2290, %v2317
      %v2322 = vmul.f32 %v2293, %v2317
      %v2323 = vmul.f32 %v2298, %v2317
      %v2324 = vmul.f32 %v2301, %v2317
      %v2325 = vmul.f32 %v2306, %v2317
      %v2326 = vmul.f32 %v2309, %v2317
      %v2327 = vld [vmem:[%s9] sm:$0x1]
      %v2329 = vlaneseq
      %v2330 = vshrl.u32 %v2329, 7
      %v2331 = vsub.s32 0, %v2330
      %v2332 = vrot.slane %v2327, %v2331
      %v2334 = vadd.f32 %v2319, %v2332
      %v2335 = vadd.f32 %v2320, %v2332
      %v2336 = vadd.f32 %v2321, %v2332
      %v2337 = vadd.f32 %v2322, %v2332
      %v2338 = vadd.f32 %v2323, %v2332
      %v2339 = vadd.f32 %v2324, %v2332
      %v2340 = vadd.f32 %v2325, %v2332
      %v2341 = vadd.f32 %v2326, %v2332
      %v2342 = vmax.f32 %v2334, 0.0
      %v2343 = vmax.f32 %v2335, 0.0
      %v2344 = vmax.f32 %v2336, 0.0
      %v2345 = vmax.f32 %v2337, 0.0
      %v2346 = vmax.f32 %v2338, 0.0
      %v2347 = vmax.f32 %v2339, 0.0
      %v2348 = vmax.f32 %v2340, 0.0
      %v2349 = vmax.f32 %v2341, 0.0
      %2350 = vst [vmem:[#allocation5] sm:$0xff] 0.0
      %2351 = vst [vmem:[#allocation5 + $0x48] sm:$0xff] 0.0
      %2352 = vst [vmem:[#allocation5 + $0x8] sm:$0xff] %v2342
      %2353 = vst [vmem:[#allocation5 + $0x10] sm:$0xff] %v2343
      %2354 = vst [vmem:[#allocation5 + $0x18] sm:$0xff] %v2344
      %2355 = vst [vmem:[#allocation5 + $0x20] sm:$0xff] %v2345
      %2356 = vst [vmem:[#allocation5 + $0x28] sm:$0xff] %v2346
      %2357 = vst [vmem:[#allocation5 + $0x30] sm:$0xff] %v2347
      %2358 = vst [vmem:[#allocation5 + $0x38] sm:$0xff] %v2348
      %2359 = vst [vmem:[#allocation5 + $0x40] sm:$0xff] %v2349
      %v2360 = vld [vmem:[#allocation5 + $0x7] sm:$0xff]
      %v2361 = vld [vmem:[#allocation5 + $0xf] sm:$0xff]
      %v2362 = vld [vmem:[#allocation5 + $0x17] sm:$0xff]
      %v2363 = vld [vmem:[#allocation5 + $0x1f] sm:$0xff]
      %v2364 = vld [vmem:[#allocation5 + $0x27] sm:$0xff]
      %v2365 = vld [vmem:[#allocation5 + $0x2f] sm:$0xff]
      %v2366 = vld [vmem:[#allocation5 + $0x37] sm:$0xff]
      %v2367 = vld [vmem:[#allocation5 + $0x3f] sm:$0xff]
      %v2368 = vld [vmem:[#allocation5 + $0x8] sm:$0xff]
      %v2369 = vld [vmem:[#allocation5 + $0x10] sm:$0xff]
      %v2370 = vld [vmem:[#allocation5 + $0x18] sm:$0xff]
      %v2371 = vld [vmem:[#allocation5 + $0x20] sm:$0xff]
      %v2372 = vld [vmem:[#allocation5 + $0x28] sm:$0xff]
      %v2373 = vld [vmem:[#allocation5 + $0x30] sm:$0xff]
      %v2374 = vld [vmem:[#allocation5 + $0x38] sm:$0xff]
      %v2375 = vld [vmem:[#allocation5 + $0x40] sm:$0xff]
      %v2376 = vld [vmem:[#allocation5 + $0x9] sm:$0xff]
      %v2377 = vld [vmem:[#allocation5 + $0x11] sm:$0xff]
      %v2378 = vld [vmem:[#allocation5 + $0x19] sm:$0xff]
      %v2379 = vld [vmem:[#allocation5 + $0x21] sm:$0xff]
      %v2380 = vld [vmem:[#allocation5 + $0x29] sm:$0xff]
      %v2381 = vld [vmem:[#allocation5 + $0x31] sm:$0xff]
      %v2382 = vld [vmem:[#allocation5 + $0x39] sm:$0xff]
      %v2383 = vld [vmem:[#allocation5 + $0x41] sm:$0xff]
      %v2384 = vpack.c.bf16 %v2361, %v2360
      %v2385 = vpack.c.bf16 %v2369, %v2368
      %v2386 = vpack.c.bf16 %v2377, %v2376
      %v2387 = vpack.c.bf16 %v2363, %v2362
      %v2388 = vpack.c.bf16 %v2371, %v2370
      %v2389 = vpack.c.bf16 %v2379, %v2378
      %v2390 = vpack.c.bf16 %v2365, %v2364
      %v2391 = vpack.c.bf16 %v2373, %v2372
      %v2392 = vpack.c.bf16 %v2381, %v2380
      %v2393 = vpack.c.bf16 %v2367, %v2366
      %v2394 = vpack.c.bf16 %v2375, %v2374
      %v2395 = vpack.c.bf16 %v2383, %v2382
      %v2396 = vld [vmem:[%s10] sm:$0xf]
      %v2397 = vld [vmem:[%s10 + $0x4] sm:$0xf]
      %v2398 = vld [vmem:[%s10 + $0x8] sm:$0xf]
      %v2399 = vld [vmem:[%s10 + $0xc] sm:$0xf]
      %v2400 = vld [vmem:[%s10 + $0x10] sm:$0xf]
      %v2401 = vld [vmem:[%s10 + $0x14] sm:$0xf]
      %v2402 = vld [vmem:[%s10 + $0x18] sm:$0xf]
      %v2403 = vld [vmem:[%s10 + $0x1c] sm:$0xf]
      %v2404 = vld [vmem:[%s10 + $0x20] sm:$0xf]
      %v2405 = vld [vmem:[%s10 + $0x24] sm:$0xf]
      %v2406 = vld [vmem:[%s10 + $0x28] sm:$0xf]
      %v2407 = vld [vmem:[%s10 + $0x2c] sm:$0xf]
      %v2408 = vld [vmem:[%s10 + $0x30] sm:$0xf]
      %v2409 = vld [vmem:[%s10 + $0x34] sm:$0xf]
      %v2410 = vld [vmem:[%s10 + $0x38] sm:$0xf]
      %v2411 = vld [vmem:[%s10 + $0x3c] sm:$0xf]
      %v2412 = vld [vmem:[%s10 + $0x40] sm:$0xf]
      %v2413 = vld [vmem:[%s10 + $0x44] sm:$0xf]
      %v2414 = vld [vmem:[%s10 + $0x48] sm:$0xf]
      %v2415 = vld [vmem:[%s10 + $0x4c] sm:$0xf]
      %v2416 = vld [vmem:[%s10 + $0x50] sm:$0xf]
      %v2417 = vld [vmem:[%s10 + $0x54] sm:$0xf]
      %v2418 = vld [vmem:[%s10 + $0x58] sm:$0xf]
      %v2419 = vld [vmem:[%s10 + $0x5c] sm:$0xf]
      %v2420 = vld [vmem:[%s10 + $0x60] sm:$0xf]
      %v2421 = vld [vmem:[%s10 + $0x64] sm:$0xf]
      %v2422 = vld [vmem:[%s10 + $0x68] sm:$0xf]
      %v2423 = vld [vmem:[%s10 + $0x6c] sm:$0xf]
      %v2424 = vld [vmem:[%s10 + $0x70] sm:$0xf]
      %v2425 = vld [vmem:[%s10 + $0x74] sm:$0xf]
      %v2426 = vld [vmem:[%s10 + $0x78] sm:$0xf]
      %v2427 = vld [vmem:[%s10 + $0x7c] sm:$0xf]
      %v2428 = vld [vmem:[%s10 + $0x80] sm:$0xf]
      %v2429 = vld [vmem:[%s10 + $0x84] sm:$0xf]
      %v2430 = vld [vmem:[%s10 + $0x88] sm:$0xf]
      %v2431 = vld [vmem:[%s10 + $0x8c] sm:$0xf]
      %v2432 = vld [vmem:[%s10 + $0x90] sm:$0xf]
      %v2433 = vld [vmem:[%s10 + $0x94] sm:$0xf]
      %v2434 = vld [vmem:[%s10 + $0x98] sm:$0xf]
      %v2435 = vld [vmem:[%s10 + $0x9c] sm:$0xf]
      %v2436 = vld [vmem:[%s10 + $0xa0] sm:$0xf]
      %v2437 = vld [vmem:[%s10 + $0xa4] sm:$0xf]
      %v2438 = vld [vmem:[%s10 + $0xa8] sm:$0xf]
      %v2439 = vld [vmem:[%s10 + $0xac] sm:$0xf]
      %v2440 = vld [vmem:[%s10 + $0xb0] sm:$0xf]
      %v2441 = vld [vmem:[%s10 + $0xb4] sm:$0xf]
      %v2442 = vld [vmem:[%s10 + $0xb8] sm:$0xf]
      %v2443 = vld [vmem:[%s10 + $0xbc] sm:$0xf]
      %v2492 = vunpack.c.l.b16 %v2396
      %v2493 = vunpack.c.l.b16 %v2397
      %v2494 = vunpack.c.l.b16 %v2398
      %v2495 = vunpack.c.l.b16 %v2399
      %v2496 = vunpack.c.l.b16 %v2400
      %v2497 = vunpack.c.l.b16 %v2401
      %v2498 = vunpack.c.l.b16 %v2402
      %v2499 = vunpack.c.l.b16 %v2403
      %v2500 = vunpack.c.l.b16 %v2404
      %v2501 = vunpack.c.l.b16 %v2405
      %v2502 = vunpack.c.l.b16 %v2406
      %v2503 = vunpack.c.l.b16 %v2407
      %v2504 = vunpack.c.l.b16 %v2408
      %v2505 = vunpack.c.l.b16 %v2409
      %v2506 = vunpack.c.l.b16 %v2410
      %v2507 = vunpack.c.l.b16 %v2411
      %v2508 = vunpack.c.l.b16 %v2412
      %v2509 = vunpack.c.l.b16 %v2413
      %v2510 = vunpack.c.l.b16 %v2414
      %v2511 = vunpack.c.l.b16 %v2415
      %v2512 = vunpack.c.l.b16 %v2416
      %v2513 = vunpack.c.l.b16 %v2417
      %v2514 = vunpack.c.l.b16 %v2418
      %v2515 = vunpack.c.l.b16 %v2419
      %v2516 = vunpack.c.l.b16 %v2420
      %v2517 = vunpack.c.l.b16 %v2421
      %v2518 = vunpack.c.l.b16 %v2422
      %v2519 = vunpack.c.l.b16 %v2423
      %v2520 = vunpack.c.l.b16 %v2424
      %v2521 = vunpack.c.l.b16 %v2425
      %v2522 = vunpack.c.l.b16 %v2426
      %v2523 = vunpack.c.l.b16 %v2427
      %v2524 = vunpack.c.l.b16 %v2428
      %v2525 = vunpack.c.l.b16 %v2429
      %v2526 = vunpack.c.l.b16 %v2430
      %v2527 = vunpack.c.l.b16 %v2431
      %v2528 = vunpack.c.l.b16 %v2432
      %v2529 = vunpack.c.l.b16 %v2433
      %v2530 = vunpack.c.l.b16 %v2434
      %v2531 = vunpack.c.l.b16 %v2435
      %v2532 = vunpack.c.l.b16 %v2436
      %v2533 = vunpack.c.l.b16 %v2437
      %v2534 = vunpack.c.l.b16 %v2438
      %v2535 = vunpack.c.l.b16 %v2439
      %v2536 = vunpack.c.l.b16 %v2440
      %v2537 = vunpack.c.l.b16 %v2441
      %v2538 = vunpack.c.l.b16 %v2442
      %v2539 = vunpack.c.l.b16 %v2443
      %v2540 = vpack.c.b16 %v2493, %v2492
      %v2541 = vpack.c.b16 %v2495, %v2494
      %v2542 = vpack.c.b16 %v2497, %v2496
      %v2543 = vpack.c.b16 %v2499, %v2498
      %v2544 = vpack.c.b16 %v2501, %v2500
      %v2545 = vpack.c.b16 %v2503, %v2502
      %v2546 = vpack.c.b16 %v2505, %v2504
      %v2547 = vpack.c.b16 %v2507, %v2506
      %v2548 = vpack.c.b16 %v2509, %v2508
      %v2549 = vpack.c.b16 %v2511, %v2510
      %v2550 = vpack.c.b16 %v2513, %v2512
      %v2551 = vpack.c.b16 %v2515, %v2514
      %v2552 = vpack.c.b16 %v2517, %v2516
      %v2553 = vpack.c.b16 %v2519, %v2518
      %v2554 = vpack.c.b16 %v2521, %v2520
      %v2555 = vpack.c.b16 %v2523, %v2522
      %v2556 = vpack.c.b16 %v2525, %v2524
      %v2557 = vpack.c.b16 %v2527, %v2526
      %v2558 = vpack.c.b16 %v2529, %v2528
      %v2559 = vpack.c.b16 %v2531, %v2530
      %v2560 = vpack.c.b16 %v2533, %v2532
      %v2561 = vpack.c.b16 %v2535, %v2534
      %v2562 = vpack.c.b16 %v2537, %v2536
      %v2563 = vpack.c.b16 %v2539, %v2538
      %2588 = vmatprep.subr.bf16.mxu0 0
      %2589 = vmatpush1.bf16.msra.mxu0 %v2540
      %2590 = vmatprep.subr.bf16.mxu0 0
      %2591 = vmatpush1.bf16.msra.mxu0 %v2541
      %2592 = vmatprep.subr.bf16.mxu0 0
      %2593 = vmatpush1.bf16.msra.mxu0 %v2542
      %2594 = vmatprep.subr.bf16.mxu0 0
      %2595 = vmatpush1.bf16.msra.mxu0 %v2543
      %2596 = vmatprep.subr.bf16.mxu0 0
      %2597 = vmatpush1.bf16.msra.mxu0 %v2544
      %2598 = vmatprep.subr.bf16.mxu0 0
      %2599 = vmatpush1.bf16.msra.mxu0 %v2545
      %2600 = vmatprep.subr.bf16.mxu0 0
      %2601 = vmatpush1.bf16.msra.mxu0 %v2546
      %2602 = vmatprep.subr.bf16.mxu0 0
      %2603 = vmatpush1.bf16.msra.mxu0 %v2547
      %2604 = vmatprep.subr.bf16.mxu0 0
      %2605 = vmatpush1.bf16.msra.mxu0 %v2548
      %2606 = vmatprep.subr.bf16.mxu0 0
      %2607 = vmatpush1.bf16.msra.mxu0 %v2549
      %2608 = vmatprep.subr.bf16.mxu0 0
      %2609 = vmatpush1.bf16.msra.mxu0 %v2550
      %2610 = vmatprep.subr.bf16.mxu0 0
      %2611 = vmatpush1.bf16.msra.mxu0 %v2551
      %2612 = vmatprep.subr.bf16.mxu0 0
      %2613 = vmatpush1.bf16.msra.mxu0 %v2552
      %2614 = vmatprep.subr.bf16.mxu0 0
      %2615 = vmatpush1.bf16.msra.mxu0 %v2553
      %2616 = vmatprep.subr.bf16.mxu0 0
      %2617 = vmatpush1.bf16.msra.mxu0 %v2554
      %2618 = vmatprep.subr.bf16.mxu0 0
      %2619 = vmatpush1.bf16.msra.mxu0 %v2555
      %2620 = vmatprep.mubr.bf16.mxu0 %v2385
      %2621 = vmatmul.mubr.bf16.gmra.mrb[0].mxu0 %v2384
      %v2622 = vpop.f32.mrb[0].mxu0
      %v2623 = vadd.f32 0.0, %v2622
      %v2624 = vpop.f32.mrb[0].mxu0
      %v2625 = vpop.f32.mrb[0].mxu0
      %v2626 = vadd.f32 0.0, %v2625
      %v2627 = vpop.f32.mrb[0].mxu0
      %2628 = vmatprep.mubr.bf16.mxu0 %v2388
      %2629 = vmatmul.mubr.bf16.gmra.mrb[0].mxu0 %v2387
      %v2630 = vpop.f32.mrb[0].mxu0
      %v2631 = vadd.f32 0.0, %v2630
      %v2632 = vpop.f32.mrb[0].mxu0
      %v2633 = vpop.f32.mrb[0].mxu0
      %v2634 = vadd.f32 0.0, %v2633
      %v2635 = vpop.f32.mrb[0].mxu0
      %2636 = vmatprep.mubr.bf16.mxu0 %v2391
      %2637 = vmatmul.mubr.bf16.gmra.mrb[0].mxu0 %v2390
      %v2638 = vpop.f32.mrb[0].mxu0
      %v2639 = vadd.f32 0.0, %v2638
      %v2640 = vpop.f32.mrb[0].mxu0
      %v2641 = vpop.f32.mrb[0].mxu0
      %v2642 = vadd.f32 0.0, %v2641
      %v2643 = vpop.f32.mrb[0].mxu0
      %2644 = vmatprep.mubr.bf16.mxu0 %v2394
      %2645 = vmatmul.mubr.bf16.gmra.mrb[0].mxu0 %v2393
      %v2646 = vpop.f32.mrb[0].mxu0
      %v2647 = vadd.f32 0.0, %v2646
      %v2648 = vpop.f32.mrb[0].mxu0
      %v2649 = vpop.f32.mrb[0].mxu0
      %v2650 = vadd.f32 0.0, %v2649
      %v2651 = vpop.f32.mrb[0].mxu0
      %2652 = vdwg.mxu0
      %2653 = vmatprep.subr.bf16.mxu0 0
      %2654 = vmatpush1.bf16.msra.mxu0 %v2556
      %2655 = vmatprep.subr.bf16.mxu0 0
      %2656 = vmatpush1.bf16.msra.mxu0 %v2557
      %2657 = vmatprep.subr.bf16.mxu0 0
      %2658 = vmatpush1.bf16.msra.mxu0 %v2558
      %2659 = vmatprep.subr.bf16.mxu0 0
      %2660 = vmatpush1.bf16.msra.mxu0 %v2559
      %2661 = vmatprep.subr.bf16.mxu0 0
      %2662 = vmatpush1.bf16.msra.mxu0 %v2560
      %2663 = vmatprep.subr.bf16.mxu0 0
      %2664 = vmatpush1.bf16.msra.mxu0 %v2561
      %2665 = vmatprep.subr.bf16.mxu0 0
      %2666 = vmatpush1.bf16.msra.mxu0 %v2562
      %2667 = vmatprep.subr.bf16.mxu0 0
      %2668 = vmatpush1.bf16.msra.mxu0 %v2563
      %2669 = vmatprep.subr.bf16.mxu0 0
      %2670 = vmatpush1.bf16.msra.mxu0 0
      %2671 = vmatprep.subr.bf16.mxu0 0
      %2672 = vmatpush1.bf16.msra.mxu0 0
      %2673 = vmatprep.subr.bf16.mxu0 0
      %2674 = vmatpush1.bf16.msra.mxu0 0
      %2675 = vmatprep.subr.bf16.mxu0 0
      %2676 = vmatpush1.bf16.msra.mxu0 0
      %2677 = vmatprep.subr.bf16.mxu0 0
      %2678 = vmatpush1.bf16.msra.mxu0 0
      %2679 = vmatprep.subr.bf16.mxu0 0
      %2680 = vmatpush1.bf16.msra.mxu0 0
      %2681 = vmatprep.subr.bf16.mxu0 0
      %2682 = vmatpush1.bf16.msra.mxu0 0
      %2683 = vmatprep.subr.bf16.mxu0 0
      %2684 = vmatpush1.bf16.msra.mxu0 0
      %2685 = vmatprep.mubr.bf16.mxu0 0
      %2686 = vmatmul.mubr.bf16.gmra.mrb[0].mxu0 %v2386
      %v2687 = vpop.f32.mrb[0].mxu0
      %v2688 = vadd.f32 %v2623, %v2687
      %v2689 = vpop.f32.mrb[0].mxu0
      %v2690 = vpop.f32.mrb[0].mxu0
      %v2691 = vadd.f32 %v2626, %v2690
      %v2692 = vpop.f32.mrb[0].mxu0
      %2693 = vmatprep.mubr.bf16.mxu0 0
      %2694 = vmatmul.mubr.bf16.gmra.mrb[0].mxu0 %v2389
      %v2695 = vpop.f32.mrb[0].mxu0
      %v2696 = vadd.f32 %v2631, %v2695
      %v2697 = vpop.f32.mrb[0].mxu0
      %v2698 = vpop.f32.mrb[0].mxu0
      %v2699 = vadd.f32 %v2634, %v2698
      %v2700 = vpop.f32.mrb[0].mxu0
      %2701 = vmatprep.mubr.bf16.mxu0 0
      %2702 = vmatmul.mubr.bf16.gmra.mrb[0].mxu0 %v2392
      %v2703 = vpop.f32.mrb[0].mxu0
      %v2704 = vadd.f32 %v2639, %v2703
      %v2705 = vpop.f32.mrb[0].mxu0
      %v2706 = vpop.f32.mrb[0].mxu0
      %v2707 = vadd.f32 %v2642, %v2706
      %v2708 = vpop.f32.mrb[0].mxu0
      %2709 = vmatprep.mubr.bf16.mxu0 0
      %2710 = vmatmul.mubr.bf16.gmra.mrb[0].mxu0 %v2395
      %v2711 = vpop.f32.mrb[0].mxu0
      %v2712 = vadd.f32 %v2647, %v2711
      %v2713 = vpop.f32.mrb[0].mxu0
      %v2714 = vpop.f32.mrb[0].mxu0
      %v2715 = vadd.f32 %v2650, %v2714
      %v2716 = vpop.f32.mrb[0].mxu0
      %2717 = vdwg.mxu0
      %v2718 = vld [vmem:[%s11] sm:$0x1]
      %v2720 = vlaneseq
      %v2721 = vshrl.u32 %v2720, 7
      %v2722 = vsub.s32 0, %v2721
      %v2723 = vrot.slane %v2718, %v2722
      %v2725 = vmul.f32 %v2688, %v2723
      %v2726 = vmul.f32 %v2691, %v2723
      %v2727 = vmul.f32 %v2696, %v2723
      %v2728 = vmul.f32 %v2699, %v2723
      %v2729 = vmul.f32 %v2704, %v2723
      %v2730 = vmul.f32 %v2707, %v2723
      %v2731 = vmul.f32 %v2712, %v2723
      %v2732 = vmul.f32 %v2715, %v2723
      %v2733 = vld [vmem:[%s12] sm:$0x1]
      %v2735 = vlaneseq
      %v2736 = vshrl.u32 %v2735, 7
      %v2737 = vsub.s32 0, %v2736
      %v2738 = vrot.slane %v2733, %v2737
      %v2740 = vadd.f32 %v2725, %v2738
      %v2741 = vadd.f32 %v2726, %v2738
      %v2742 = vadd.f32 %v2727, %v2738
      %v2743 = vadd.f32 %v2728, %v2738
      %v2744 = vadd.f32 %v2729, %v2738
      %v2745 = vadd.f32 %v2730, %v2738
      %v2746 = vadd.f32 %v2731, %v2738
      %v2747 = vadd.f32 %v2732, %v2738
      %v2748 = vmax.f32 %v2740, 0.0
      %v2749 = vmax.f32 %v2741, 0.0
      %v2750 = vmax.f32 %v2742, 0.0
      %v2751 = vmax.f32 %v2743, 0.0
      %v2752 = vmax.f32 %v2744, 0.0
      %v2753 = vmax.f32 %v2745, 0.0
      %v2754 = vmax.f32 %v2746, 0.0
      %v2755 = vmax.f32 %v2747, 0.0
      %v2756 = vadd.f32 %v2748, %v2749
      %v2757 = vadd.f32 %v2756, %v2750
      %v2758 = vadd.f32 %v2757, %v2751
      %v2759 = vadd.f32 %v2758, %v2752
      %v2760 = vadd.f32 %v2759, %v2753
      %v2761 = vadd.f32 %v2760, %v2754
      %v2762 = vadd.f32 %v2761, %v2755
      %v2763 = vrot.slane %v2762, 4
      %v2764 = vadd.f32 %v2762, %v2763
      %v2765 = vrot.slane %v2764, 2
      %v2766 = vadd.f32 %v2764, %v2765
      %v2767 = vrot.slane %v2766, 1
      %v2768 = vadd.f32 %v2766, %v2767
      %v2769 = vrcp.pop 64.0
      %v2770 = vmul.f32 %v2768, %v2769
      %v2771 = vpack.c.bf16 %v2770, %v2770
      %v2772 = vld [vmem:[%s13] sm:$0xf]
      %v2773 = vld [vmem:[%s13 + $0x4] sm:$0xf]
      %v2774 = vld [vmem:[%s13 + $0x8] sm:$0xf]
      %v2775 = vld [vmem:[%s13 + $0xc] sm:$0xf]
      %v2776 = vld [vmem:[%s13 + $0x10] sm:$0xf]
      %v2777 = vld [vmem:[%s13 + $0x14] sm:$0xf]
      %v2778 = vld [vmem:[%s13 + $0x18] sm:$0xf]
      %v2779 = vld [vmem:[%s13 + $0x1c] sm:$0xf]
      %v2780 = vld [vmem:[%s13 + $0x20] sm:$0xf]
      %v2781 = vld [vmem:[%s13 + $0x24] sm:$0xf]
      %v2782 = vld [vmem:[%s13 + $0x28] sm:$0xf]
      %v2783 = vld [vmem:[%s13 + $0x2c] sm:$0xf]
      %v2784 = vld [vmem:[%s13 + $0x30] sm:$0xf]
      %v2785 = vld [vmem:[%s13 + $0x34] sm:$0xf]
      %v2786 = vld [vmem:[%s13 + $0x38] sm:$0xf]
      %v2787 = vld [vmem:[%s13 + $0x3c] sm:$0xf]
      %v2788 = vld [vmem:[%s14] sm:$0x1]
      %v2805 = vunpack.c.l.b16 %v2772
      %v2806 = vunpack.c.l.b16 %v2773
      %v2807 = vunpack.c.l.b16 %v2774
      %v2808 = vunpack.c.l.b16 %v2775
      %v2809 = vunpack.c.l.b16 %v2776
      %v2810 = vunpack.c.l.b16 %v2777
      %v2811 = vunpack.c.l.b16 %v2778
      %v2812 = vunpack.c.l.b16 %v2779
      %v2813 = vunpack.c.l.b16 %v2780
      %v2814 = vunpack.c.l.b16 %v2781
      %v2815 = vunpack.c.l.b16 %v2782
      %v2816 = vunpack.c.l.b16 %v2783
      %v2817 = vunpack.c.l.b16 %v2784
      %v2818 = vunpack.c.l.b16 %v2785
      %v2819 = vunpack.c.l.b16 %v2786
      %v2820 = vunpack.c.l.b16 %v2787
      %v2821 = vpack.c.b16 %v2806, %v2805
      %v2822 = vpack.c.b16 %v2808, %v2807
      %v2823 = vpack.c.b16 %v2810, %v2809
      %v2824 = vpack.c.b16 %v2812, %v2811
      %v2825 = vpack.c.b16 %v2814, %v2813
      %v2826 = vpack.c.b16 %v2816, %v2815
      %v2827 = vpack.c.b16 %v2818, %v2817
      %v2828 = vpack.c.b16 %v2820, %v2819
      %2837 = vmatprep.subr.bf16.mxu0 0
      %2838 = vmatpush1.bf16.msra.mxu0 %v2821
      %2839 = vmatprep.subr.bf16.mxu0 0
      %2840 = vmatpush1.bf16.msra.mxu0 %v2822
      %2841 = vmatprep.subr.bf16.mxu0 0
      %2842 = vmatpush1.bf16.msra.mxu0 %v2823
      %2843 = vmatprep.subr.bf16.mxu0 0
      %2844 = vmatpush1.bf16.msra.mxu0 %v2824
      %2845 = vmatprep.subr.bf16.mxu0 0
      %2846 = vmatpush1.bf16.msra.mxu0 %v2825
      %2847 = vmatprep.subr.bf16.mxu0 0
      %2848 = vmatpush1.bf16.msra.mxu0 %v2826
      %2849 = vmatprep.subr.bf16.mxu0 0
      %2850 = vmatpush1.bf16.msra.mxu0 %v2827
      %2851 = vmatprep.subr.bf16.mxu0 0
      %2852 = vmatpush1.bf16.msra.mxu0 %v2828
      %2853 = vmatprep.subr.bf16.mxu0 0
      %2854 = vmatpush1.bf16.msra.mxu0 0
      %2855 = vmatprep.subr.bf16.mxu0 0
      %2856 = vmatpush1.bf16.msra.mxu0 0
      %2857 = vmatprep.subr.bf16.mxu0 0
      %2858 = vmatpush1.bf16.msra.mxu0 0
      %2859 = vmatprep.subr.bf16.mxu0 0
      %2860 = vmatpush1.bf16.msra.mxu0 0
      %2861 = vmatprep.subr.bf16.mxu0 0
      %2862 = vmatpush1.bf16.msra.mxu0 0
      %2863 = vmatprep.subr.bf16.mxu0 0
      %2864 = vmatpush1.bf16.msra.mxu0 0
      %2865 = vmatprep.subr.bf16.mxu0 0
      %2866 = vmatpush1.bf16.msra.mxu0 0
      %2867 = vmatprep.subr.bf16.mxu0 0
      %2868 = vmatpush1.bf16.msra.mxu0 0
      %2869 = vmatprep.mubr.bf16.mxu0 0
      %2870 = vmatmul.mubr.bf16.gmra.mrb[0].mxu0 %v2771
      %v2871 = vpop.f32.mrb[0].mxu0
      %v2872 = vadd.f32 %v2788, %v2871
      %v2873 = vpop.f32.mrb[0].mxu0
      %v2874 = vpop.f32.mrb[0].mxu0
      %v2875 = vpop.f32.mrb[0].mxu0
      %2876 = vdwg.mxu0
      %v2877 = vmax.f32 %v2872, 0.0
      %v2878 = vld [vmem:[%s15] sm:$0x1]
      %v2879 = vmul.f32 %v2877, %v2878
      %vm2880 = vcmask 253952
      %v2881 = vsel %vm2880, %v2879, 0.0
      %2882 = vadd.xlane.f32.xlu0 %v2881
      %v2883 = vpop.xlane.xlu0 %2882
      %v2884 = vld [vmem:[#allocation6] sm:$0x1]
      %v2885 = vadd.f32 %v2883, %v2884
      %v2886 = vsub.f32 0.0, %v2885
      %v2887 = vmul.f32 %v2886, 1.442695
      %v2888 = vpow.pop %v2887
      %v2889 = vadd.f32 %v2888, 1.0
      %v2890 = vrcp.pop %v2889
      %v2891 = vmul.f32 1.0, %v2890
      %vm2892 = vcmask 0
      %2893 = vst.msk [vmem:[%s546] sm:$0x1] %vm2892, %v2891
      %p2894 = scmp.lt.s32.totalorder %s30, 1
      %s2895 = scalar_select %p2894, %s30, 1
      %s2896 = scalar_lea.vmem %s17, %s2895
      // Predicated region
      $region89: #{_lambda_.1} parent=87 // pred_check
        %p2897 = pneg %p410
      $region90: #{_lambda_.1} parent=87 // pred_check_branch
        %2899 = sbr.rel (%p2897) target = $region92
      $region91: #{_lambda_.1} parent=87 // pred_region
        _
      $region92: #{_lambda_.1} parent=87 // pred_fallthru
        _
    $region88: #{_lambda_.1} parent=5 // pred_fallthru
      _
    %p2900 = scmp.le.s32.totalorder 2, %s25
    // Predicated region
    $region93: #{_lambda_.1} parent=5 // pred_check
      %p2901 = pneg %p2900
    $region94: #{_lambda_.1} parent=5 // pred_check_branch
      %2903 = sbr.rel (%p2901) target = $region96
    $region95: #{_lambda_.1} parent=5 // pred_region
      %s2904 = ssub.s32 %s25, 2
      // Predicated region
      $region97: #{_lambda_.1} parent=95 // pred_check
        %p2905 = pneg %p416
      $region98: #{_lambda_.1} parent=95 // pred_check_branch
        %2907 = sbr.rel (%p2905) target = $region100
      $region99: #{_lambda_.1} parent=95 // pred_region
        %p2908 = scmp.lt.s32.totalorder %s31, 1
        %s2909 = scalar_select %p2908, %s31, 1
        %s2910 = scalar_lea.vmem %s17, %s2909
      $region100: #{_lambda_.1} parent=95 // pred_fallthru
        _
    $region96: #{_lambda_.1} parent=5 // pred_fallthru
      _
  $region6: #{_lambda_.1} parent=0 // loop_footer
    %s29 = sadd.s32 1, %s25
  $region7: #{_lambda_.1} parent=0 // loop_footer_branch
    %24 = sbr.rel target = $region3
  $region8: #{_lambda_.1} parent=0 // loop_exit
    _

</llo_original>
